<compile_context>
chip_gen: v7x
topology: tpu7x:2x2x1
jax: 0.10.0
libtpu: 0.0.40
codegen_flags: <defaults>
</compile_context>

<pallas_src>
import functools

import jax
import jax.numpy as jnp
from jax import lax
from jax.experimental import pallas as pl
from jax.experimental.pallas import tpu as pltpu


# ----------------------------------------------------------------------------
# helpers
# ----------------------------------------------------------------------------
def _layer_norm(x, g, b, eps=1e-12):
    x = x.astype(jnp.float32)
    mu = jnp.mean(x, axis=-1, keepdims=True)
    var = jnp.mean(jnp.square(x - mu), axis=-1, keepdims=True)
    return (x - mu) * lax.rsqrt(var + eps) * g + b


# packed per-layer vector rows (in the (NL, 8, H) "vecs" tensor)
_R_BO, _R_B2, _R_LN1G, _R_LN1B, _R_LN2G, _R_LN2B = 0, 1, 2, 3, 4, 5


# ----------------------------------------------------------------------------
# Pallas kernel 1: fused BERT encoder (all layers) for a group of chunks
# ----------------------------------------------------------------------------
def bert_encoder_kernel(emb_ref, bias_ref, pos_ref, embln_ref,
                        wqkv_ref, bqkv_ref, wo_ref, w1_ref, b1_ref, w2_ref,
                        vecs_ref, cls_ref, act_ref, *, num_heads):
    layer = pl.program_id(1)
    Bc, C, H = act_ref.shape
    dh = H // num_heads
    scale = 1.0 / (float(dh) ** 0.5)

    # Layer 0: fused embedding positional-add + LayerNorm seeds the f32 resident activation.
    @pl.when(layer == 0)
    def _():
        e = emb_ref[...].astype(jnp.float32) + pos_ref[...]
        embln = embln_ref[...]
        act_ref[...] = _layer_norm(e.reshape(Bc * C, H),
                                   embln[0:1], embln[1:2]).reshape(Bc, C, H)

    x = act_ref[...].reshape(Bc * C, H)          # f32 residual stream (VMEM-resident)
    xb = x.astype(jnp.bfloat16)                  # bf16 only as matmul input dtype

    vecs = vecs_ref[layer]                       # (8, H) packed per-layer vectors
    wqkv = wqkv_ref[layer]                       # (H, 3H) bf16
    wo = wo_ref[layer]                           # (H, H)  bf16

    # fused QKV projection: one 3H-wide MXU matmul
    qkv = jnp.dot(xb, wqkv, preferred_element_type=jnp.float32) + bqkv_ref[layer]
    q = qkv[:, 0 * H:1 * H].astype(jnp.bfloat16)
    k = qkv[:, 1 * H:2 * H].astype(jnp.bfloat16)
    v = qkv[:, 2 * H:3 * H].astype(jnp.bfloat16)

    # hoist the (Bc,1,C) -> (Bc,C,C) additive mask broadcast out of the head loop
    bias = jnp.broadcast_to(bias_ref[...], (Bc, C, C)).astype(jnp.float32)

    # per-head attention, accumulated straight into attn_out (no concat materialized)
    attn = jnp.zeros((Bc * C, H), jnp.float32)
    for h in range(num_heads):
        sl = slice(h * dh, (h + 1) * dh)
        qh = q[:, sl].reshape(Bc, C, dh)
        kh = k[:, sl].reshape(Bc, C, dh)
        vh = v[:, sl].reshape(Bc, C, dh)
        s = jnp.einsum('bqd,bkd->bqk', qh, kh,
                       preferred_element_type=jnp.float32) * scale + bias
        s = s - jnp.max(s, axis=-1, keepdims=True)
        p = jnp.exp(s)
        p = p * pl.reciprocal(jnp.sum(p, axis=-1, keepdims=True), approx=True)
        ctx = jnp.einsum('bqk,bkd->bqd', p.astype(jnp.bfloat16), vh,
                         preferred_element_type=jnp.float32)
        attn = attn + jnp.dot(ctx.reshape(Bc * C, dh).astype(jnp.bfloat16),
                              wo[sl, :], preferred_element_type=jnp.float32)

    attn = attn + vecs[_R_BO:_R_BO + 1]
    x1 = _layer_norm(x + attn, vecs[_R_LN1G:_R_LN1G + 1], vecs[_R_LN1B:_R_LN1B + 1])

    h_mid = jnp.dot(x1.astype(jnp.bfloat16), w1_ref[layer],
                    preferred_element_type=jnp.float32) + b1_ref[layer]
    # TODO(synk): HF BERT uses exact erf-GELU; tanh-approx GELU keeps a small drift.
    h_mid = jax.nn.gelu(h_mid, approximate=True)
    ffn = jnp.dot(h_mid.astype(jnp.bfloat16), w2_ref[layer],
                  preferred_element_type=jnp.float32) + vecs[_R_B2:_R_B2 + 1]
    x2 = _layer_norm(x1 + ffn, vecs[_R_LN2G:_R_LN2G + 1], vecs[_R_LN2B:_R_LN2B + 1])

    act_ref[...] = x2.reshape(Bc, C, H)          # stays f32 across layers

    # only the CLS row per chunk ever goes back to HBM (C x less writeback)
    @pl.when(layer == pl.num_programs(1) - 1)
    def _():
        cls_ref[...] = x2.reshape(Bc, C, H)[:, 0:1, :]


def bert_encoder(emb, attn_bias, p, *, num_heads, block_chunks):
    N, C, H = emb.shape
    NL = p["wqkv"].shape[0]
    assert N % block_chunks == 0, (N, block_chunks)
    G = N // block_chunks

    def full(arr):  # whole array resident in VMEM, fetched once (constant index map)
        nd = arr.ndim
        return pl.BlockSpec(arr.shape, lambda g, l, _nd=nd: (0,) * _nd)

    in_specs = [
        pl.BlockSpec((block_chunks, C, H), lambda g, l: (g, 0, 0)),   # embeddings
        pl.BlockSpec((block_chunks, 1, C), lambda g, l: (g, 0, 0)),   # additive key mask
        full(p["pos_emb"]), full(p["emb_ln"]),
        full(p["wqkv"]), full(p["bqkv"]), full(p["wo"]),
        full(p["w1"]), full(p["b1"]), full(p["w2"]), full(p["vecs"]),
    ]
    out_spec = pl.BlockSpec((block_chunks, 1, H), lambda g, l: (g, 0, 0))

    return pl.pallas_call(
        functools.partial(bert_encoder_kernel, num_heads=num_heads),
        out_shape=jax.ShapeDtypeStruct((N, 1, H), jnp.float32),
        grid_spec=pltpu.PrefetchScalarGridSpec(
            num_scalar_prefetch=0,
            grid=(G, NL),
            in_specs=in_specs,
            out_specs=out_spec,
            scratch_shapes=[pltpu.VMEM((block_chunks, C, H), jnp.float32)]),
        compiler_params=pltpu.CompilerParams(
            dimension_semantics=("parallel", "arbitrary"),
            # Explicit VMEM budget (toy config uses <2 MiB; re-derive for v7x's 64 MiB
            # physical VMEM at real BERT-base sizes and halve block_chunks there).
            vmem_limit_bytes=32 * 1024 * 1024),
    )(emb, attn_bias, p["pos_emb"], p["emb_ln"],
      p["wqkv"], p["bqkv"], p["wo"], p["w1"], p["b1"], p["w2"], p["vecs"])


# ----------------------------------------------------------------------------
# Pallas kernel 2: single-layer LSTM over CLS embeddings + Linear + sigmoid
# ----------------------------------------------------------------------------
def lstm_regressor_kernel(cls_ref, wih_ref, whh_ref, b_ref, wreg_ref, breg_ref,
                          out_ref, gx_ref, *, seq_len, batch):
    L = whh_ref.shape[0]

    # Hoisted input projection: one matmul for ALL timesteps (cls is time-major (S*B, H)),
    # stored with a single reshaped store into the timestep-indexed scratch.
    gx = jnp.dot(cls_ref[...], wih_ref[...],
                 preferred_element_type=jnp.float32) + b_ref[...]
    gx_ref[...] = gx.reshape(seq_len, batch, 4 * L)

    whh = whh_ref[...]                                    # f32 (matches torch.nn.LSTM)

    def step(t, carry):
        h, c = carry
        gates = gx_ref[t] + jnp.dot(h, whh, preferred_element_type=jnp.float32)
        i_g = jax.nn.sigmoid(gates[:, 0 * L:1 * L])       # PyTorch gate order: i, f, g, o
        f_g = jax.nn.sigmoid(gates[:, 1 * L:2 * L])
        g_g = jnp.tanh(gates[:, 2 * L:3 * L])
        o_g = jax.nn.sigmoid(gates[:, 3 * L:4 * L])
        c = f_g * c + i_g * g_g
        h = o_g * jnp.tanh(c)
        return h, c

    h0 = jnp.zeros((batch, L), jnp.float32)
    c0 = jnp.zeros((batch, L), jnp.float32)
    h, _ = lax.fori_loop(0, seq_len, step, (h0, c0), unroll=True)

    logits = jnp.dot(h, wreg_ref[...], preferred_element_type=jnp.float32) + breg_ref[...]
    out_ref[...] = jax.nn.sigmoid(logits)


def lstm_regressor(cls_flat, wih, whh, b, wreg, breg, *, seq_len, batch):
    L = whh.shape[0]

    def full(arr):
        nd = arr.ndim
        return pl.BlockSpec(arr.shape, lambda i, _nd=nd: (0,) * _nd)

    return pl.pallas_call(
        functools.partial(lstm_regressor_kernel, seq_len=seq_len, batch=batch),
        out_shape=jax.ShapeDtypeStruct((batch, 1), jnp.float32),
        grid_spec=pltpu.PrefetchScalarGridSpec(
            num_scalar_prefetch=0, grid=(1,),
            in_specs=[full(cls_flat), full(wih), full(whh),
                      full(b), full(wreg), full(breg)],
            out_specs=pl.BlockSpec((batch, 1), lambda i: (0, 0)),
            scratch_shapes=[pltpu.VMEM((seq_len, batch, 4 * L), jnp.float32)]),
        compiler_params=pltpu.CompilerParams(dimension_semantics=("arbitrary",)),
    )(cls_flat, wih, whh, b, wreg, breg)


# ----------------------------------------------------------------------------
# parameter init (deterministic, synthetic). Matmul weights bf16, everything else f32.
# ----------------------------------------------------------------------------
def init_params(key, *, vocab, chunk, hidden, inter, lstm_hidden, num_layers):
    keys = iter(jax.random.split(key, 16))

    def nrm(shape, scale=0.02, dtype=jnp.float32):
        return (scale * jax.random.normal(next(keys), shape)).astype(dtype)

    NL, H, I = num_layers, hidden, inter
    zeros = lambda s: jnp.zeros(s, jnp.float32)
    ones = lambda s: jnp.ones(s, jnp.float32)

    # packed per-layer H-wide vectors: rows = [bo, b2, ln1g, ln1b, ln2g, ln2b, pad, pad]
    vecs = jnp.concatenate([zeros((NL, 1, H)),   # bo
                            zeros((NL, 1, H)),   # b2
                            ones((NL, 1, H)),    # ln1 gamma
                            zeros((NL, 1, H)),   # ln1 beta
                            ones((NL, 1, H)),    # ln2 gamma
                            zeros((NL, 1, H)),   # ln2 beta
                            zeros((NL, 2, H))], axis=1)

    params = {
        "word_emb": nrm((vocab, H), dtype=jnp.bfloat16),
        "pos_emb": nrm((chunk, H)),
        "emb_ln": jnp.concatenate([ones((1, H)), zeros((1, H))], axis=0),  # [gamma; beta]
        # fused QKV weight / bias
        "wqkv": nrm((NL, H, 3 * H), dtype=jnp.bfloat16),
        "bqkv": zeros((NL, 1, 3 * H)),
        "wo": nrm((NL, H, H), dtype=jnp.bfloat16),
        "w1": nrm((NL, H, I), dtype=jnp.bfloat16),
        "b1": zeros((NL, 1, I)),
        "w2": nrm((NL, I, H), dtype=jnp.bfloat16),
        "vecs": vecs,
        # LSTM kept f32 end-to-end (matches torch LSTM numerics); b_lstm = b_ih + b_hh
        "w_ih": nrm((H, 4 * lstm_hidden), 0.1),
        "w_hh": nrm((lstm_hidden, 4 * lstm_hidden), 0.1),
        "b_lstm": nrm((1, 4 * lstm_hidden), 0.1),
        "w_reg": nrm((lstm_hidden, 1), 0.1),
        "b_reg": zeros((1, 1)),
    }
    return params


# ----------------------------------------------------------------------------
# full forward pass (mirrors BertRegressor.forward)
# ----------------------------------------------------------------------------
def bert_regressor_forward(params, input_ids, attention_mask, *, num_heads, block_chunks):
    B, S, C = input_ids.shape
    ids = input_ids.reshape(-1, C)                                   # (B*S, C)
    mask = attention_mask.reshape(-1, C).astype(jnp.float32)         # (B*S, C)

    # token-embedding gather stays in XLA (data-dependent gather); positional add +
    # embedding LayerNorm are fused into layer 0 of the encoder kernel.
    emb = params["word_emb"][ids]                                    # (N, C, H) bf16
    attn_bias = ((mask - 1.0) * 1e9)[:, None, :]                     # (N, 1, C)

    # "with torch.no_grad(): bert(...)" -> fused Pallas encoder; emits only CLS rows.
    cls = bert_encoder(emb, attn_bias, params,
                       num_heads=num_heads, block_chunks=block_chunks)   # (N, 1, H) f32
    cls = cls.reshape(B, S, -1)                                      # (B, S, H)
    cls_flat = jnp.transpose(cls, (1, 0, 2)).reshape(S * B, -1)      # time-major (S*B, H)

    # TODO(synk): KeyBERT.extract_keywords and the host-side numpy prints in the PyTorch
    # forward are CPU/string operations with no Pallas equivalent.

    return lstm_regressor(cls_flat, params["w_ih"], params["w_hh"], params["b_lstm"],
                          params["w_reg"], params["b_reg"],
                          seq_len=S, batch=B)                        # sigmoid(Linear(h_T)) -> (B, 1)


# ----------------------------------------------------------------------------
if __name__ == "__main__":
    B, S, C = 2, 4, 16             # batch, chunks-per-doc, tokens-per-chunk
    V, H, I, NH = 96, 128, 256, 2  # vocab, bert hidden, FFN intermediate, heads
    L = 32                         # lstm hidden (4L = 128, lane-dense)
    NUM_LAYERS = 2
    BLOCK_CHUNKS = 4               # N = B*S = 8 -> G = 2 groups (even: both v7x TCs busy)

    key = jax.random.PRNGKey(0)
    kp, kid, klen = jax.random.split(key, 3)
    params = init_params(kp, vocab=V, chunk=C, hidden=H, inter=I,
                         lstm_hidden=L, num_layers=NUM_LAYERS)

    input_ids = jax.random.randint(kid, (B, S, C), 0, V, dtype=jnp.int32)
    lengths = jax.random.randint(klen, (B, S), 3, C + 1, dtype=jnp.int32)
    attention_mask = (jnp.arange(C)[None, None, :] < lengths[..., None]).astype(jnp.int32)

    fwd = jax.jit(functools.partial(bert_regressor_forward,
                                    num_heads=NH, block_chunks=BLOCK_CHUNKS))
    out = fwd(params, input_ids, attention_mask)
    out = jax.block_until_ready(out)

    assert out.shape == (B, 1), out.shape
    assert bool(jnp.all(jnp.isfinite(out)))
    assert bool(jnp.all((out >= 0.0) & (out <= 1.0)))
    print("KERNEL_OK")
</pallas_src>

<mosaic_0001>
module attributes {stable_mosaic.version = 11 : i64} {
  func.func @lstm_regressor_kernel(%arg0: i32, %arg1: memref<8x128xf32, #tpu.memory_space<vmem>>, %arg2: memref<128x128xf32, #tpu.memory_space<vmem>>, %arg3: memref<32x128xf32, #tpu.memory_space<vmem>>, %arg4: memref<1x128xf32, #tpu.memory_space<vmem>>, %arg5: memref<32x1xf32, #tpu.memory_space<vmem>>, %arg6: memref<1x1xf32, #tpu.memory_space<vmem>>, %arg7: memref<2x1xf32, #tpu.memory_space<vmem>>, %arg8: memref<4x2x128xf32, #tpu.memory_space<vmem>>) attributes {dimension_semantics = [#tpu.dimension_semantics<arbitrary>], iteration_bounds = array<i64: 1>, scalar_prefetch = 0 : i64, scratch_operands = 1 : i64, tpu.core_type = #tpu.core_type<tc>, window_params = [{pipeline_mode = #tpu.pipeline_mode<synchronous>, transform_indices = @transform_0, window_bounds = array<i64: 8, 128>}, {pipeline_mode = #tpu.pipeline_mode<synchronous>, transform_indices = @transform_1, window_bounds = array<i64: 128, 128>}, {pipeline_mode = #tpu.pipeline_mode<synchronous>, transform_indices = @transform_2, window_bounds = array<i64: 32, 128>}, {pipeline_mode = #tpu.pipeline_mode<synchronous>, transform_indices = @transform_3, window_bounds = array<i64: 1, 128>}, {pipeline_mode = #tpu.pipeline_mode<synchronous>, transform_indices = @transform_4, window_bounds = array<i64: 32, 1>}, {pipeline_mode = #tpu.pipeline_mode<synchronous>, transform_indices = @transform_5, window_bounds = array<i64: 1, 1>}, {pipeline_mode = #tpu.pipeline_mode<synchronous>, transform_indices = @transform_6, window_bounds = array<i64: 2, 1>}]} {
    %c0 = arith.constant 0 : index
    %c0_0 = arith.constant 0 : index
    %0 = vector.load %arg1[%c0, %c0_0] : memref<8x128xf32, #tpu.memory_space<vmem>>, vector<8x128xf32>
    %c0_1 = arith.constant 0 : index
    %c0_2 = arith.constant 0 : index
    %1 = vector.load %arg2[%c0_1, %c0_2] : memref<128x128xf32, #tpu.memory_space<vmem>>, vector<128x128xf32>
    %cst = arith.constant dense<0.000000e+00> : vector<8x128xf32>
    %2 = tpu.matmul %0, %1, %cst {dimension_numbers = #tpu.dot_dimension_numbers<[1], [0], [0], [1], [0, 0, 1, 1], [], []>} : vector<8x128xf32>, vector<128x128xf32>, vector<8x128xf32> -> vector<8x128xf32>
    %c0_3 = arith.constant 0 : index
    %c0_4 = arith.constant 0 : index
    %3 = vector.load %arg4[%c0_3, %c0_4] : memref<1x128xf32, #tpu.memory_space<vmem>>, vector<1x128xf32>
    %4 = vector.broadcast %3 : vector<1x128xf32> to vector<8x128xf32>
    %5 = arith.addf %2, %4 : vector<8x128xf32>
    %6 = vector.shape_cast %5 : vector<8x128xf32> to vector<4x2x128xf32>
    %c0_5 = arith.constant 0 : index
    %c0_6 = arith.constant 0 : index
    %c0_7 = arith.constant 0 : index
    %7 = vector.load %arg8[%c0_5, %c0_6, %c0_7] : memref<4x2x128xf32, #tpu.memory_space<vmem>>, vector<4x2x128xf32>
    tpu.vector_store %arg8[%c0_5, %c0_6, %c0_7], %6 {strides = array<i32>} : memref<4x2x128xf32, #tpu.memory_space<vmem>>, vector<4x2x128xf32>,
    %c0_8 = arith.constant 0 : index
    %c0_9 = arith.constant 0 : index
    %8 = vector.load %arg3[%c0_8, %c0_9] : memref<32x128xf32, #tpu.memory_space<vmem>>, vector<32x128xf32>
    %cst_10 = arith.constant 0.000000e+00 : f32
    %9 = vector.broadcast %cst_10 : f32 to vector<2x32xf32>
    %cst_11 = arith.constant 0.000000e+00 : f32
    %10 = vector.broadcast %cst_11 : f32 to vector<2x32xf32>
    %c0_i32 = arith.constant 0 : i32
    %11 = arith.index_cast %c0_i32 : i32 to index
    %c0_12 = arith.constant 0 : index
    %c0_13 = arith.constant 0 : index
    %12 = vector.load %arg8[%11, %c0_12, %c0_13] : memref<4x2x128xf32, #tpu.memory_space<vmem>>, vector<1x2x128xf32>
    %13 = vector.shape_cast %12 : vector<1x2x128xf32> to vector<2x128xf32>
    %cst_14 = arith.constant dense<0.000000e+00> : vector<2x128xf32>
    %14 = tpu.matmul %9, %8, %cst_14 {dimension_numbers = #tpu.dot_dimension_numbers<[1], [0], [0], [1], [0, 0, 1, 1], [], []>} : vector<2x32xf32>, vector<32x128xf32>, vector<2x128xf32> -> vector<2x128xf32>
    %15 = arith.addf %13, %14 : vector<2x128xf32>
    %16 = vector.extract_strided_slice %15 {offsets = [0, 0], sizes = [2, 32], strides = [1, 1]} : vector<2x128xf32> to vector<2x32xf32>
    %17 = arith.negf %16 : vector<2x32xf32>
    %18 = math.exp %17 : vector<2x32xf32>
    %cst_15 = arith.constant 1.000000e+00 : f32
    %19 = vector.broadcast %cst_15 : f32 to vector<2x32xf32>
    %20 = arith.addf %19, %18 : vector<2x32xf32>
    %21 = arith.divf %19, %20 : vector<2x32xf32>
    %22 = vector.extract_strided_slice %15 {offsets = [0, 32], sizes = [2, 32], strides = [1, 1]} : vector<2x128xf32> to vector<2x32xf32>
    %23 = arith.negf %22 : vector<2x32xf32>
    %24 = math.exp %23 : vector<2x32xf32>
    %cst_16 = arith.constant 1.000000e+00 : f32
    %25 = vector.broadcast %cst_16 : f32 to vector<2x32xf32>
    %26 = arith.addf %25, %24 : vector<2x32xf32>
    %27 = arith.divf %25, %26 : vector<2x32xf32>
    %28 = vector.extract_strided_slice %15 {offsets = [0, 64], sizes = [2, 32], strides = [1, 1]} : vector<2x128xf32> to vector<2x32xf32>
    %29 = math.tanh %28 : vector<2x32xf32>
    %30 = vector.extract_strided_slice %15 {offsets = [0, 96], sizes = [2, 32], strides = [1, 1]} : vector<2x128xf32> to vector<2x32xf32>
    %31 = arith.negf %30 : vector<2x32xf32>
    %32 = math.exp %31 : vector<2x32xf32>
    %cst_17 = arith.constant 1.000000e+00 : f32
    %33 = vector.broadcast %cst_17 : f32 to vector<2x32xf32>
    %34 = arith.addf %33, %32 : vector<2x32xf32>
    %35 = arith.divf %33, %34 : vector<2x32xf32>
    %36 = arith.mulf %27, %10 : vector<2x32xf32>
    %37 = arith.mulf %21, %29 : vector<2x32xf32>
    %38 = arith.addf %36, %37 : vector<2x32xf32>
    %39 = math.tanh %38 : vector<2x32xf32>
    %40 = arith.mulf %35, %39 : vector<2x32xf32>
    %c1_i32 = arith.constant 1 : i32
    %41 = arith.index_cast %c1_i32 : i32 to index
    %c0_18 = arith.constant 0 : index
    %c0_19 = arith.constant 0 : index
    %42 = vector.load %arg8[%41, %c0_18, %c0_19] : memref<4x2x128xf32, #tpu.memory_space<vmem>>, vector<1x2x128xf32>
    %43 = vector.shape_cast %42 : vector<1x2x128xf32> to vector<2x128xf32>
    %cst_20 = arith.constant dense<0.000000e+00> : vector<2x128xf32>
    %44 = tpu.matmul %40, %8, %cst_20 {dimension_numbers = #tpu.dot_dimension_numbers<[1], [0], [0], [1], [0, 0, 1, 1], [], []>} : vector<2x32xf32>, vector<32x128xf32>, vector<2x128xf32> -> vector<2x128xf32>
    %45 = arith.addf %43, %44 : vector<2x128xf32>
    %46 = vector.extract_strided_slice %45 {offsets = [0, 0], sizes = [2, 32], strides = [1, 1]} : vector<2x128xf32> to vector<2x32xf32>
    %47 = arith.negf %46 : vector<2x32xf32>
    %48 = math.exp %47 : vector<2x32xf32>
    %cst_21 = arith.constant 1.000000e+00 : f32
    %49 = vector.broadcast %cst_21 : f32 to vector<2x32xf32>
    %50 = arith.addf %49, %48 : vector<2x32xf32>
    %51 = arith.divf %49, %50 : vector<2x32xf32>
    %52 = vector.extract_strided_slice %45 {offsets = [0, 32], sizes = [2, 32], strides = [1, 1]} : vector<2x128xf32> to vector<2x32xf32>
    %53 = arith.negf %52 : vector<2x32xf32>
    %54 = math.exp %53 : vector<2x32xf32>
    %cst_22 = arith.constant 1.000000e+00 : f32
    %55 = vector.broadcast %cst_22 : f32 to vector<2x32xf32>
    %56 = arith.addf %55, %54 : vector<2x32xf32>
    %57 = arith.divf %55, %56 : vector<2x32xf32>
    %58 = vector.extract_strided_slice %45 {offsets = [0, 64], sizes = [2, 32], strides = [1, 1]} : vector<2x128xf32> to vector<2x32xf32>
    %59 = math.tanh %58 : vector<2x32xf32>
    %60 = vector.extract_strided_slice %45 {offsets = [0, 96], sizes = [2, 32], strides = [1, 1]} : vector<2x128xf32> to vector<2x32xf32>
    %61 = arith.negf %60 : vector<2x32xf32>
    %62 = math.exp %61 : vector<2x32xf32>
    %cst_23 = arith.constant 1.000000e+00 : f32
    %63 = vector.broadcast %cst_23 : f32 to vector<2x32xf32>
    %64 = arith.addf %63, %62 : vector<2x32xf32>
    %65 = arith.divf %63, %64 : vector<2x32xf32>
    %66 = arith.mulf %57, %38 : vector<2x32xf32>
    %67 = arith.mulf %51, %59 : vector<2x32xf32>
    %68 = arith.addf %66, %67 : vector<2x32xf32>
    %69 = math.tanh %68 : vector<2x32xf32>
    %70 = arith.mulf %65, %69 : vector<2x32xf32>
    %c2_i32 = arith.constant 2 : i32
    %71 = arith.index_cast %c2_i32 : i32 to index
    %c0_24 = arith.constant 0 : index
    %c0_25 = arith.constant 0 : index
    %72 = vector.load %arg8[%71, %c0_24, %c0_25] : memref<4x2x128xf32, #tpu.memory_space<vmem>>, vector<1x2x128xf32>
    %73 = vector.shape_cast %72 : vector<1x2x128xf32> to vector<2x128xf32>
    %cst_26 = arith.constant dense<0.000000e+00> : vector<2x128xf32>
    %74 = tpu.matmul %70, %8, %cst_26 {dimension_numbers = #tpu.dot_dimension_numbers<[1], [0], [0], [1], [0, 0, 1, 1], [], []>} : vector<2x32xf32>, vector<32x128xf32>, vector<2x128xf32> -> vector<2x128xf32>
    %75 = arith.addf %73, %74 : vector<2x128xf32>
    %76 = vector.extract_strided_slice %75 {offsets = [0, 0], sizes = [2, 32], strides = [1, 1]} : vector<2x128xf32> to vector<2x32xf32>
    %77 = arith.negf %76 : vector<2x32xf32>
    %78 = math.exp %77 : vector<2x32xf32>
    %cst_27 = arith.constant 1.000000e+00 : f32
    %79 = vector.broadcast %cst_27 : f32 to vector<2x32xf32>
    %80 = arith.addf %79, %78 : vector<2x32xf32>
    %81 = arith.divf %79, %80 : vector<2x32xf32>
    %82 = vector.extract_strided_slice %75 {offsets = [0, 32], sizes = [2, 32], strides = [1, 1]} : vector<2x128xf32> to vector<2x32xf32>
    %83 = arith.negf %82 : vector<2x32xf32>
    %84 = math.exp %83 : vector<2x32xf32>
    %cst_28 = arith.constant 1.000000e+00 : f32
    %85 = vector.broadcast %cst_28 : f32 to vector<2x32xf32>
    %86 = arith.addf %85, %84 : vector<2x32xf32>
    %87 = arith.divf %85, %86 : vector<2x32xf32>
    %88 = vector.extract_strided_slice %75 {offsets = [0, 64], sizes = [2, 32], strides = [1, 1]} : vector<2x128xf32> to vector<2x32xf32>
    %89 = math.tanh %88 : vector<2x32xf32>
    %90 = vector.extract_strided_slice %75 {offsets = [0, 96], sizes = [2, 32], strides = [1, 1]} : vector<2x128xf32> to vector<2x32xf32>
    %91 = arith.negf %90 : vector<2x32xf32>
    %92 = math.exp %91 : vector<2x32xf32>
    %cst_29 = arith.constant 1.000000e+00 : f32
    %93 = vector.broadcast %cst_29 : f32 to vector<2x32xf32>
    %94 = arith.addf %93, %92 : vector<2x32xf32>
    %95 = arith.divf %93, %94 : vector<2x32xf32>
    %96 = arith.mulf %87, %68 : vector<2x32xf32>
    %97 = arith.mulf %81, %89 : vector<2x32xf32>
    %98 = arith.addf %96, %97 : vector<2x32xf32>
    %99 = math.tanh %98 : vector<2x32xf32>
    %100 = arith.mulf %95, %99 : vector<2x32xf32>
    %c3_i32 = arith.constant 3 : i32
    %101 = arith.index_cast %c3_i32 : i32 to index
    %c0_30 = arith.constant 0 : index
    %c0_31 = arith.constant 0 : index
    %102 = vector.load %arg8[%101, %c0_30, %c0_31] : memref<4x2x128xf32, #tpu.memory_space<vmem>>, vector<1x2x128xf32>
    %103 = vector.shape_cast %102 : vector<1x2x128xf32> to vector<2x128xf32>
    %cst_32 = arith.constant dense<0.000000e+00> : vector<2x128xf32>
    %104 = tpu.matmul %100, %8, %cst_32 {dimension_numbers = #tpu.dot_dimension_numbers<[1], [0], [0], [1], [0, 0, 1, 1], [], []>} : vector<2x32xf32>, vector<32x128xf32>, vector<2x128xf32> -> vector<2x128xf32>
    %105 = arith.addf %103, %104 : vector<2x128xf32>
    %106 = vector.extract_strided_slice %105 {offsets = [0, 0], sizes = [2, 32], strides = [1, 1]} : vector<2x128xf32> to vector<2x32xf32>
    %107 = arith.negf %106 : vector<2x32xf32>
    %108 = math.exp %107 : vector<2x32xf32>
    %cst_33 = arith.constant 1.000000e+00 : f32
    %109 = vector.broadcast %cst_33 : f32 to vector<2x32xf32>
    %110 = arith.addf %109, %108 : vector<2x32xf32>
    %111 = arith.divf %109, %110 : vector<2x32xf32>
    %112 = vector.extract_strided_slice %105 {offsets = [0, 32], sizes = [2, 32], strides = [1, 1]} : vector<2x128xf32> to vector<2x32xf32>
    %113 = arith.negf %112 : vector<2x32xf32>
    %114 = math.exp %113 : vector<2x32xf32>
    %cst_34 = arith.constant 1.000000e+00 : f32
    %115 = vector.broadcast %cst_34 : f32 to vector<2x32xf32>
    %116 = arith.addf %115, %114 : vector<2x32xf32>
    %117 = arith.divf %115, %116 : vector<2x32xf32>
    %118 = vector.extract_strided_slice %105 {offsets = [0, 64], sizes = [2, 32], strides = [1, 1]} : vector<2x128xf32> to vector<2x32xf32>
    %119 = math.tanh %118 : vector<2x32xf32>
    %120 = vector.extract_strided_slice %105 {offsets = [0, 96], sizes = [2, 32], strides = [1, 1]} : vector<2x128xf32> to vector<2x32xf32>
    %121 = arith.negf %120 : vector<2x32xf32>
    %122 = math.exp %121 : vector<2x32xf32>
    %cst_35 = arith.constant 1.000000e+00 : f32
    %123 = vector.broadcast %cst_35 : f32 to vector<2x32xf32>
    %124 = arith.addf %123, %122 : vector<2x32xf32>
    %125 = arith.divf %123, %124 : vector<2x32xf32>
    %126 = arith.mulf %117, %98 : vector<2x32xf32>
    %127 = arith.mulf %111, %119 : vector<2x32xf32>
    %128 = arith.addf %126, %127 : vector<2x32xf32>
    %129 = math.tanh %128 : vector<2x32xf32>
    %130 = arith.mulf %125, %129 : vector<2x32xf32>
    %c4_i32 = arith.constant 4 : i32
    %c0_36 = arith.constant 0 : index
    %c0_37 = arith.constant 0 : index
    %131 = vector.load %arg5[%c0_36, %c0_37] : memref<32x1xf32, #tpu.memory_space<vmem>>, vector<32x1xf32>
    %cst_38 = arith.constant dense<0.000000e+00> : vector<2x1xf32>
    %132 = tpu.matmul %130, %131, %cst_38 {dimension_numbers = #tpu.dot_dimension_numbers<[1], [0], [0], [1], [0, 0, 1, 1], [], []>} : vector<2x32xf32>, vector<32x1xf32>, vector<2x1xf32> -> vector<2x1xf32>
    %c0_39 = arith.constant 0 : index
    %c0_40 = arith.constant 0 : index
    %133 = vector.load %arg6[%c0_39, %c0_40] : memref<1x1xf32, #tpu.memory_space<vmem>>, vector<1x1xf32>
    %134 = vector.broadcast %133 : vector<1x1xf32> to vector<2x1xf32>
    %135 = arith.addf %132, %134 : vector<2x1xf32>
    %136 = arith.negf %135 : vector<2x1xf32>
    %137 = math.exp %136 : vector<2x1xf32>
    %cst_41 = arith.constant 1.000000e+00 : f32
    %138 = vector.broadcast %cst_41 : f32 to vector<2x1xf32>
    %139 = arith.addf %138, %137 : vector<2x1xf32>
    %140 = arith.divf %138, %139 : vector<2x1xf32>
    %c0_42 = arith.constant 0 : index
    %c0_43 = arith.constant 0 : index
    %141 = vector.load %arg7[%c0_42, %c0_43] : memref<2x1xf32, #tpu.memory_space<vmem>>, vector<2x1xf32>
    tpu.vector_store %arg7[%c0_42, %c0_43], %140 {strides = array<i32>} : memref<2x1xf32, #tpu.memory_space<vmem>>, vector<2x1xf32>,
    return
  }
  func.func @transform_0(%arg0: i32) -> (i32, i32) {
    %c0_i32 = arith.constant 0 : i32
    %c0_i32_0 = arith.constant 0 : i32
    %c0_i32_1 = arith.constant 0 : i32
    return %c0_i32, %c0_i32_0 : i32, i32
  }
  func.func @transform_1(%arg0: i32) -> (i32, i32) {
    %c0_i32 = arith.constant 0 : i32
    %c0_i32_0 = arith.constant 0 : i32
    %c0_i32_1 = arith.constant 0 : i32
    return %c0_i32, %c0_i32_0 : i32, i32
  }
  func.func @transform_2(%arg0: i32) -> (i32, i32) {
    %c0_i32 = arith.constant 0 : i32
    %c0_i32_0 = arith.constant 0 : i32
    %c0_i32_1 = arith.constant 0 : i32
    return %c0_i32, %c0_i32_0 : i32, i32
  }
  func.func @transform_3(%arg0: i32) -> (i32, i32) {
    %c0_i32 = arith.constant 0 : i32
    %c0_i32_0 = arith.constant 0 : i32
    %c0_i32_1 = arith.constant 0 : i32
    return %c0_i32, %c0_i32_0 : i32, i32
  }
  func.func @transform_4(%arg0: i32) -> (i32, i32) {
    %c0_i32 = arith.constant 0 : i32
    %c0_i32_0 = arith.constant 0 : i32
    %c0_i32_1 = arith.constant 0 : i32
    return %c0_i32, %c0_i32_0 : i32, i32
  }
  func.func @transform_5(%arg0: i32) -> (i32, i32) {
    %c0_i32 = arith.constant 0 : i32
    %c0_i32_0 = arith.constant 0 : i32
    %c0_i32_1 = arith.constant 0 : i32
    return %c0_i32, %c0_i32_0 : i32, i32
  }
  func.func @transform_6(%arg0: i32) -> (i32, i32) {
    %c0_i32 = arith.constant 0 : i32
    %c0_i32_0 = arith.constant 0 : i32
    %c0_i32_1 = arith.constant 0 : i32
    return %c0_i32, %c0_i32_0 : i32, i32
  }
}

module attributes {stable_mosaic.version = 11 : i64} {
  func.func @bert_encoder_kernel(%arg0: i32, %arg1: i32, %arg2: memref<4x16x128xbf16, #tpu.memory_space<vmem>>, %arg3: memref<4x1x16xf32, #tpu.memory_space<vmem>>, %arg4: memref<16x128xf32, #tpu.memory_space<vmem>>, %arg5: memref<2x128xf32, #tpu.memory_space<vmem>>, %arg6: memref<2x128x384xbf16, #tpu.memory_space<vmem>>, %arg7: memref<2x1x384xf32, #tpu.memory_space<vmem>>, %arg8: memref<2x128x128xbf16, #tpu.memory_space<vmem>>, %arg9: memref<2x128x256xbf16, #tpu.memory_space<vmem>>, %arg10: memref<2x1x256xf32, #tpu.memory_space<vmem>>, %arg11: memref<2x256x128xbf16, #tpu.memory_space<vmem>>, %arg12: memref<2x8x128xf32, #tpu.memory_space<vmem>>, %arg13: memref<4x1x128xf32, #tpu.memory_space<vmem>>, %arg14: memref<4x16x128xf32, #tpu.memory_space<vmem>>) attributes {dimension_semantics = [#tpu.dimension_semantics<parallel>, #tpu.dimension_semantics<arbitrary>], iteration_bounds = array<i64: 2, 2>, scalar_prefetch = 0 : i64, scratch_operands = 1 : i64, tpu.core_type = #tpu.core_type<tc>, window_params = [{transform_indices = @transform_0, window_bounds = array<i64: 4, 16, 128>}, {transform_indices = @transform_1, window_bounds = array<i64: 4, 1, 16>}, {pipeline_mode = #tpu.pipeline_mode<synchronous>, transform_indices = @transform_2, window_bounds = array<i64: 16, 128>}, {pipeline_mode = #tpu.pipeline_mode<synchronous>, transform_indices = @transform_3, window_bounds = array<i64: 2, 128>}, {pipeline_mode = #tpu.pipeline_mode<synchronous>, transform_indices = @transform_4, window_bounds = array<i64: 2, 128, 384>}, {pipeline_mode = #tpu.pipeline_mode<synchronous>, transform_indices = @transform_5, window_bounds = array<i64: 2, 1, 384>}, {pipeline_mode = #tpu.pipeline_mode<synchronous>, transform_indices = @transform_6, window_bounds = array<i64: 2, 128, 128>}, {pipeline_mode = #tpu.pipeline_mode<synchronous>, transform_indices = @transform_7, window_bounds = array<i64: 2, 128, 256>}, {pipeline_mode = #tpu.pipeline_mode<synchronous>, transform_indices = @transform_8, window_bounds = array<i64: 2, 1, 256>}, {pipeline_mode = #tpu.pipeline_mode<synchronous>, transform_indices = @transform_9, window_bounds = array<i64: 2, 256, 128>}, {pipeline_mode = #tpu.pipeline_mode<synchronous>, transform_indices = @transform_10, window_bounds = array<i64: 2, 8, 128>}, {transform_indices = @transform_11, window_bounds = array<i64: 4, 1, 128>}]} {
    %c0_i32 = arith.constant 0 : i32
    %0 = arith.cmpi eq, %arg1, %c0_i32 : i32
    %1 = arith.extui %0 : i1 to i32
    %c0_i32_0 = arith.constant 0 : i32
    %2 = arith.cmpi ne, %1, %c0_i32_0 : i32
    scf.if %2 {
      %c0_53 = arith.constant 0 : index
      %c0_54 = arith.constant 0 : index
      %c0_55 = arith.constant 0 : index
      %174 = vector.load %arg2[%c0_53, %c0_54, %c0_55] : memref<4x16x128xbf16, #tpu.memory_space<vmem>>, vector<4x16x128xbf16>
      %175 = arith.extf %174 : vector<4x16x128xbf16> to vector<4x16x128xf32>
      %c0_56 = arith.constant 0 : index
      %c0_57 = arith.constant 0 : index
      %176 = vector.load %arg4[%c0_56, %c0_57] : memref<16x128xf32, #tpu.memory_space<vmem>>, vector<16x128xf32>
      %177 = vector.shape_cast %176 : vector<16x128xf32> to vector<1x16x128xf32>
      %178 = vector.broadcast %177 : vector<1x16x128xf32> to vector<4x16x128xf32>
      %179 = arith.addf %175, %178 : vector<4x16x128xf32>
      %c0_58 = arith.constant 0 : index
      %c0_59 = arith.constant 0 : index
      %180 = vector.load %arg5[%c0_58, %c0_59] : memref<2x128xf32, #tpu.memory_space<vmem>>, vector<2x128xf32>
      %181 = vector.shape_cast %179 : vector<4x16x128xf32> to vector<64x128xf32>
      %182 = vector.extract_strided_slice %180 {offsets = [0, 0], sizes = [1, 128], strides = [1, 1]} : vector<2x128xf32> to vector<1x128xf32>
      %183 = vector.extract_strided_slice %180 {offsets = [1, 0], sizes = [1, 128], strides = [1, 1]} : vector<2x128xf32> to vector<1x128xf32>
      %cst_60 = arith.constant dense<0.000000e+00> : vector<64xf32>
      %184 = vector.multi_reduction <add>, %181, %cst_60 [1] : vector<64x128xf32> to vector<64xf32>
      %185 = vector.shape_cast %184 : vector<64xf32> to vector<64x1xf32>
      %cst_61 = arith.constant 1.280000e+02 : f32
      %186 = vector.broadcast %cst_61 : f32 to vector<64x1xf32>
      %187 = arith.divf %185, %186 : vector<64x1xf32>
      %188 = vector.broadcast %187 : vector<64x1xf32> to vector<64x128xf32>
      %189 = arith.subf %181, %188 : vector<64x128xf32>
      %190 = arith.mulf %189, %189 : vector<64x128xf32>
      %cst_62 = arith.constant dense<0.000000e+00> : vector<64xf32>
      %191 = vector.multi_reduction <add>, %190, %cst_62 [1] : vector<64x128xf32> to vector<64xf32>
      %192 = vector.shape_cast %191 : vector<64xf32> to vector<64x1xf32>
      %cst_63 = arith.constant 1.280000e+02 : f32
      %193 = vector.broadcast %cst_63 : f32 to vector<64x1xf32>
      %194 = arith.divf %192, %193 : vector<64x1xf32>
      %195 = vector.broadcast %187 : vector<64x1xf32> to vector<64x128xf32>
      %196 = arith.subf %181, %195 : vector<64x128xf32>
      %cst_64 = arith.constant 9.99999996E-13 : f32
      %197 = vector.broadcast %cst_64 : f32 to vector<64x1xf32>
      %198 = arith.addf %194, %197 : vector<64x1xf32>
      %199 = math.rsqrt %198 : vector<64x1xf32>
      %200 = vector.broadcast %199 : vector<64x1xf32> to vector<64x128xf32>
      %201 = arith.mulf %196, %200 : vector<64x128xf32>
      %202 = vector.broadcast %182 : vector<1x128xf32> to vector<64x128xf32>
      %203 = arith.mulf %201, %202 : vector<64x128xf32>
      %204 = vector.broadcast %183 : vector<1x128xf32> to vector<64x128xf32>
      %205 = arith.addf %203, %204 : vector<64x128xf32>
      %206 = vector.shape_cast %205 : vector<64x128xf32> to vector<4x16x128xf32>
      %c0_65 = arith.constant 0 : index
      %c0_66 = arith.constant 0 : index
      %c0_67 = arith.constant 0 : index
      %207 = vector.load %arg14[%c0_65, %c0_66, %c0_67] : memref<4x16x128xf32, #tpu.memory_space<vmem>>, vector<4x16x128xf32>
      tpu.vector_store %arg14[%c0_65, %c0_66, %c0_67], %206 {strides = array<i32>} : memref<4x16x128xf32, #tpu.memory_space<vmem>>, vector<4x16x128xf32>,
    } else {
    }
    %c0 = arith.constant 0 : index
    %c0_1 = arith.constant 0 : index
    %c0_2 = arith.constant 0 : index
    %3 = vector.load %arg14[%c0, %c0_1, %c0_2] : memref<4x16x128xf32, #tpu.memory_space<vmem>>, vector<4x16x128xf32>
    %4 = vector.shape_cast %3 : vector<4x16x128xf32> to vector<64x128xf32>
    %5 = arith.truncf %4 : vector<64x128xf32> to vector<64x128xbf16>
    %6 = arith.index_cast %arg1 : i32 to index
    %c0_3 = arith.constant 0 : index
    %c0_4 = arith.constant 0 : index
    %7 = vector.load %arg12[%6, %c0_3, %c0_4] : memref<2x8x128xf32, #tpu.memory_space<vmem>>, vector<1x8x128xf32>
    %8 = vector.shape_cast %7 : vector<1x8x128xf32> to vector<8x128xf32>
    %9 = arith.index_cast %arg1 : i32 to index
    %c0_5 = arith.constant 0 : index
    %c0_6 = arith.constant 0 : index
    %10 = vector.load %arg6[%9, %c0_5, %c0_6] : memref<2x128x384xbf16, #tpu.memory_space<vmem>>, vector<1x128x384xbf16>
    %11 = vector.shape_cast %10 : vector<1x128x384xbf16> to vector<128x384xbf16>
    %12 = arith.index_cast %arg1 : i32 to index
    %c0_7 = arith.constant 0 : index
    %c0_8 = arith.constant 0 : index
    %13 = vector.load %arg8[%12, %c0_7, %c0_8] : memref<2x128x128xbf16, #tpu.memory_space<vmem>>, vector<1x128x128xbf16>
    %14 = vector.shape_cast %13 : vector<1x128x128xbf16> to vector<128x128xbf16>
    %cst = arith.constant dense<0.000000e+00> : vector<64x384xf32>
    %15 = tpu.matmul %5, %11, %cst {dimension_numbers = #tpu.dot_dimension_numbers<[1], [0], [0], [1], [0, 0, 1, 1], [], []>} : vector<64x128xbf16>, vector<128x384xbf16>, vector<64x384xf32> -> vector<64x384xf32>
    %16 = arith.index_cast %arg1 : i32 to index
    %c0_9 = arith.constant 0 : index
    %c0_10 = arith.constant 0 : index
    %17 = vector.load %arg7[%16, %c0_9, %c0_10] : memref<2x1x384xf32, #tpu.memory_space<vmem>>, vector<1x1x384xf32>
    %18 = vector.shape_cast %17 : vector<1x1x384xf32> to vector<1x384xf32>
    %19 = vector.broadcast %18 : vector<1x384xf32> to vector<64x384xf32>
    %20 = arith.addf %15, %19 : vector<64x384xf32>
    %21 = vector.extract_strided_slice %20 {offsets = [0, 0], sizes = [64, 128], strides = [1, 1]} : vector<64x384xf32> to vector<64x128xf32>
    %22 = arith.truncf %21 : vector<64x128xf32> to vector<64x128xbf16>
    %23 = vector.extract_strided_slice %20 {offsets = [0, 128], sizes = [64, 128], strides = [1, 1]} : vector<64x384xf32> to vector<64x128xf32>
    %24 = arith.truncf %23 : vector<64x128xf32> to vector<64x128xbf16>
    %25 = vector.extract_strided_slice %20 {offsets = [0, 256], sizes = [64, 128], strides = [1, 1]} : vector<64x384xf32> to vector<64x128xf32>
    %26 = arith.truncf %25 : vector<64x128xf32> to vector<64x128xbf16>
    %c0_11 = arith.constant 0 : index
    %c0_12 = arith.constant 0 : index
    %c0_13 = arith.constant 0 : index
    %27 = vector.load %arg3[%c0_11, %c0_12, %c0_13] : memref<4x1x16xf32, #tpu.memory_space<vmem>>, vector<4x1x16xf32>
    %28 = vector.shape_cast %27 : vector<4x1x16xf32> to vector<4x1x16xf32>
    %29 = vector.broadcast %28 : vector<4x1x16xf32> to vector<4x16x16xf32>
    %cst_14 = arith.constant 0.000000e+00 : f32
    %30 = vector.broadcast %cst_14 : f32 to vector<64x128xf32>
    %31 = vector.extract_strided_slice %22 {offsets = [0, 0], sizes = [64, 64], strides = [1, 1]} : vector<64x128xbf16> to vector<64x64xbf16>
    %32 = vector.shape_cast %31 : vector<64x64xbf16> to vector<4x16x64xbf16>
    %33 = vector.extract_strided_slice %24 {offsets = [0, 0], sizes = [64, 64], strides = [1, 1]} : vector<64x128xbf16> to vector<64x64xbf16>
    %34 = vector.shape_cast %33 : vector<64x64xbf16> to vector<4x16x64xbf16>
    %35 = vector.extract_strided_slice %26 {offsets = [0, 0], sizes = [64, 64], strides = [1, 1]} : vector<64x128xbf16> to vector<64x64xbf16>
    %36 = vector.shape_cast %35 : vector<64x64xbf16> to vector<4x16x64xbf16>
    "tpu.trace_start"() <{level = 10 : i32, message = "bqd,bkd->bqk"}> : () -> ()
    %cst_15 = arith.constant dense<0.000000e+00> : vector<4x16x16xf32>
    %37 = tpu.matmul %32, %34, %cst_15 {dimension_numbers = #tpu.dot_dimension_numbers<[2], [2], [1], [1], [0, 0, 0, 1, 1, 1], [0], [0]>} : vector<4x16x64xbf16>, vector<4x16x64xbf16>, vector<4x16x16xf32> -> vector<4x16x16xf32>
    "tpu.trace_stop"() : () -> ()
    %cst_16 = arith.constant 1.250000e-01 : f32
    %38 = vector.broadcast %cst_16 : f32 to vector<4x16x16xf32>
    %39 = arith.mulf %37, %38 : vector<4x16x16xf32>
    %40 = arith.addf %39, %29 : vector<4x16x16xf32>
    %cst_17 = arith.constant dense<0xFF800000> : vector<4x16xf32>
    %41 = vector.multi_reduction <maximumf>, %40, %cst_17 [2] : vector<4x16x16xf32> to vector<4x16xf32>
    %42 = vector.shape_cast %41 : vector<4x16xf32> to vector<4x16x1xf32>
    %43 = vector.broadcast %42 : vector<4x16x1xf32> to vector<4x16x16xf32>
    %44 = arith.subf %40, %43 : vector<4x16x16xf32>
    %45 = math.exp %44 : vector<4x16x16xf32>
    %cst_18 = arith.constant dense<0.000000e+00> : vector<4x16xf32>
    %46 = vector.multi_reduction <add>, %45, %cst_18 [2] : vector<4x16x16xf32> to vector<4x16xf32>
    %47 = vector.shape_cast %46 : vector<4x16xf32> to vector<4x16x1xf32>
    %48 = tpu.reciprocal %47 {approx = true} : vector<4x16x1xf32> -> vector<4x16x1xf32>
    %49 = vector.broadcast %48 : vector<4x16x1xf32> to vector<4x16x16xf32>
    %50 = arith.mulf %45, %49 : vector<4x16x16xf32>
    %51 = arith.truncf %50 : vector<4x16x16xf32> to vector<4x16x16xbf16>
    "tpu.trace_start"() <{level = 10 : i32, message = "bqk,bkd->bqd"}> : () -> ()
    %cst_19 = arith.constant dense<0.000000e+00> : vector<4x16x64xf32>
    %52 = tpu.matmul %51, %36, %cst_19 {dimension_numbers = #tpu.dot_dimension_numbers<[2], [1], [1], [2], [0, 0, 0, 1, 1, 2], [0], [0]>} : vector<4x16x16xbf16>, vector<4x16x64xbf16>, vector<4x16x64xf32> -> vector<4x16x64xf32>
    "tpu.trace_stop"() : () -> ()
    %53 = vector.shape_cast %52 : vector<4x16x64xf32> to vector<64x64xf32>
    %54 = arith.truncf %53 : vector<64x64xf32> to vector<64x64xbf16>
    %55 = vector.extract_strided_slice %14 {offsets = [0, 0], sizes = [64, 128], strides = [1, 1]} : vector<128x128xbf16> to vector<64x128xbf16>
    %cst_20 = arith.constant dense<0.000000e+00> : vector<64x128xf32>
    %56 = tpu.matmul %54, %55, %cst_20 {dimension_numbers = #tpu.dot_dimension_numbers<[1], [0], [0], [1], [0, 0, 1, 1], [], []>} : vector<64x64xbf16>, vector<64x128xbf16>, vector<64x128xf32> -> vector<64x128xf32>
    %57 = arith.addf %30, %56 : vector<64x128xf32>
    %58 = vector.extract_strided_slice %22 {offsets = [0, 64], sizes = [64, 64], strides = [1, 1]} : vector<64x128xbf16> to vector<64x64xbf16>
    %59 = vector.shape_cast %58 : vector<64x64xbf16> to vector<4x16x64xbf16>
    %60 = vector.extract_strided_slice %24 {offsets = [0, 64], sizes = [64, 64], strides = [1, 1]} : vector<64x128xbf16> to vector<64x64xbf16>
    %61 = vector.shape_cast %60 : vector<64x64xbf16> to vector<4x16x64xbf16>
    %62 = vector.extract_strided_slice %26 {offsets = [0, 64], sizes = [64, 64], strides = [1, 1]} : vector<64x128xbf16> to vector<64x64xbf16>
    %63 = vector.shape_cast %62 : vector<64x64xbf16> to vector<4x16x64xbf16>
    "tpu.trace_start"() <{level = 10 : i32, message = "bqd,bkd->bqk"}> : () -> ()
    %cst_21 = arith.constant dense<0.000000e+00> : vector<4x16x16xf32>
    %64 = tpu.matmul %59, %61, %cst_21 {dimension_numbers = #tpu.dot_dimension_numbers<[2], [2], [1], [1], [0, 0, 0, 1, 1, 1], [0], [0]>} : vector<4x16x64xbf16>, vector<4x16x64xbf16>, vector<4x16x16xf32> -> vector<4x16x16xf32>
    "tpu.trace_stop"() : () -> ()
    %cst_22 = arith.constant 1.250000e-01 : f32
    %65 = vector.broadcast %cst_22 : f32 to vector<4x16x16xf32>
    %66 = arith.mulf %64, %65 : vector<4x16x16xf32>
    %67 = arith.addf %66, %29 : vector<4x16x16xf32>
    %cst_23 = arith.constant dense<0xFF800000> : vector<4x16xf32>
    %68 = vector.multi_reduction <maximumf>, %67, %cst_23 [2] : vector<4x16x16xf32> to vector<4x16xf32>
    %69 = vector.shape_cast %68 : vector<4x16xf32> to vector<4x16x1xf32>
    %70 = vector.broadcast %69 : vector<4x16x1xf32> to vector<4x16x16xf32>
    %71 = arith.subf %67, %70 : vector<4x16x16xf32>
    %72 = math.exp %71 : vector<4x16x16xf32>
    %cst_24 = arith.constant dense<0.000000e+00> : vector<4x16xf32>
    %73 = vector.multi_reduction <add>, %72, %cst_24 [2] : vector<4x16x16xf32> to vector<4x16xf32>
    %74 = vector.shape_cast %73 : vector<4x16xf32> to vector<4x16x1xf32>
    %75 = tpu.reciprocal %74 {approx = true} : vector<4x16x1xf32> -> vector<4x16x1xf32>
    %76 = vector.broadcast %75 : vector<4x16x1xf32> to vector<4x16x16xf32>
    %77 = arith.mulf %72, %76 : vector<4x16x16xf32>
    %78 = arith.truncf %77 : vector<4x16x16xf32> to vector<4x16x16xbf16>
    "tpu.trace_start"() <{level = 10 : i32, message = "bqk,bkd->bqd"}> : () -> ()
    %cst_25 = arith.constant dense<0.000000e+00> : vector<4x16x64xf32>
    %79 = tpu.matmul %78, %63, %cst_25 {dimension_numbers = #tpu.dot_dimension_numbers<[2], [1], [1], [2], [0, 0, 0, 1, 1, 2], [0], [0]>} : vector<4x16x16xbf16>, vector<4x16x64xbf16>, vector<4x16x64xf32> -> vector<4x16x64xf32>
    "tpu.trace_stop"() : () -> ()
    %80 = vector.shape_cast %79 : vector<4x16x64xf32> to vector<64x64xf32>
    %81 = arith.truncf %80 : vector<64x64xf32> to vector<64x64xbf16>
    %82 = vector.extract_strided_slice %14 {offsets = [64, 0], sizes = [64, 128], strides = [1, 1]} : vector<128x128xbf16> to vector<64x128xbf16>
    %cst_26 = arith.constant dense<0.000000e+00> : vector<64x128xf32>
    %83 = tpu.matmul %81, %82, %cst_26 {dimension_numbers = #tpu.dot_dimension_numbers<[1], [0], [0], [1], [0, 0, 1, 1], [], []>} : vector<64x64xbf16>, vector<64x128xbf16>, vector<64x128xf32> -> vector<64x128xf32>
    %84 = arith.addf %57, %83 : vector<64x128xf32>
    %85 = vector.extract_strided_slice %8 {offsets = [0, 0], sizes = [1, 128], strides = [1, 1]} : vector<8x128xf32> to vector<1x128xf32>
    %86 = vector.broadcast %85 : vector<1x128xf32> to vector<64x128xf32>
    %87 = arith.addf %84, %86 : vector<64x128xf32>
    %88 = arith.addf %4, %87 : vector<64x128xf32>
    %89 = vector.extract_strided_slice %8 {offsets = [2, 0], sizes = [1, 128], strides = [1, 1]} : vector<8x128xf32> to vector<1x128xf32>
    %90 = vector.extract_strided_slice %8 {offsets = [3, 0], sizes = [1, 128], strides = [1, 1]} : vector<8x128xf32> to vector<1x128xf32>
    %cst_27 = arith.constant dense<0.000000e+00> : vector<64xf32>
    %91 = vector.multi_reduction <add>, %88, %cst_27 [1] : vector<64x128xf32> to vector<64xf32>
    %92 = vector.shape_cast %91 : vector<64xf32> to vector<64x1xf32>
    %cst_28 = arith.constant 1.280000e+02 : f32
    %93 = vector.broadcast %cst_28 : f32 to vector<64x1xf32>
    %94 = arith.divf %92, %93 : vector<64x1xf32>
    %95 = vector.broadcast %94 : vector<64x1xf32> to vector<64x128xf32>
    %96 = arith.subf %88, %95 : vector<64x128xf32>
    %97 = arith.mulf %96, %96 : vector<64x128xf32>
    %cst_29 = arith.constant dense<0.000000e+00> : vector<64xf32>
    %98 = vector.multi_reduction <add>, %97, %cst_29 [1] : vector<64x128xf32> to vector<64xf32>
    %99 = vector.shape_cast %98 : vector<64xf32> to vector<64x1xf32>
    %cst_30 = arith.constant 1.280000e+02 : f32
    %100 = vector.broadcast %cst_30 : f32 to vector<64x1xf32>
    %101 = arith.divf %99, %100 : vector<64x1xf32>
    %102 = vector.broadcast %94 : vector<64x1xf32> to vector<64x128xf32>
    %103 = arith.subf %88, %102 : vector<64x128xf32>
    %cst_31 = arith.constant 9.99999996E-13 : f32
    %104 = vector.broadcast %cst_31 : f32 to vector<64x1xf32>
    %105 = arith.addf %101, %104 : vector<64x1xf32>
    %106 = math.rsqrt %105 : vector<64x1xf32>
    %107 = vector.broadcast %106 : vector<64x1xf32> to vector<64x128xf32>
    %108 = arith.mulf %103, %107 : vector<64x128xf32>
    %109 = vector.broadcast %89 : vector<1x128xf32> to vector<64x128xf32>
    %110 = arith.mulf %108, %109 : vector<64x128xf32>
    %111 = vector.broadcast %90 : vector<1x128xf32> to vector<64x128xf32>
    %112 = arith.addf %110, %111 : vector<64x128xf32>
    %113 = arith.truncf %112 : vector<64x128xf32> to vector<64x128xbf16>
    %114 = arith.index_cast %arg1 : i32 to index
    %c0_32 = arith.constant 0 : index
    %c0_33 = arith.constant 0 : index
    %115 = vector.load %arg9[%114, %c0_32, %c0_33] : memref<2x128x256xbf16, #tpu.memory_space<vmem>>, vector<1x128x256xbf16>
    %116 = vector.shape_cast %115 : vector<1x128x256xbf16> to vector<128x256xbf16>
    %cst_34 = arith.constant dense<0.000000e+00> : vector<64x256xf32>
    %117 = tpu.matmul %113, %116, %cst_34 {dimension_numbers = #tpu.dot_dimension_numbers<[1], [0], [0], [1], [0, 0, 1, 1], [], []>} : vector<64x128xbf16>, vector<128x256xbf16>, vector<64x256xf32> -> vector<64x256xf32>
    %118 = arith.index_cast %arg1 : i32 to index
    %c0_35 = arith.constant 0 : index
    %c0_36 = arith.constant 0 : index
    %119 = vector.load %arg10[%118, %c0_35, %c0_36] : memref<2x1x256xf32, #tpu.memory_space<vmem>>, vector<1x1x256xf32>
    %120 = vector.shape_cast %119 : vector<1x1x256xf32> to vector<1x256xf32>
    %121 = vector.broadcast %120 : vector<1x256xf32> to vector<64x256xf32>
    %122 = arith.addf %117, %121 : vector<64x256xf32>
    %123 = arith.mulf %122, %122 : vector<64x256xf32>
    %124 = arith.mulf %122, %123 : vector<64x256xf32>
    %cst_37 = arith.constant 4.471500e-02 : f32
    %125 = vector.broadcast %cst_37 : f32 to vector<64x256xf32>
    %126 = arith.mulf %125, %124 : vector<64x256xf32>
    %127 = arith.addf %122, %126 : vector<64x256xf32>
    %cst_38 = arith.constant 0.797884583 : f32
    %128 = vector.broadcast %cst_38 : f32 to vector<64x256xf32>
    %129 = arith.mulf %128, %127 : vector<64x256xf32>
    %130 = math.tanh %129 : vector<64x256xf32>
    %cst_39 = arith.constant 1.000000e+00 : f32
    %131 = vector.broadcast %cst_39 : f32 to vector<64x256xf32>
    %132 = arith.addf %131, %130 : vector<64x256xf32>
    %cst_40 = arith.constant 5.000000e-01 : f32
    %133 = vector.broadcast %cst_40 : f32 to vector<64x256xf32>
    %134 = arith.mulf %133, %132 : vector<64x256xf32>
    %135 = arith.mulf %122, %134 : vector<64x256xf32>
    %136 = arith.truncf %135 : vector<64x256xf32> to vector<64x256xbf16>
    %137 = arith.index_cast %arg1 : i32 to index
    %c0_41 = arith.constant 0 : index
    %c0_42 = arith.constant 0 : index
    %138 = vector.load %arg11[%137, %c0_41, %c0_42] : memref<2x256x128xbf16, #tpu.memory_space<vmem>>, vector<1x256x128xbf16>
    %139 = vector.shape_cast %138 : vector<1x256x128xbf16> to vector<256x128xbf16>
    %cst_43 = arith.constant dense<0.000000e+00> : vector<64x128xf32>
    %140 = tpu.matmul %136, %139, %cst_43 {dimension_numbers = #tpu.dot_dimension_numbers<[1], [0], [0], [1], [0, 0, 1, 1], [], []>} : vector<64x256xbf16>, vector<256x128xbf16>, vector<64x128xf32> -> vector<64x128xf32>
    %141 = vector.extract_strided_slice %8 {offsets = [1, 0], sizes = [1, 128], strides = [1, 1]} : vector<8x128xf32> to vector<1x128xf32>
    %142 = vector.broadcast %141 : vector<1x128xf32> to vector<64x128xf32>
    %143 = arith.addf %140, %142 : vector<64x128xf32>
    %144 = arith.addf %112, %143 : vector<64x128xf32>
    %145 = vector.extract_strided_slice %8 {offsets = [4, 0], sizes = [1, 128], strides = [1, 1]} : vector<8x128xf32> to vector<1x128xf32>
    %146 = vector.extract_strided_slice %8 {offsets = [5, 0], sizes = [1, 128], strides = [1, 1]} : vector<8x128xf32> to vector<1x128xf32>
    %cst_44 = arith.constant dense<0.000000e+00> : vector<64xf32>
    %147 = vector.multi_reduction <add>, %144, %cst_44 [1] : vector<64x128xf32> to vector<64xf32>
    %148 = vector.shape_cast %147 : vector<64xf32> to vector<64x1xf32>
    %cst_45 = arith.constant 1.280000e+02 : f32
    %149 = vector.broadcast %cst_45 : f32 to vector<64x1xf32>
    %150 = arith.divf %148, %149 : vector<64x1xf32>
    %151 = vector.broadcast %150 : vector<64x1xf32> to vector<64x128xf32>
    %152 = arith.subf %144, %151 : vector<64x128xf32>
    %153 = arith.mulf %152, %152 : vector<64x128xf32>
    %cst_46 = arith.constant dense<0.000000e+00> : vector<64xf32>
    %154 = vector.multi_reduction <add>, %153, %cst_46 [1] : vector<64x128xf32> to vector<64xf32>
    %155 = vector.shape_cast %154 : vector<64xf32> to vector<64x1xf32>
    %cst_47 = arith.constant 1.280000e+02 : f32
    %156 = vector.broadcast %cst_47 : f32 to vector<64x1xf32>
    %157 = arith.divf %155, %156 : vector<64x1xf32>
    %158 = vector.broadcast %150 : vector<64x1xf32> to vector<64x128xf32>
    %159 = arith.subf %144, %158 : vector<64x128xf32>
    %cst_48 = arith.constant 9.99999996E-13 : f32
    %160 = vector.broadcast %cst_48 : f32 to vector<64x1xf32>
    %161 = arith.addf %157, %160 : vector<64x1xf32>
    %162 = math.rsqrt %161 : vector<64x1xf32>
    %163 = vector.broadcast %162 : vector<64x1xf32> to vector<64x128xf32>
    %164 = arith.mulf %159, %163 : vector<64x128xf32>
    %165 = vector.broadcast %145 : vector<1x128xf32> to vector<64x128xf32>
    %166 = arith.mulf %164, %165 : vector<64x128xf32>
    %167 = vector.broadcast %146 : vector<1x128xf32> to vector<64x128xf32>
    %168 = arith.addf %166, %167 : vector<64x128xf32>
    %169 = vector.shape_cast %168 : vector<64x128xf32> to vector<4x16x128xf32>
    %c0_49 = arith.constant 0 : index
    %c0_50 = arith.constant 0 : index
    %c0_51 = arith.constant 0 : index
    %170 = vector.load %arg14[%c0_49, %c0_50, %c0_51] : memref<4x16x128xf32, #tpu.memory_space<vmem>>, vector<4x16x128xf32>
    tpu.vector_store %arg14[%c0_49, %c0_50, %c0_51], %169 {strides = array<i32>} : memref<4x16x128xf32, #tpu.memory_space<vmem>>, vector<4x16x128xf32>,
    %c1_i32 = arith.constant 1 : i32
    %171 = arith.cmpi eq, %arg1, %c1_i32 : i32
    %172 = arith.extui %171 : i1 to i32
    %c0_i32_52 = arith.constant 0 : i32
    %173 = arith.cmpi ne, %172, %c0_i32_52 : i32
    scf.if %173 {
      %174 = vector.shape_cast %168 : vector<64x128xf32> to vector<4x16x128xf32>
      %175 = vector.extract_strided_slice %174 {offsets = [0, 0, 0], sizes = [4, 1, 128], strides = [1, 1, 1]} : vector<4x16x128xf32> to vector<4x1x128xf32>
      %c0_53 = arith.constant 0 : index
      %c0_54 = arith.constant 0 : index
      %c0_55 = arith.constant 0 : index
      %176 = vector.load %arg13[%c0_53, %c0_54, %c0_55] : memref<4x1x128xf32, #tpu.memory_space<vmem>>, vector<4x1x128xf32>
      tpu.vector_store %arg13[%c0_53, %c0_54, %c0_55], %175 {strides = array<i32>} : memref<4x1x128xf32, #tpu.memory_space<vmem>>, vector<4x1x128xf32>,
    } else {
    }
    return
  }
  func.func @transform_0(%arg0: i32, %arg1: i32) -> (i32, i32, i32) {
    %c0_i32 = arith.constant 0 : i32
    %c0_i32_0 = arith.constant 0 : i32
    %c0_i32_1 = arith.constant 0 : i32
    return %arg0, %c0_i32, %c0_i32_0 : i32, i32, i32
  }
  func.func @transform_1(%arg0: i32, %arg1: i32) -> (i32, i32, i32) {
    %c0_i32 = arith.constant 0 : i32
    %c0_i32_0 = arith.constant 0 : i32
    %c0_i32_1 = arith.constant 0 : i32
    return %arg0, %c0_i32, %c0_i32_0 : i32, i32, i32
  }
  func.func @transform_2(%arg0: i32, %arg1: i32) -> (i32, i32) {
    %c0_i32 = arith.constant 0 : i32
    %c0_i32_0 = arith.constant 0 : i32
    %c0_i32_1 = arith.constant 0 : i32
    return %c0_i32, %c0_i32_0 : i32, i32
  }
  func.func @transform_3(%arg0: i32, %arg1: i32) -> (i32, i32) {
    %c0_i32 = arith.constant 0 : i32
    %c0_i32_0 = arith.constant 0 : i32
    %c0_i32_1 = arith.constant 0 : i32
    return %c0_i32, %c0_i32_0 : i32, i32
  }
  func.func @transform_4(%arg0: i32, %arg1: i32) -> (i32, i32, i32) {
    %c0_i32 = arith.constant 0 : i32
    %c0_i32_0 = arith.constant 0 : i32
    %c0_i32_1 = arith.constant 0 : i32
    %c0_i32_2 = arith.constant 0 : i32
    return %c0_i32, %c0_i32_0, %c0_i32_1 : i32, i32, i32
  }
  func.func @transform_5(%arg0: i32, %arg1: i32) -> (i32, i32, i32) {
    %c0_i32 = arith.constant 0 : i32
    %c0_i32_0 = arith.constant 0 : i32
    %c0_i32_1 = arith.constant 0 : i32
    %c0_i32_2 = arith.constant 0 : i32
    return %c0_i32, %c0_i32_0, %c0_i32_1 : i32, i32, i32
  }
  func.func @transform_6(%arg0: i32, %arg1: i32) -> (i32, i32, i32) {
    %c0_i32 = arith.constant 0 : i32
    %c0_i32_0 = arith.constant 0 : i32
    %c0_i32_1 = arith.constant 0 : i32
    %c0_i32_2 = arith.constant 0 : i32
    return %c0_i32, %c0_i32_0, %c0_i32_1 : i32, i32, i32
  }
  func.func @transform_7(%arg0: i32, %arg1: i32) -> (i32, i32, i32) {
    %c0_i32 = arith.constant 0 : i32
    %c0_i32_0 = arith.constant 0 : i32
    %c0_i32_1 = arith.constant 0 : i32
    %c0_i32_2 = arith.constant 0 : i32
    return %c0_i32, %c0_i32_0, %c0_i32_1 : i32, i32, i32
  }
  func.func @transform_8(%arg0: i32, %arg1: i32) -> (i32, i32, i32) {
    %c0_i32 = arith.constant 0 : i32
    %c0_i32_0 = arith.constant 0 : i32
    %c0_i32_1 = arith.constant 0 : i32
    %c0_i32_2 = arith.constant 0 : i32
    return %c0_i32, %c0_i32_0, %c0_i32_1 : i32, i32, i32
  }
  func.func @transform_9(%arg0: i32, %arg1: i32) -> (i32, i32, i32) {
    %c0_i32 = arith.constant 0 : i32
    %c0_i32_0 = arith.constant 0 : i32
    %c0_i32_1 = arith.constant 0 : i32
    %c0_i32_2 = arith.constant 0 : i32
    return %c0_i32, %c0_i32_0, %c0_i32_1 : i32, i32, i32
  }
  func.func @transform_10(%arg0: i32, %arg1: i32) -> (i32, i32, i32) {
    %c0_i32 = arith.constant 0 : i32
    %c0_i32_0 = arith.constant 0 : i32
    %c0_i32_1 = arith.constant 0 : i32
    %c0_i32_2 = arith.constant 0 : i32
    return %c0_i32, %c0_i32_0, %c0_i32_1 : i32, i32, i32
  }
  func.func @transform_11(%arg0: i32, %arg1: i32) -> (i32, i32, i32) {
    %c0_i32 = arith.constant 0 : i32
    %c0_i32_0 = arith.constant 0 : i32
    %c0_i32_1 = arith.constant 0 : i32
    return %arg0, %c0_i32, %c0_i32_0 : i32, i32, i32
  }
}

</mosaic_0001>

<llo_original>
// kernel: bert_regressor_forward.3
$region0: #{bert_regressor_forward.3}
  #allocation0 [shape = 'u32[]', space=smem, size = 0x4, offset = 0x4, fixed_abs, tag = 'smem constant byte address 0x4 - core index']
  #allocation1 [shape = 'u32[144,128]{1,0:T(1,128)}', space=vmem, size = 0x12000, scoped, tag = 'internal scratch']
  #allocation2 [shape = 'f32[4,2,128]{2,1,0:T(2,128)}', space=vmem, size = 0x1000, scoped, tag = 'scratch operand']
  #allocation3 [shape = 'f32[1,1]{1,0:T(1,128)S(1)}', space=vmem, size = 0x200, scoped, tag = 'scoped memory for bert_regressor_forward.3']
  %s0 = inlined_call_operand.vmem [shape: f32[8,128], index: 0, kind: input, shape index: {}]
  %s1 = inlined_call_operand.vmem [shape: f32[128,128], index: 1, kind: input, shape index: {}]
  %s2 = inlined_call_operand.vmem [shape: f32[32,128], index: 2, kind: input, shape index: {}]
  %s3 = inlined_call_operand.vmem [shape: f32[1,128], index: 3, kind: input, shape index: {}]
  %s4 = inlined_call_operand.vmem [shape: f32[32,1], index: 4, kind: input, shape index: {}]
  %s5 = inlined_call_operand.<no memory space> [shape: f32[1,1], index: 5, kind: input, shape index: {}]
  %s6 = inlined_call_operand.vmem [shape: f32[2,1], index: 6, kind: output, shape index: {}]
  %s7 = sld [smem:[#allocation0]]
  $region34: #{bert_regressor_forward.3} parent=0
    _
  %s9 = ssub.s32 1, %s7
  %s10 = scalar_select 0, %s9, %s7
  %v11 = vstv %s5
  %12 = vst [vmem:[#allocation3] sm:$0x1] %v11
  // Predicated region
  $region2: #{bert_regressor_forward.3} parent=0 // pred_check
    _
  $region3: #{bert_regressor_forward.3} parent=0 // pred_check_branch
    %14 = sbr.rel (0) target = $region5
  $region4: #{bert_regressor_forward.3} parent=0 // pred_region
    _
  $region5: #{bert_regressor_forward.3} parent=0 // pred_fallthru
    _
  // Predicated region
  $region6: #{bert_regressor_forward.3} parent=0 // pred_check
    _
  $region7: #{bert_regressor_forward.3} parent=0 // pred_check_branch
    %16 = sbr.rel (0) target = $region9
  $region8: #{bert_regressor_forward.3} parent=0 // pred_region
    _
  $region9: #{bert_regressor_forward.3} parent=0 // pred_fallthru
    _
  // Predicated region
  $region10: #{bert_regressor_forward.3} parent=0 // pred_check
    _
  $region11: #{bert_regressor_forward.3} parent=0 // pred_check_branch
    %18 = sbr.rel (0) target = $region13
  $region12: #{bert_regressor_forward.3} parent=0 // pred_region
    _
  $region13: #{bert_regressor_forward.3} parent=0 // pred_fallthru
    _
  // Predicated region
  $region14: #{bert_regressor_forward.3} parent=0 // pred_check
    _
  $region15: #{bert_regressor_forward.3} parent=0 // pred_check_branch
    %20 = sbr.rel (0) target = $region17
  $region16: #{bert_regressor_forward.3} parent=0 // pred_region
    _
  $region17: #{bert_regressor_forward.3} parent=0 // pred_fallthru
    _
  // Predicated region
  $region18: #{bert_regressor_forward.3} parent=0 // pred_check
    _
  $region19: #{bert_regressor_forward.3} parent=0 // pred_check_branch
    %22 = sbr.rel (0) target = $region21
  $region20: #{bert_regressor_forward.3} parent=0 // pred_region
    _
  $region21: #{bert_regressor_forward.3} parent=0 // pred_fallthru
    _
  // Predicated region
  $region22: #{bert_regressor_forward.3} parent=0 // pred_check
    _
  $region23: #{bert_regressor_forward.3} parent=0 // pred_check_branch
    %24 = sbr.rel (0) target = $region25
  $region24: #{bert_regressor_forward.3} parent=0 // pred_region
    _
  $region25: #{bert_regressor_forward.3} parent=0 // pred_fallthru
    _
  %v25 = vld [vmem:[%s0] sm:$0xff]
  %v26 = vld [vmem:[%s1] sm:$0xff]
  %v27 = vld [vmem:[%s1 + $0x8] sm:$0xff]
  %v28 = vld [vmem:[%s1 + $0x10] sm:$0xff]
  %v29 = vld [vmem:[%s1 + $0x18] sm:$0xff]
  %v30 = vld [vmem:[%s1 + $0x20] sm:$0xff]
  %v31 = vld [vmem:[%s1 + $0x28] sm:$0xff]
  %v32 = vld [vmem:[%s1 + $0x30] sm:$0xff]
  %v33 = vld [vmem:[%s1 + $0x38] sm:$0xff]
  %v34 = vld [vmem:[%s1 + $0x40] sm:$0xff]
  %v35 = vld [vmem:[%s1 + $0x48] sm:$0xff]
  %v36 = vld [vmem:[%s1 + $0x50] sm:$0xff]
  %v37 = vld [vmem:[%s1 + $0x58] sm:$0xff]
  %v38 = vld [vmem:[%s1 + $0x60] sm:$0xff]
  %v39 = vld [vmem:[%s1 + $0x68] sm:$0xff]
  %v40 = vld [vmem:[%s1 + $0x70] sm:$0xff]
  %v41 = vld [vmem:[%s1 + $0x78] sm:$0xff]
  %v42 = vld [vmem:[%s3] sm:$0x1]
  %v44 = vlaneseq
  %v45 = vshrl.u32 %v44, 7
  %v46 = vsub.s32 0, %v45
  %v47 = vrot.slane %v42, %v46
  %49 = vmatprep.subr.mxu0 0.0
  %50 = vmatpush1.msra.mxu0 %v26
  %51 = vmatprep.subr.mxu0 0.0
  %52 = vmatpush1.msra.mxu0 %v27
  %53 = vmatprep.subr.mxu0 0.0
  %54 = vmatpush1.msra.mxu0 %v28
  %55 = vmatprep.subr.mxu0 0.0
  %56 = vmatpush1.msra.mxu0 %v29
  %57 = vmatprep.subr.mxu0 0.0
  %58 = vmatpush1.msra.mxu0 %v30
  %59 = vmatprep.subr.mxu0 0.0
  %60 = vmatpush1.msra.mxu0 %v31
  %61 = vmatprep.subr.mxu0 0.0
  %62 = vmatpush1.msra.mxu0 %v32
  %63 = vmatprep.subr.mxu0 0.0
  %64 = vmatpush1.msra.mxu0 %v33
  %65 = vmatprep.subr.mxu0 0.0
  %66 = vmatpush1.msra.mxu0 %v34
  %67 = vmatprep.subr.mxu0 0.0
  %68 = vmatpush1.msra.mxu0 %v35
  %69 = vmatprep.subr.mxu0 0.0
  %70 = vmatpush1.msra.mxu0 %v36
  %71 = vmatprep.subr.mxu0 0.0
  %72 = vmatpush1.msra.mxu0 %v37
  %73 = vmatprep.subr.mxu0 0.0
  %74 = vmatpush1.msra.mxu0 %v38
  %75 = vmatprep.subr.mxu0 0.0
  %76 = vmatpush1.msra.mxu0 %v39
  %77 = vmatprep.subr.mxu0 0.0
  %78 = vmatpush1.msra.mxu0 %v40
  %79 = vmatprep.subr.mxu0 0.0
  %80 = vmatpush1.msra.mxu0 %v41
  %81 = vmatprep.subr.mxu0 0.0
  %82 = vmatpush1.msra.mxu0 0.0
  %83 = vmatprep.subr.mxu0 0.0
  %84 = vmatpush1.msra.mxu0 0.0
  %85 = vmatprep.subr.mxu0 0.0
  %86 = vmatpush1.msra.mxu0 0.0
  %87 = vmatprep.subr.mxu0 0.0
  %88 = vmatpush1.msra.mxu0 0.0
  %89 = vmatprep.subr.mxu0 0.0
  %90 = vmatpush1.msra.mxu0 0.0
  %91 = vmatprep.subr.mxu0 0.0
  %92 = vmatpush1.msra.mxu0 0.0
  %93 = vmatprep.subr.mxu0 0.0
  %94 = vmatpush1.msra.mxu0 0.0
  %95 = vmatprep.subr.mxu0 0.0
  %96 = vmatpush1.msra.mxu0 0.0
  %97 = vmatprep.subr.mxu0 0.0
  %98 = vmatpush1.msra.mxu0 0.0
  %99 = vmatprep.subr.mxu0 0.0
  %100 = vmatpush1.msra.mxu0 0.0
  %101 = vmatprep.subr.mxu0 0.0
  %102 = vmatpush1.msra.mxu0 0.0
  %103 = vmatprep.subr.mxu0 0.0
  %104 = vmatpush1.msra.mxu0 0.0
  %105 = vmatprep.subr.mxu0 0.0
  %106 = vmatpush1.msra.mxu0 0.0
  %107 = vmatprep.subr.mxu0 0.0
  %108 = vmatpush1.msra.mxu0 0.0
  %109 = vmatprep.subr.mxu0 0.0
  %110 = vmatpush1.msra.mxu0 0.0
  %111 = vmatprep.subr.mxu0 0.0
  %112 = vmatpush1.msra.mxu0 0.0
  %113 = vmatprep.mubr.f32.mxu0 0.0
  %114 = vmatmul.mubr.f32.gmra.mrb[0].mxu0 %v25
  %v115 = vpop.f32.mrb[0].mxu0
  %v116 = vadd.f32 %v47, %v115
  %v117 = vpop.f32.mrb[0].mxu0
  %118 = vdwg.mxu0
  %v120 = vcombine.high %v116, %v116
  %v122 = vunpack.c.l.s4 1983009808
  %v123 = vunpack.c.0.s8 %v122
  %v124 = vlaneseq
  %v125 = vshrl.u32 %v124, 7
  %v126 = vsub.s32 %v123, %v125
  %v127 = vrot.slane %v116, %v126
  %v129 = vunpack.c.l.s4 1983009808
  %v130 = vunpack.c.0.s8 %v129
  %v131 = vlaneseq
  %v132 = vshrl.u32 %v131, 7
  %v133 = vsub.s32 %v130, %v132
  %v134 = vrot.slane %v120, %v133
  %v135 = vcombine.high %v127, %v127
  %v136 = vcombine.high %v134, %v134
  %141 = vst [vmem:[#allocation2] sm:$0x3] %v127
  %142 = vst [vmem:[#allocation2 + $0x2] sm:$0x3] %v135
  %143 = vst [vmem:[#allocation2 + $0x4] sm:$0x3] %v134
  %144 = vst [vmem:[#allocation2 + $0x6] sm:$0x3] %v136
  %v145 = vld [vmem:[%s2] sm:$0xff]
  %v146 = vld [vmem:[%s2 + $0x8] sm:$0xff]
  %v147 = vld [vmem:[%s2 + $0x10] sm:$0xff]
  %v148 = vld [vmem:[%s2 + $0x18] sm:$0xff]
  %v149 = vld [vmem:[#allocation2] sm:$0x3]
  %vm150 = vcmask 261120
  %v152 = vsel %vm150, 0.0, 0
  %154 = vmatprep.subr.mxu0 0.0
  %155 = vmatpush1.msra.mxu0 %v145
  %156 = vmatprep.subr.mxu0 0.0
  %157 = vmatpush1.msra.mxu0 %v146
  %158 = vmatprep.subr.mxu0 0.0
  %159 = vmatpush1.msra.mxu0 %v147
  %160 = vmatprep.subr.mxu0 0.0
  %161 = vmatpush1.msra.mxu0 %v148
  %162 = vmatprep.subr.mxu0 0.0
  %163 = vmatpush1.msra.mxu0 0.0
  %164 = vmatprep.subr.mxu0 0.0
  %165 = vmatpush1.msra.mxu0 0.0
  %166 = vmatprep.subr.mxu0 0.0
  %167 = vmatpush1.msra.mxu0 0.0
  %168 = vmatprep.subr.mxu0 0.0
  %169 = vmatpush1.msra.mxu0 0.0
  %170 = vmatprep.subr.mxu0 0.0
  %171 = vmatpush1.msra.mxu0 0.0
  %172 = vmatprep.subr.mxu0 0.0
  %173 = vmatpush1.msra.mxu0 0.0
  %174 = vmatprep.subr.mxu0 0.0
  %175 = vmatpush1.msra.mxu0 0.0
  %176 = vmatprep.subr.mxu0 0.0
  %177 = vmatpush1.msra.mxu0 0.0
  %178 = vmatprep.subr.mxu0 0.0
  %179 = vmatpush1.msra.mxu0 0.0
  %180 = vmatprep.subr.mxu0 0.0
  %181 = vmatpush1.msra.mxu0 0.0
  %182 = vmatprep.subr.mxu0 0.0
  %183 = vmatpush1.msra.mxu0 0.0
  %184 = vmatprep.subr.mxu0 0.0
  %185 = vmatpush1.msra.mxu0 0.0
  %186 = vmatprep.subr.mxu0 0.0
  %187 = vmatpush1.msra.mxu0 0.0
  %188 = vmatprep.subr.mxu0 0.0
  %189 = vmatpush1.msra.mxu0 0.0
  %190 = vmatprep.subr.mxu0 0.0
  %191 = vmatpush1.msra.mxu0 0.0
  %192 = vmatprep.subr.mxu0 0.0
  %193 = vmatpush1.msra.mxu0 0.0
  %194 = vmatprep.subr.mxu0 0.0
  %195 = vmatpush1.msra.mxu0 0.0
  %196 = vmatprep.subr.mxu0 0.0
  %197 = vmatpush1.msra.mxu0 0.0
  %198 = vmatprep.subr.mxu0 0.0
  %199 = vmatpush1.msra.mxu0 0.0
  %200 = vmatprep.subr.mxu0 0.0
  %201 = vmatpush1.msra.mxu0 0.0
  %202 = vmatprep.subr.mxu0 0.0
  %203 = vmatpush1.msra.mxu0 0.0
  %204 = vmatprep.subr.mxu0 0.0
  %205 = vmatpush1.msra.mxu0 0.0
  %206 = vmatprep.subr.mxu0 0.0
  %207 = vmatpush1.msra.mxu0 0.0
  %208 = vmatprep.subr.mxu0 0.0
  %209 = vmatpush1.msra.mxu0 0.0
  %210 = vmatprep.subr.mxu0 0.0
  %211 = vmatpush1.msra.mxu0 0.0
  %212 = vmatprep.subr.mxu0 0.0
  %213 = vmatpush1.msra.mxu0 0.0
  %214 = vmatprep.subr.mxu0 0.0
  %215 = vmatpush1.msra.mxu0 0.0
  %216 = vmatprep.subr.mxu0 0.0
  %217 = vmatpush1.msra.mxu0 0.0
  %218 = vmatprep.mubr.f32.mxu0 0.0
  %219 = vmatmul.mubr.f32.gmra.mrb[0].mxu0 %v152
  %v220 = vpop.f32.mrb[0].mxu0
  %v221 = vadd.f32 0.0, %v220
  %v222 = vpop.f32.mrb[0].mxu0
  %223 = vdwg.mxu0
  %v224 = vadd.f32 %v149, %v221
  %v225 = vxor.u32 %v224, 2147483648
  %v226 = vmul.f32 %v225, 1.442695
  %v227 = vpow.pop %v226
  %v228 = vadd.f32 %v227, 1.0
  %v229 = vrcp.pop %v228
  %v230 = vmul.f32 1.0, %v229
  %v231 = vtanh.pop %v224
  %v232 = vmul.f32 %v230, 0.0
  %234 = vrot.lane.b32.xlu0 %v231, 64
  %v235 = vpop.permute.xlu0 %234
  %v237 = vmul.f32 %v230, %v235
  %239 = vrot.lane.b32.xlu0 %v237, 32
  %v240 = vpop.permute.xlu0 %239
  %v242 = vadd.f32 %v232, %v240
  %v243 = vtanh.pop %v242
  %245 = vrot.lane.b32.xlu0 %v243, 64
  %v246 = vpop.permute.xlu0 %245
  %v248 = vmul.f32 %v230, %v246
  %s249 = scalar_lea.vmem [#allocation2], 2
  %v250 = vld [vmem:[%s249] sm:$0x3]
  %252 = vrot.lane.b32.xlu0 %v248, 32
  %v253 = vpop.permute.xlu0 %252
  %v254 = vsel %vm150, %v253, 0
  %256 = vmatprep.subr.mxu0 0.0
  %257 = vmatpush1.msra.mxu0 %v145
  %258 = vmatprep.subr.mxu0 0.0
  %259 = vmatpush1.msra.mxu0 %v146
  %260 = vmatprep.subr.mxu0 0.0
  %261 = vmatpush1.msra.mxu0 %v147
  %262 = vmatprep.subr.mxu0 0.0
  %263 = vmatpush1.msra.mxu0 %v148
  %264 = vmatprep.subr.mxu0 0.0
  %265 = vmatpush1.msra.mxu0 0.0
  %266 = vmatprep.subr.mxu0 0.0
  %267 = vmatpush1.msra.mxu0 0.0
  %268 = vmatprep.subr.mxu0 0.0
  %269 = vmatpush1.msra.mxu0 0.0
  %270 = vmatprep.subr.mxu0 0.0
  %271 = vmatpush1.msra.mxu0 0.0
  %272 = vmatprep.subr.mxu0 0.0
  %273 = vmatpush1.msra.mxu0 0.0
  %274 = vmatprep.subr.mxu0 0.0
  %275 = vmatpush1.msra.mxu0 0.0
  %276 = vmatprep.subr.mxu0 0.0
  %277 = vmatpush1.msra.mxu0 0.0
  %278 = vmatprep.subr.mxu0 0.0
  %279 = vmatpush1.msra.mxu0 0.0
  %280 = vmatprep.subr.mxu0 0.0
  %281 = vmatpush1.msra.mxu0 0.0
  %282 = vmatprep.subr.mxu0 0.0
  %283 = vmatpush1.msra.mxu0 0.0
  %284 = vmatprep.subr.mxu0 0.0
  %285 = vmatpush1.msra.mxu0 0.0
  %286 = vmatprep.subr.mxu0 0.0
  %287 = vmatpush1.msra.mxu0 0.0
  %288 = vmatprep.subr.mxu0 0.0
  %289 = vmatpush1.msra.mxu0 0.0
  %290 = vmatprep.subr.mxu0 0.0
  %291 = vmatpush1.msra.mxu0 0.0
  %292 = vmatprep.subr.mxu0 0.0
  %293 = vmatpush1.msra.mxu0 0.0
  %294 = vmatprep.subr.mxu0 0.0
  %295 = vmatpush1.msra.mxu0 0.0
  %296 = vmatprep.subr.mxu0 0.0
  %297 = vmatpush1.msra.mxu0 0.0
  %298 = vmatprep.subr.mxu0 0.0
  %299 = vmatpush1.msra.mxu0 0.0
  %300 = vmatprep.subr.mxu0 0.0
  %301 = vmatpush1.msra.mxu0 0.0
  %302 = vmatprep.subr.mxu0 0.0
  %303 = vmatpush1.msra.mxu0 0.0
  %304 = vmatprep.subr.mxu0 0.0
  %305 = vmatpush1.msra.mxu0 0.0
  %306 = vmatprep.subr.mxu0 0.0
  %307 = vmatpush1.msra.mxu0 0.0
  %308 = vmatprep.subr.mxu0 0.0
  %309 = vmatpush1.msra.mxu0 0.0
  %310 = vmatprep.subr.mxu0 0.0
  %311 = vmatpush1.msra.mxu0 0.0
  %312 = vmatprep.subr.mxu0 0.0
  %313 = vmatpush1.msra.mxu0 0.0
  %314 = vmatprep.subr.mxu0 0.0
  %315 = vmatpush1.msra.mxu0 0.0
  %316 = vmatprep.subr.mxu0 0.0
  %317 = vmatpush1.msra.mxu0 0.0
  %318 = vmatprep.subr.mxu0 0.0
  %319 = vmatpush1.msra.mxu0 0.0
  %320 = vmatprep.mubr.f32.mxu0 0.0
  %321 = vmatmul.mubr.f32.gmra.mrb[0].mxu0 %v254
  %v322 = vpop.f32.mrb[0].mxu0
  %v323 = vadd.f32 0.0, %v322
  %v324 = vpop.f32.mrb[0].mxu0
  %325 = vdwg.mxu0
  %v326 = vadd.f32 %v250, %v323
  %v327 = vxor.u32 %v326, 2147483648
  %v328 = vmul.f32 %v327, 1.442695
  %v329 = vpow.pop %v328
  %v330 = vadd.f32 %v329, 1.0
  %v331 = vrcp.pop %v330
  %v332 = vmul.f32 1.0, %v331
  %v333 = vtanh.pop %v326
  %v334 = vmul.f32 %v332, %v242
  %336 = vrot.lane.b32.xlu0 %v333, 64
  %v337 = vpop.permute.xlu0 %336
  %v339 = vmul.f32 %v332, %v337
  %341 = vrot.lane.b32.xlu0 %v339, 32
  %v342 = vpop.permute.xlu0 %341
  %v344 = vadd.f32 %v334, %v342
  %v345 = vtanh.pop %v344
  %347 = vrot.lane.b32.xlu0 %v345, 64
  %v348 = vpop.permute.xlu0 %347
  %v350 = vmul.f32 %v332, %v348
  %s351 = scalar_lea.vmem [#allocation2], 4
  %v352 = vld [vmem:[%s351] sm:$0x3]
  %354 = vrot.lane.b32.xlu0 %v350, 32
  %v355 = vpop.permute.xlu0 %354
  %v356 = vsel %vm150, %v355, 0
  %358 = vmatprep.subr.mxu0 0.0
  %359 = vmatpush1.msra.mxu0 %v145
  %360 = vmatprep.subr.mxu0 0.0
  %361 = vmatpush1.msra.mxu0 %v146
  %362 = vmatprep.subr.mxu0 0.0
  %363 = vmatpush1.msra.mxu0 %v147
  %364 = vmatprep.subr.mxu0 0.0
  %365 = vmatpush1.msra.mxu0 %v148
  %366 = vmatprep.subr.mxu0 0.0
  %367 = vmatpush1.msra.mxu0 0.0
  %368 = vmatprep.subr.mxu0 0.0
  %369 = vmatpush1.msra.mxu0 0.0
  %370 = vmatprep.subr.mxu0 0.0
  %371 = vmatpush1.msra.mxu0 0.0
  %372 = vmatprep.subr.mxu0 0.0
  %373 = vmatpush1.msra.mxu0 0.0
  %374 = vmatprep.subr.mxu0 0.0
  %375 = vmatpush1.msra.mxu0 0.0
  %376 = vmatprep.subr.mxu0 0.0
  %377 = vmatpush1.msra.mxu0 0.0
  %378 = vmatprep.subr.mxu0 0.0
  %379 = vmatpush1.msra.mxu0 0.0
  %380 = vmatprep.subr.mxu0 0.0
  %381 = vmatpush1.msra.mxu0 0.0
  %382 = vmatprep.subr.mxu0 0.0
  %383 = vmatpush1.msra.mxu0 0.0
  %384 = vmatprep.subr.mxu0 0.0
  %385 = vmatpush1.msra.mxu0 0.0
  %386 = vmatprep.subr.mxu0 0.0
  %387 = vmatpush1.msra.mxu0 0.0
  %388 = vmatprep.subr.mxu0 0.0
  %389 = vmatpush1.msra.mxu0 0.0
  %390 = vmatprep.subr.mxu0 0.0
  %391 = vmatpush1.msra.mxu0 0.0
  %392 = vmatprep.subr.mxu0 0.0
  %393 = vmatpush1.msra.mxu0 0.0
  %394 = vmatprep.subr.mxu0 0.0
  %395 = vmatpush1.msra.mxu0 0.0
  %396 = vmatprep.subr.mxu0 0.0
  %397 = vmatpush1.msra.mxu0 0.0
  %398 = vmatprep.subr.mxu0 0.0
  %399 = vmatpush1.msra.mxu0 0.0
  %400 = vmatprep.subr.mxu0 0.0
  %401 = vmatpush1.msra.mxu0 0.0
  %402 = vmatprep.subr.mxu0 0.0
  %403 = vmatpush1.msra.mxu0 0.0
  %404 = vmatprep.subr.mxu0 0.0
  %405 = vmatpush1.msra.mxu0 0.0
  %406 = vmatprep.subr.mxu0 0.0
  %407 = vmatpush1.msra.mxu0 0.0
  %408 = vmatprep.subr.mxu0 0.0
  %409 = vmatpush1.msra.mxu0 0.0
  %410 = vmatprep.subr.mxu0 0.0
  %411 = vmatpush1.msra.mxu0 0.0
  %412 = vmatprep.subr.mxu0 0.0
  %413 = vmatpush1.msra.mxu0 0.0
  %414 = vmatprep.subr.mxu0 0.0
  %415 = vmatpush1.msra.mxu0 0.0
  %416 = vmatprep.subr.mxu0 0.0
  %417 = vmatpush1.msra.mxu0 0.0
  %418 = vmatprep.subr.mxu0 0.0
  %419 = vmatpush1.msra.mxu0 0.0
  %420 = vmatprep.subr.mxu0 0.0
  %421 = vmatpush1.msra.mxu0 0.0
  %422 = vmatprep.mubr.f32.mxu0 0.0
  %423 = vmatmul.mubr.f32.gmra.mrb[0].mxu0 %v356
  %v424 = vpop.f32.mrb[0].mxu0
  %v425 = vadd.f32 0.0, %v424
  %v426 = vpop.f32.mrb[0].mxu0
  %427 = vdwg.mxu0
  %v428 = vadd.f32 %v352, %v425
  %v429 = vxor.u32 %v428, 2147483648
  %v430 = vmul.f32 %v429, 1.442695
  %v431 = vpow.pop %v430
  %v432 = vadd.f32 %v431, 1.0
  %v433 = vrcp.pop %v432
  %v434 = vmul.f32 1.0, %v433
  %v435 = vtanh.pop %v428
  %v436 = vmul.f32 %v434, %v344
  %438 = vrot.lane.b32.xlu0 %v435, 64
  %v439 = vpop.permute.xlu0 %438
  %v441 = vmul.f32 %v434, %v439
  %443 = vrot.lane.b32.xlu0 %v441, 32
  %v444 = vpop.permute.xlu0 %443
  %v446 = vadd.f32 %v436, %v444
  %v447 = vtanh.pop %v446
  %449 = vrot.lane.b32.xlu0 %v447, 64
  %v450 = vpop.permute.xlu0 %449
  %v452 = vmul.f32 %v434, %v450
  %s453 = scalar_lea.vmem [#allocation2], 6
  %v454 = vld [vmem:[%s453] sm:$0x3]
  %456 = vrot.lane.b32.xlu0 %v452, 32
  %v457 = vpop.permute.xlu0 %456
  %v458 = vsel %vm150, %v457, 0
  %460 = vmatprep.subr.mxu0 0.0
  %461 = vmatpush1.msra.mxu0 %v145
  %462 = vmatprep.subr.mxu0 0.0
  %463 = vmatpush1.msra.mxu0 %v146
  %464 = vmatprep.subr.mxu0 0.0
  %465 = vmatpush1.msra.mxu0 %v147
  %466 = vmatprep.subr.mxu0 0.0
  %467 = vmatpush1.msra.mxu0 %v148
  %468 = vmatprep.subr.mxu0 0.0
  %469 = vmatpush1.msra.mxu0 0.0
  %470 = vmatprep.subr.mxu0 0.0
  %471 = vmatpush1.msra.mxu0 0.0
  %472 = vmatprep.subr.mxu0 0.0
  %473 = vmatpush1.msra.mxu0 0.0
  %474 = vmatprep.subr.mxu0 0.0
  %475 = vmatpush1.msra.mxu0 0.0
  %476 = vmatprep.subr.mxu0 0.0
  %477 = vmatpush1.msra.mxu0 0.0
  %478 = vmatprep.subr.mxu0 0.0
  %479 = vmatpush1.msra.mxu0 0.0
  %480 = vmatprep.subr.mxu0 0.0
  %481 = vmatpush1.msra.mxu0 0.0
  %482 = vmatprep.subr.mxu0 0.0
  %483 = vmatpush1.msra.mxu0 0.0
  %484 = vmatprep.subr.mxu0 0.0
  %485 = vmatpush1.msra.mxu0 0.0
  %486 = vmatprep.subr.mxu0 0.0
  %487 = vmatpush1.msra.mxu0 0.0
  %488 = vmatprep.subr.mxu0 0.0
  %489 = vmatpush1.msra.mxu0 0.0
  %490 = vmatprep.subr.mxu0 0.0
  %491 = vmatpush1.msra.mxu0 0.0
  %492 = vmatprep.subr.mxu0 0.0
  %493 = vmatpush1.msra.mxu0 0.0
  %494 = vmatprep.subr.mxu0 0.0
  %495 = vmatpush1.msra.mxu0 0.0
  %496 = vmatprep.subr.mxu0 0.0
  %497 = vmatpush1.msra.mxu0 0.0
  %498 = vmatprep.subr.mxu0 0.0
  %499 = vmatpush1.msra.mxu0 0.0
  %500 = vmatprep.subr.mxu0 0.0
  %501 = vmatpush1.msra.mxu0 0.0
  %502 = vmatprep.subr.mxu0 0.0
  %503 = vmatpush1.msra.mxu0 0.0
  %504 = vmatprep.subr.mxu0 0.0
  %505 = vmatpush1.msra.mxu0 0.0
  %506 = vmatprep.subr.mxu0 0.0
  %507 = vmatpush1.msra.mxu0 0.0
  %508 = vmatprep.subr.mxu0 0.0
  %509 = vmatpush1.msra.mxu0 0.0
  %510 = vmatprep.subr.mxu0 0.0
  %511 = vmatpush1.msra.mxu0 0.0
  %512 = vmatprep.subr.mxu0 0.0
  %513 = vmatpush1.msra.mxu0 0.0
  %514 = vmatprep.subr.mxu0 0.0
  %515 = vmatpush1.msra.mxu0 0.0
  %516 = vmatprep.subr.mxu0 0.0
  %517 = vmatpush1.msra.mxu0 0.0
  %518 = vmatprep.subr.mxu0 0.0
  %519 = vmatpush1.msra.mxu0 0.0
  %520 = vmatprep.subr.mxu0 0.0
  %521 = vmatpush1.msra.mxu0 0.0
  %522 = vmatprep.subr.mxu0 0.0
  %523 = vmatpush1.msra.mxu0 0.0
  %524 = vmatprep.mubr.f32.mxu0 0.0
  %525 = vmatmul.mubr.f32.gmra.mrb[0].mxu0 %v458
  %v526 = vpop.f32.mrb[0].mxu0
  %v527 = vadd.f32 0.0, %v526
  %v528 = vpop.f32.mrb[0].mxu0
  %529 = vdwg.mxu0
  %v530 = vadd.f32 %v454, %v527
  %v531 = vxor.u32 %v530, 2147483648
  %v532 = vmul.f32 %v531, 1.442695
  %v533 = vpow.pop %v532
  %v534 = vadd.f32 %v533, 1.0
  %v535 = vrcp.pop %v534
  %v536 = vmul.f32 1.0, %v535
  %v537 = vtanh.pop %v530
  %v538 = vmul.f32 %v536, %v446
  %540 = vrot.lane.b32.xlu0 %v537, 64
  %v541 = vpop.permute.xlu0 %540
  %v543 = vmul.f32 %v536, %v541
  %545 = vrot.lane.b32.xlu0 %v543, 32
  %v546 = vpop.permute.xlu0 %545
  %v548 = vadd.f32 %v538, %v546
  %v549 = vtanh.pop %v548
  %551 = vrot.lane.b32.xlu0 %v549, 64
  %v552 = vpop.permute.xlu0 %551
  %v554 = vmul.f32 %v536, %v552
  %v555 = vld [vmem:[%s4] sm:$0xff]
  %v556 = vld [vmem:[%s4 + $0x8] sm:$0xff]
  %v557 = vld [vmem:[%s4 + $0x10] sm:$0xff]
  %v558 = vld [vmem:[%s4 + $0x18] sm:$0xff]
  %v559 = vld [vmem:[#allocation3] sm:$0x1]
  %v561 = vlaneseq
  %v562 = vshrl.u32 %v561, 7
  %v563 = vsub.s32 0, %v562
  %v564 = vrot.slane %v559, %v563
  %567 = vrot.lane.b32.xlu0 %v554, 32
  %v568 = vpop.permute.xlu0 %567
  %v569 = vsel %vm150, %v568, 0
  %571 = vmatprep.subr.mxu0 0.0
  %572 = vmatpush1.msra.mxu0 %v555
  %573 = vmatprep.subr.mxu0 0.0
  %574 = vmatpush1.msra.mxu0 %v556
  %575 = vmatprep.subr.mxu0 0.0
  %576 = vmatpush1.msra.mxu0 %v557
  %577 = vmatprep.subr.mxu0 0.0
  %578 = vmatpush1.msra.mxu0 %v558
  %579 = vmatprep.subr.mxu0 0.0
  %580 = vmatpush1.msra.mxu0 0.0
  %581 = vmatprep.subr.mxu0 0.0
  %582 = vmatpush1.msra.mxu0 0.0
  %583 = vmatprep.subr.mxu0 0.0
  %584 = vmatpush1.msra.mxu0 0.0
  %585 = vmatprep.subr.mxu0 0.0
  %586 = vmatpush1.msra.mxu0 0.0
  %587 = vmatprep.subr.mxu0 0.0
  %588 = vmatpush1.msra.mxu0 0.0
  %589 = vmatprep.subr.mxu0 0.0
  %590 = vmatpush1.msra.mxu0 0.0
  %591 = vmatprep.subr.mxu0 0.0
  %592 = vmatpush1.msra.mxu0 0.0
  %593 = vmatprep.subr.mxu0 0.0
  %594 = vmatpush1.msra.mxu0 0.0
  %595 = vmatprep.subr.mxu0 0.0
  %596 = vmatpush1.msra.mxu0 0.0
  %597 = vmatprep.subr.mxu0 0.0
  %598 = vmatpush1.msra.mxu0 0.0
  %599 = vmatprep.subr.mxu0 0.0
  %600 = vmatpush1.msra.mxu0 0.0
  %601 = vmatprep.subr.mxu0 0.0
  %602 = vmatpush1.msra.mxu0 0.0
  %603 = vmatprep.subr.mxu0 0.0
  %604 = vmatpush1.msra.mxu0 0.0
  %605 = vmatprep.subr.mxu0 0.0
  %606 = vmatpush1.msra.mxu0 0.0
  %607 = vmatprep.subr.mxu0 0.0
  %608 = vmatpush1.msra.mxu0 0.0
  %609 = vmatprep.subr.mxu0 0.0
  %610 = vmatpush1.msra.mxu0 0.0
  %611 = vmatprep.subr.mxu0 0.0
  %612 = vmatpush1.msra.mxu0 0.0
  %613 = vmatprep.subr.mxu0 0.0
  %614 = vmatpush1.msra.mxu0 0.0
  %615 = vmatprep.subr.mxu0 0.0
  %616 = vmatpush1.msra.mxu0 0.0
  %617 = vmatprep.subr.mxu0 0.0
  %618 = vmatpush1.msra.mxu0 0.0
  %619 = vmatprep.subr.mxu0 0.0
  %620 = vmatpush1.msra.mxu0 0.0
  %621 = vmatprep.subr.mxu0 0.0
  %622 = vmatpush1.msra.mxu0 0.0
  %623 = vmatprep.subr.mxu0 0.0
  %624 = vmatpush1.msra.mxu0 0.0
  %625 = vmatprep.subr.mxu0 0.0
  %626 = vmatpush1.msra.mxu0 0.0
  %627 = vmatprep.subr.mxu0 0.0
  %628 = vmatpush1.msra.mxu0 0.0
  %629 = vmatprep.subr.mxu0 0.0
  %630 = vmatpush1.msra.mxu0 0.0
  %631 = vmatprep.subr.mxu0 0.0
  %632 = vmatpush1.msra.mxu0 0.0
  %633 = vmatprep.subr.mxu0 0.0
  %634 = vmatpush1.msra.mxu0 0.0
  %635 = vmatprep.mubr.f32.mxu0 0.0
  %636 = vmatmul.mubr.f32.gmra.mrb[0].mxu0 %v569
  %v637 = vpop.f32.mrb[0].mxu0
  %v638 = vadd.f32 %v564, %v637
  %v639 = vpop.f32.mrb[0].mxu0
  %640 = vdwg.mxu0
  %v641 = vxor.u32 %v638, 2147483648
  %v642 = vmul.f32 %v641, 1.442695
  %v643 = vpow.pop %v642
  %v644 = vadd.f32 %v643, 1.0
  %v645 = vrcp.pop %v644
  %v646 = vmul.f32 1.0, %v645
  %vm647 = vcmask 1024
  %648 = vst.msk [vmem:[%s6] sm:$0x3] %vm647, %v646
  // Predicated region
  $region26: #{bert_regressor_forward.3} parent=0 // pred_check
    _
  $region27: #{bert_regressor_forward.3} parent=0 // pred_check_branch
    %650 = sbr.rel (0) target = $region29
  $region28: #{bert_regressor_forward.3} parent=0 // pred_region
    _
  $region29: #{bert_regressor_forward.3} parent=0 // pred_fallthru
    _
  // Predicated region
  $region30: #{bert_regressor_forward.3} parent=0 // pred_check
    _
  $region31: #{bert_regressor_forward.3} parent=0 // pred_check_branch
    %652 = sbr.rel (0) target = $region33
  $region32: #{bert_regressor_forward.3} parent=0 // pred_region
    _
  $region33: #{bert_regressor_forward.3} parent=0 // pred_fallthru
    _

// kernel: bert_regressor_forward.2
$region0: #{bert_regressor_forward.2}
  #allocation0 [shape = 'u32[]', space=smem, size = 0x4, offset = 0x4, fixed_abs, tag = 'smem constant byte address 0x4 - core index']
  #allocation1 [shape = 'u32[144,128]{1,0:T(1,128)}', space=vmem, size = 0x12000, scoped, tag = 'internal scratch']
  #allocation2 [shape = 'f32[4,16,128]{2,1,0:T(8,128)}', space=vmem, size = 0x8000, scoped, tag = 'scratch operand']
  %s0 = inlined_call_operand.vmem [shape: bf16[8,16,128], index: 0, kind: input, shape index: {}]
  %s1 = inlined_call_operand.vmem [shape: f32[8,1,16], index: 1, kind: input, shape index: {}]
  %s2 = inlined_call_operand.vmem [shape: f32[16,128], index: 2, kind: input, shape index: {}]
  %s3 = inlined_call_operand.hbm [shape: f32[2,128], index: 3, kind: input, shape index: {}]
  %s4 = inlined_call_operand.vmem [shape: bf16[2,128,384], index: 4, kind: input, shape index: {}]
  %s5 = inlined_call_operand.vmem [shape: f32[2,1,384], index: 5, kind: input, shape index: {}]
  %s6 = inlined_call_operand.hbm [shape: bf16[2,128,128], index: 6, kind: input, shape index: {}]
  %s7 = inlined_call_operand.vmem [shape: bf16[2,128,256], index: 7, kind: input, shape index: {}]
  %s8 = inlined_call_operand.hbm [shape: f32[2,1,256], index: 8, kind: input, shape index: {}]
  %s9 = inlined_call_operand.hbm [shape: bf16[2,256,128], index: 9, kind: input, shape index: {}]
  %s10 = inlined_call_operand.vmem [shape: f32[2,8,128], index: 10, kind: input, shape index: {}]
  %s11 = inlined_call_operand.vmem [shape: f32[8,1,128], index: 11, kind: output, shape index: {}]
  %s12 = sld [smem:[#allocation0]]
  $region101: #{bert_regressor_forward.2} parent=0
    _
  %s14 = ssub.s32 1, %s12
  %s15 = scalar_select 0, %s14, %s12
  $region1: #{bert_regressor_forward.2} parent=0
    #allocation3 [shape = 'u8[1024]{0}', space=vmem, size = 0x400, scoped, tag = 'input window, operand 3, single buffered']
    #allocation4 [shape = 's32[2]{0}', space=sflag, size = 0x8, scoped, tag = 'scoped memory for bert_regressor_forward.2']
    #allocation5 [shape = 'u8[65536]{0}', space=vmem, size = 0x10000, scoped, tag = 'input window, operand 6, single buffered']
    #allocation6 [shape = 's32[1]{0}', space=sflag, size = 0x4, scoped, tag = 'scoped memory for bert_regressor_forward.2']
    #allocation7 [shape = 'u8[2048]{0}', space=vmem, size = 0x800, scoped, tag = 'input window, operand 8, single buffered']
    #allocation8 [shape = 'u8[131072]{0}', space=vmem, size = 0x20000, scoped, tag = 'input window, operand 9, single buffered']
    #allocation9 [shape = 's32[1]{0}', space=sflag, size = 0x4, scoped, tag = 'scoped memory for bert_regressor_forward.2']
    %16 = vsyncpa [#allocation4], 0
    %17 = vsyncpa [#allocation6], 0
    %18 = vsyncpa [#allocation9], 0
    loop: start=0, step=1, limit=6
    $region2: #{bert_regressor_forward.2} parent=1 // loop_pre_header
      _
    $region3: #{bert_regressor_forward.2} parent=1 // loop_header
      %s20 = sphi 0, %s24
      %p21 = scmp.ge.s32.totalorder %s20, 6
      %s27 = sphi 0, %s39
      %s28 = sphi 0, %s35
      %s29 = sphi 0, %s27
      %s30 = sphi 0, %s28
      %s31 = sphi 0, %s29
      %s32 = sphi 0, %s30
      %s42 = sphi 0, %s44
      %s45 = sphi 0, %s42
      %s46 = sphi 0, %s45
      %s62 = sphi 0, %s46
      %s68 = sphi 0, %s70
      %s71 = sphi 0, %s68
      %s72 = sphi 0, %s71
      %s88 = sphi 0, %s72
      %s92 = sphi 0, %s92
      %s94 = sphi 0, %s92
      %s95 = sphi 0, %s94
      %s109 = sphi 0, %s95
      %s113 = sphi 0, %s113
      %s115 = sphi 0, %s113
      %s116 = sphi 0, %s115
      %s130 = sphi 0, %s116
      %s134 = sphi 0, %s134
      %s136 = sphi 0, %s134
      %s137 = sphi 0, %s136
      %s151 = sphi 0, %s137
      %s155 = sphi 0, %s155
      %s157 = sphi 0, %s155
      %s158 = sphi 0, %s157
      %s172 = sphi 0, %s158
      %s176 = sphi 0, %s176
      %s178 = sphi 0, %s176
      %s179 = sphi 0, %s178
      %s193 = sphi 0, %s179
      %s197 = sphi 0, %s197
      %s199 = sphi 0, %s197
      %s200 = sphi 0, %s199
      %s214 = sphi 0, %s200
      %s218 = sphi 0, %s218
      %s220 = sphi 0, %s218
      %s221 = sphi 0, %s220
      %s235 = sphi 0, %s221
      %s239 = sphi 0, %s239
      %s241 = sphi 0, %s239
      %s242 = sphi 0, %s241
      %s256 = sphi 0, %s242
      %s260 = sphi 0, %s260
      %s262 = sphi 0, %s260
      %s263 = sphi 0, %s262
      %s277 = sphi 0, %s263
      %s283 = sphi 0, %s285
      %s286 = sphi 0, %s283
      %s287 = sphi 0, %s286
      %s303 = sphi 0, %s287
    $region4: #{bert_regressor_forward.2} parent=1 // loop_header_branch
      %23 = sbr.rel (%p21) target = $region8
    $region5: #{bert_regressor_forward.2} parent=1 // loop_body
      %s25 = ssub.s32 %s20, 1
      %s26 = ssub.s32 %s20, 2
      %s33 = sadd.s32 1, %s28
      %p34 = scmp.ge.s32.totalorder %s33, 2
      %s35 = scalar_select %p34, 0, %s33
      %s36 = sadd.s32 1, %s27
      %s37 = scalar_select %p34, %s36, %s27
      %p38 = scmp.ge.s32.totalorder %s37, 2
      %s39 = scalar_select %p38, 0, %s37
      %s40 = ssub.s32 %s27, %s39
      %p41 = scmp.eq.s32.totalorder %s40, 0
      %s43 = sadd.s32 %s42, 1
      %s44 = scalar_select %p41, %s42, %s43
      %p47 = pneg %p41
      %p48 = scmp.eq.s32.totalorder %s20, 3
      %p49 = por %p47, %p48
      %p50 = scmp.ne.s32.totalorder %s42, %s45
      %p51 = scmp.eq.s32.totalorder %s20, 0
      %p52 = por %p50, %p51
      %p53 = scmp.ne.s32.totalorder %s42, %s45
      %p54 = scmp.eq.s32.totalorder %s25, 3
      %p55 = por %p53, %p54
      %p56 = scmp.ne.s32.totalorder %s45, %s46
      %p57 = scmp.eq.s32.totalorder %s25, 0
      %p58 = por %p56, %p57
      %p59 = scmp.ne.s32.totalorder %s45, %s46
      %p60 = scmp.eq.s32.totalorder %s26, 3
      %p61 = por %p59, %p60
      %p63 = scmp.ne.s32.totalorder %s46, %s62
      %p64 = scmp.eq.s32.totalorder %s26, 0
      %p65 = por %p63, %p64
      %s66 = ssub.s32 %s27, %s39
      %p67 = scmp.eq.s32.totalorder %s66, 0
      %s69 = sadd.s32 %s68, 1
      %s70 = scalar_select %p67, %s68, %s69
      %p73 = pneg %p67
      %p74 = scmp.eq.s32.totalorder %s20, 3
      %p75 = por %p73, %p74
      %p76 = scmp.ne.s32.totalorder %s68, %s71
      %p77 = scmp.eq.s32.totalorder %s20, 0
      %p78 = por %p76, %p77
      %p79 = scmp.ne.s32.totalorder %s68, %s71
      %p80 = scmp.eq.s32.totalorder %s25, 3
      %p81 = por %p79, %p80
      %p82 = scmp.ne.s32.totalorder %s71, %s72
      %p83 = scmp.eq.s32.totalorder %s25, 0
      %p84 = por %p82, %p83
      %p85 = scmp.ne.s32.totalorder %s71, %s72
      %p86 = scmp.eq.s32.totalorder %s26, 3
      %p87 = por %p85, %p86
      %p89 = scmp.ne.s32.totalorder %s72, %s88
      %p90 = scmp.eq.s32.totalorder %s26, 0
      %p91 = por %p89, %p90
      %s93 = sadd.s32 %s92, 1
      %p96 = scmp.eq.s32.totalorder %s20, 3
      %p97 = scmp.ne.s32.totalorder %s92, %s94
      %p98 = scmp.eq.s32.totalorder %s20, 0
      %p99 = por %p97, %p98
      %p100 = scmp.ne.s32.totalorder %s92, %s94
      %p101 = scmp.eq.s32.totalorder %s25, 3
      %p102 = por %p100, %p101
      %p103 = scmp.ne.s32.totalorder %s94, %s95
      %p104 = scmp.eq.s32.totalorder %s25, 0
      %p105 = por %p103, %p104
      %p106 = scmp.ne.s32.totalorder %s94, %s95
      %p107 = scmp.eq.s32.totalorder %s26, 3
      %p108 = por %p106, %p107
      %p110 = scmp.ne.s32.totalorder %s95, %s109
      %p111 = scmp.eq.s32.totalorder %s26, 0
      %p112 = por %p110, %p111
      %s114 = sadd.s32 %s113, 1
      %p117 = scmp.eq.s32.totalorder %s20, 3
      %p118 = scmp.ne.s32.totalorder %s113, %s115
      %p119 = scmp.eq.s32.totalorder %s20, 0
      %p120 = por %p118, %p119
      %p121 = scmp.ne.s32.totalorder %s113, %s115
      %p122 = scmp.eq.s32.totalorder %s25, 3
      %p123 = por %p121, %p122
      %p124 = scmp.ne.s32.totalorder %s115, %s116
      %p125 = scmp.eq.s32.totalorder %s25, 0
      %p126 = por %p124, %p125
      %p127 = scmp.ne.s32.totalorder %s115, %s116
      %p128 = scmp.eq.s32.totalorder %s26, 3
      %p129 = por %p127, %p128
      %p131 = scmp.ne.s32.totalorder %s116, %s130
      %p132 = scmp.eq.s32.totalorder %s26, 0
      %p133 = por %p131, %p132
      %s135 = sadd.s32 %s134, 1
      %p138 = scmp.eq.s32.totalorder %s20, 3
      %p139 = scmp.ne.s32.totalorder %s134, %s136
      %p140 = scmp.eq.s32.totalorder %s20, 0
      %p141 = por %p139, %p140
      %p142 = scmp.ne.s32.totalorder %s134, %s136
      %p143 = scmp.eq.s32.totalorder %s25, 3
      %p144 = por %p142, %p143
      %p145 = scmp.ne.s32.totalorder %s136, %s137
      %p146 = scmp.eq.s32.totalorder %s25, 0
      %p147 = por %p145, %p146
      %p148 = scmp.ne.s32.totalorder %s136, %s137
      %p149 = scmp.eq.s32.totalorder %s26, 3
      %p150 = por %p148, %p149
      %p152 = scmp.ne.s32.totalorder %s137, %s151
      %p153 = scmp.eq.s32.totalorder %s26, 0
      %p154 = por %p152, %p153
      %s156 = sadd.s32 %s155, 1
      %p159 = scmp.eq.s32.totalorder %s20, 3
      %p160 = scmp.ne.s32.totalorder %s155, %s157
      %p161 = scmp.eq.s32.totalorder %s20, 0
      %p162 = por %p160, %p161
      %p163 = scmp.ne.s32.totalorder %s155, %s157
      %p164 = scmp.eq.s32.totalorder %s25, 3
      %p165 = por %p163, %p164
      %p166 = scmp.ne.s32.totalorder %s157, %s158
      %p167 = scmp.eq.s32.totalorder %s25, 0
      %p168 = por %p166, %p167
      %p169 = scmp.ne.s32.totalorder %s157, %s158
      %p170 = scmp.eq.s32.totalorder %s26, 3
      %p171 = por %p169, %p170
      %p173 = scmp.ne.s32.totalorder %s158, %s172
      %p174 = scmp.eq.s32.totalorder %s26, 0
      %p175 = por %p173, %p174
      %s177 = sadd.s32 %s176, 1
      %p180 = scmp.eq.s32.totalorder %s20, 3
      %p181 = scmp.ne.s32.totalorder %s176, %s178
      %p182 = scmp.eq.s32.totalorder %s20, 0
      %p183 = por %p181, %p182
      %p184 = scmp.ne.s32.totalorder %s176, %s178
      %p185 = scmp.eq.s32.totalorder %s25, 3
      %p186 = por %p184, %p185
      %p187 = scmp.ne.s32.totalorder %s178, %s179
      %p188 = scmp.eq.s32.totalorder %s25, 0
      %p189 = por %p187, %p188
      %p190 = scmp.ne.s32.totalorder %s178, %s179
      %p191 = scmp.eq.s32.totalorder %s26, 3
      %p192 = por %p190, %p191
      %p194 = scmp.ne.s32.totalorder %s179, %s193
      %p195 = scmp.eq.s32.totalorder %s26, 0
      %p196 = por %p194, %p195
      %s198 = sadd.s32 %s197, 1
      %p201 = scmp.eq.s32.totalorder %s20, 3
      %p202 = scmp.ne.s32.totalorder %s197, %s199
      %p203 = scmp.eq.s32.totalorder %s20, 0
      %p204 = por %p202, %p203
      %p205 = scmp.ne.s32.totalorder %s197, %s199
      %p206 = scmp.eq.s32.totalorder %s25, 3
      %p207 = por %p205, %p206
      %p208 = scmp.ne.s32.totalorder %s199, %s200
      %p209 = scmp.eq.s32.totalorder %s25, 0
      %p210 = por %p208, %p209
      %p211 = scmp.ne.s32.totalorder %s199, %s200
      %p212 = scmp.eq.s32.totalorder %s26, 3
      %p213 = por %p211, %p212
      %p215 = scmp.ne.s32.totalorder %s200, %s214
      %p216 = scmp.eq.s32.totalorder %s26, 0
      %p217 = por %p215, %p216
      %s219 = sadd.s32 %s218, 1
      %p222 = scmp.eq.s32.totalorder %s20, 3
      %p223 = scmp.ne.s32.totalorder %s218, %s220
      %p224 = scmp.eq.s32.totalorder %s20, 0
      %p225 = por %p223, %p224
      %p226 = scmp.ne.s32.totalorder %s218, %s220
      %p227 = scmp.eq.s32.totalorder %s25, 3
      %p228 = por %p226, %p227
      %p229 = scmp.ne.s32.totalorder %s220, %s221
      %p230 = scmp.eq.s32.totalorder %s25, 0
      %p231 = por %p229, %p230
      %p232 = scmp.ne.s32.totalorder %s220, %s221
      %p233 = scmp.eq.s32.totalorder %s26, 3
      %p234 = por %p232, %p233
      %p236 = scmp.ne.s32.totalorder %s221, %s235
      %p237 = scmp.eq.s32.totalorder %s26, 0
      %p238 = por %p236, %p237
      %s240 = sadd.s32 %s239, 1
      %p243 = scmp.eq.s32.totalorder %s20, 3
      %p244 = scmp.ne.s32.totalorder %s239, %s241
      %p245 = scmp.eq.s32.totalorder %s20, 0
      %p246 = por %p244, %p245
      %p247 = scmp.ne.s32.totalorder %s239, %s241
      %p248 = scmp.eq.s32.totalorder %s25, 3
      %p249 = por %p247, %p248
      %p250 = scmp.ne.s32.totalorder %s241, %s242
      %p251 = scmp.eq.s32.totalorder %s25, 0
      %p252 = por %p250, %p251
      %p253 = scmp.ne.s32.totalorder %s241, %s242
      %p254 = scmp.eq.s32.totalorder %s26, 3
      %p255 = por %p253, %p254
      %p257 = scmp.ne.s32.totalorder %s242, %s256
      %p258 = scmp.eq.s32.totalorder %s26, 0
      %p259 = por %p257, %p258
      %s261 = sadd.s32 %s260, 1
      %p264 = scmp.eq.s32.totalorder %s20, 3
      %p265 = scmp.ne.s32.totalorder %s260, %s262
      %p266 = scmp.eq.s32.totalorder %s20, 0
      %p267 = por %p265, %p266
      %p268 = scmp.ne.s32.totalorder %s260, %s262
      %p269 = scmp.eq.s32.totalorder %s25, 3
      %p270 = por %p268, %p269
      %p271 = scmp.ne.s32.totalorder %s262, %s263
      %p272 = scmp.eq.s32.totalorder %s25, 0
      %p273 = por %p271, %p272
      %p274 = scmp.ne.s32.totalorder %s262, %s263
      %p275 = scmp.eq.s32.totalorder %s26, 3
      %p276 = por %p274, %p275
      %p278 = scmp.ne.s32.totalorder %s263, %s277
      %p279 = scmp.eq.s32.totalorder %s26, 0
      %p280 = por %p278, %p279
      %s281 = ssub.s32 %s27, %s39
      %p282 = scmp.eq.s32.totalorder %s281, 0
      %s284 = sadd.s32 %s283, 1
      %s285 = scalar_select %p282, %s283, %s284
      %p288 = pneg %p282
      %p289 = scmp.eq.s32.totalorder %s20, 3
      %p290 = por %p288, %p289
      %p291 = scmp.ne.s32.totalorder %s283, %s286
      %p292 = scmp.eq.s32.totalorder %s20, 0
      %p293 = por %p291, %p292
      %p294 = scmp.ne.s32.totalorder %s283, %s286
      %p295 = scmp.eq.s32.totalorder %s25, 3
      %p296 = por %p294, %p295
      %p297 = scmp.ne.s32.totalorder %s286, %s287
      %p298 = scmp.eq.s32.totalorder %s25, 0
      %p299 = por %p297, %p298
      %p300 = scmp.ne.s32.totalorder %s286, %s287
      %p301 = scmp.eq.s32.totalorder %s26, 3
      %p302 = por %p300, %p301
      %p304 = scmp.ne.s32.totalorder %s287, %s303
      %p305 = scmp.eq.s32.totalorder %s26, 0
      %p306 = por %p304, %p305
      %p307 = scmp.le.s32.totalorder 1, %s20
      %p308 = scmp.lt.s32.totalorder %s20, 5
      %p309 = pnand %p307, %p308
      %p310 = pneg %p309
      // Predicated region
      $region9: #{bert_regressor_forward.2} parent=5 // pred_check
        _
      $region10: #{bert_regressor_forward.2} parent=5 // pred_check_branch
        %312 = sbr.rel (%p309) target = $region12
      $region11: #{bert_regressor_forward.2} parent=5 // pred_region
        %s313 = ssub.s32 %s20, 1
        // Predicated region
        $region13: #{bert_regressor_forward.2} parent=11 // pred_check
          %p314 = pneg %p105
        $region14: #{bert_regressor_forward.2} parent=11 // pred_check_branch
          %316 = sbr.rel (%p314) target = $region16
        $region15: #{bert_regressor_forward.2} parent=11 // pred_region
          _
        $region16: #{bert_regressor_forward.2} parent=11 // pred_fallthru
          _
        // Predicated region
        $region17: #{bert_regressor_forward.2} parent=11 // pred_check
          %p317 = pneg %p126
        $region18: #{bert_regressor_forward.2} parent=11 // pred_check_branch
          %319 = sbr.rel (%p317) target = $region20
        $region19: #{bert_regressor_forward.2} parent=11 // pred_region
          %s321 = ssub.s32 32, 32
          %322 = vsyncadd [#allocation4], %s321
          %s324 = sshll.u32 [#allocation3], 4
          %s325 = int_to_ptr.vmem [resolvable:$true] %s324
          %327 = dma.hbm_to_vmem [thread:$0]  %s3, 32, %s325, [#allocation4]
        $region20: #{bert_regressor_forward.2} parent=11 // pred_fallthru
          _
        // Predicated region
        $region21: #{bert_regressor_forward.2} parent=11 // pred_check
          %p328 = pneg %p147
        $region22: #{bert_regressor_forward.2} parent=11 // pred_check_branch
          %330 = sbr.rel (%p328) target = $region24
        $region23: #{bert_regressor_forward.2} parent=11 // pred_region
          _
        $region24: #{bert_regressor_forward.2} parent=11 // pred_fallthru
          _
        // Predicated region
        $region25: #{bert_regressor_forward.2} parent=11 // pred_check
          %p331 = pneg %p168
        $region26: #{bert_regressor_forward.2} parent=11 // pred_check_branch
          %333 = sbr.rel (%p331) target = $region28
        $region27: #{bert_regressor_forward.2} parent=11 // pred_region
          _
        $region28: #{bert_regressor_forward.2} parent=11 // pred_fallthru
          _
        // Predicated region
        $region29: #{bert_regressor_forward.2} parent=11 // pred_check
          %p334 = pneg %p189
        $region30: #{bert_regressor_forward.2} parent=11 // pred_check_branch
          %336 = sbr.rel (%p334) target = $region32
        $region31: #{bert_regressor_forward.2} parent=11 // pred_region
          %s338 = ssub.s32 2048, 2048
          %339 = vsyncadd [#allocation6], %s338
          %s340 = sshll.u32 [#allocation5], 4
          %s341 = int_to_ptr.vmem [resolvable:$true] %s340
          %346 = dma.hbm_to_vmem [thread:$0]  %s6, 2048, %s341, [#allocation6], 64, 64, 4
        $region32: #{bert_regressor_forward.2} parent=11 // pred_fallthru
          _
        // Predicated region
        $region33: #{bert_regressor_forward.2} parent=11 // pred_check
          %p347 = pneg %p210
        $region34: #{bert_regressor_forward.2} parent=11 // pred_check_branch
          %349 = sbr.rel (%p347) target = $region36
        $region35: #{bert_regressor_forward.2} parent=11 // pred_region
          _
        $region36: #{bert_regressor_forward.2} parent=11 // pred_fallthru
          _
        // Predicated region
        $region37: #{bert_regressor_forward.2} parent=11 // pred_check
          %p350 = pneg %p231
        $region38: #{bert_regressor_forward.2} parent=11 // pred_check_branch
          %352 = sbr.rel (%p350) target = $region40
        $region39: #{bert_regressor_forward.2} parent=11 // pred_region
          %s354 = ssub.s32 64, 64
          %355 = vsyncadd [#allocation6], %s354
          %s356 = sshll.u32 [#allocation7], 4
          %s357 = int_to_ptr.vmem [resolvable:$true] %s356
          %362 = dma.hbm_to_vmem [thread:$0]  %s8, 64, %s357, [#allocation6], 32, 32, 2
        $region40: #{bert_regressor_forward.2} parent=11 // pred_fallthru
          _
        // Predicated region
        $region41: #{bert_regressor_forward.2} parent=11 // pred_check
          %p363 = pneg %p252
        $region42: #{bert_regressor_forward.2} parent=11 // pred_check_branch
          %365 = sbr.rel (%p363) target = $region44
        $region43: #{bert_regressor_forward.2} parent=11 // pred_region
          %s367 = ssub.s32 4096, 4096
          %368 = vsyncadd [#allocation9], %s367
          %s369 = sshll.u32 [#allocation8], 4
          %s370 = int_to_ptr.vmem [resolvable:$true] %s369
          %375 = dma.hbm_to_vmem [thread:$0]  %s9, 4096, %s370, [#allocation9], 64, 64, 4
        $region44: #{bert_regressor_forward.2} parent=11 // pred_fallthru
          _
        // Predicated region
        $region45: #{bert_regressor_forward.2} parent=11 // pred_check
          %p376 = pneg %p273
        $region46: #{bert_regressor_forward.2} parent=11 // pred_check_branch
          %378 = sbr.rel (%p376) target = $region48
        $region47: #{bert_regressor_forward.2} parent=11 // pred_region
          _
        $region48: #{bert_regressor_forward.2} parent=11 // pred_fallthru
          _
      $region12: #{bert_regressor_forward.2} parent=5 // pred_fallthru
        _
      %p379 = scmp.lt.s32.totalorder %s20, 4
      // Predicated region
      $region49: #{bert_regressor_forward.2} parent=5 // pred_check
        %p380 = pneg %p379
      $region50: #{bert_regressor_forward.2} parent=5 // pred_check_branch
        %382 = sbr.rel (%p380) target = $region52
      $region51: #{bert_regressor_forward.2} parent=5 // pred_region
        // Predicated region
        $region53: #{bert_regressor_forward.2} parent=51 // pred_check
          %p383 = pneg %p52
        $region54: #{bert_regressor_forward.2} parent=51 // pred_check_branch
          %385 = sbr.rel (%p383) target = $region56
        $region55: #{bert_regressor_forward.2} parent=51 // pred_region
          %s386 = smul.u32 4, %s27
          %p387 = scmp.lt.s32.totalorder %s386, 7
          %s388 = scalar_select %p387, %s386, 7
          %s389 = smul.addr %s388, 2
          %s390 = smul.addr %s389, 4
          %s391 = scalar_lea.vmem %s0, %s390
          %s392 = smul.u32 4, %s27
        $region56: #{bert_regressor_forward.2} parent=51 // pred_fallthru
          _
        // Predicated region
        $region57: #{bert_regressor_forward.2} parent=51 // pred_check
          %p393 = pneg %p78
        $region58: #{bert_regressor_forward.2} parent=51 // pred_check_branch
          %395 = sbr.rel (%p393) target = $region60
        $region59: #{bert_regressor_forward.2} parent=51 // pred_region
          %s396 = smul.u32 4, %s27
          %p397 = scmp.lt.s32.totalorder %s396, 7
          %s398 = scalar_select %p397, %s396, 7
          %s399 = scalar_lea.vmem %s1, %s398
          %s400 = smul.u32 4, %s27
        $region60: #{bert_regressor_forward.2} parent=51 // pred_fallthru
          _
      $region52: #{bert_regressor_forward.2} parent=5 // pred_fallthru
        _
      %p401 = scmp.le.s32.totalorder 1, %s20
      %p402 = scmp.lt.s32.totalorder %s20, 5
      %p403 = pnand %p401, %p402
      %p404 = pneg %p403
      // Predicated region
      $region61: #{bert_regressor_forward.2} parent=5 // pred_check
        _
      $region62: #{bert_regressor_forward.2} parent=5 // pred_check_branch
        %406 = sbr.rel (%p403) target = $region64
      $region63: #{bert_regressor_forward.2} parent=5 // pred_region
        %s407 = ssub.s32 %s20, 1
        // Predicated region
        $region65: #{bert_regressor_forward.2} parent=63 // pred_check
          %p408 = pneg %p126
        $region66: #{bert_regressor_forward.2} parent=63 // pred_check_branch
          %410 = sbr.rel (%p408) target = $region68
        $region67: #{bert_regressor_forward.2} parent=63 // pred_region
          %411 = dma.done [#allocation4], 32
        $region68: #{bert_regressor_forward.2} parent=63 // pred_fallthru
          _
        // Predicated region
        $region69: #{bert_regressor_forward.2} parent=63 // pred_check
          %p412 = pneg %p189
        $region70: #{bert_regressor_forward.2} parent=63 // pred_check_branch
          %414 = sbr.rel (%p412) target = $region72
        $region71: #{bert_regressor_forward.2} parent=63 // pred_region
          %415 = dma.done [#allocation6], 2048
        $region72: #{bert_regressor_forward.2} parent=63 // pred_fallthru
          _
        // Predicated region
        $region73: #{bert_regressor_forward.2} parent=63 // pred_check
          %p416 = pneg %p231
        $region74: #{bert_regressor_forward.2} parent=63 // pred_check_branch
          %418 = sbr.rel (%p416) target = $region76
        $region75: #{bert_regressor_forward.2} parent=63 // pred_region
          %419 = dma.done [#allocation6], 64
        $region76: #{bert_regressor_forward.2} parent=63 // pred_fallthru
          _
        // Predicated region
        $region77: #{bert_regressor_forward.2} parent=63 // pred_check
          %p420 = pneg %p252
        $region78: #{bert_regressor_forward.2} parent=63 // pred_check_branch
          %422 = sbr.rel (%p420) target = $region80
        $region79: #{bert_regressor_forward.2} parent=63 // pred_region
          %423 = dma.done [#allocation9], 4096
        $region80: #{bert_regressor_forward.2} parent=63 // pred_fallthru
          _
        %s424 = smul.u32 4, %s29
        %p425 = scmp.lt.s32.totalorder %s424, 7
        %s426 = scalar_select %p425, %s424, 7
        %s427 = smul.addr %s426, 2
        %s428 = smul.addr %s427, 4
        %s429 = scalar_lea.vmem %s0, %s428
        %p430 = pneg %p58
        %p431 = pneg %p55
        %s432 = smul.u32 4, %s29
        %p433 = scmp.lt.s32.totalorder %s432, 7
        %s434 = scalar_select %p433, %s432, 7
        %s435 = scalar_lea.vmem %s1, %s434
        %p436 = pneg %p84
        %p437 = pneg %p81
        %p438 = pneg %p105
        %p439 = pneg %p102
        %p440 = pneg %p126
        %p441 = pneg %p123
        %p442 = pneg %p147
        %p443 = pneg %p144
        %p444 = pneg %p168
        %p445 = pneg %p165
        %p446 = pneg %p189
        %p447 = pneg %p186
        %p448 = pneg %p210
        %p449 = pneg %p207
        %p450 = pneg %p231
        %p451 = pneg %p228
        %p452 = pneg %p252
        %p453 = pneg %p249
        %p454 = pneg %p273
        %p455 = pneg %p270
        %p456 = pneg %p299
        %p457 = pneg %p296
        %s458 = smul.u32 4, %s29
        %p459 = scmp.lt.s32.totalorder %s458, 7
        %s460 = scalar_select %p459, %s458, 7
        %s461 = scalar_lea.vmem %s11, %s460
        %s462 = smul.u32 4, %s29
        %p463 = scmp.lt.s32.totalorder %s462, 7
        %s464 = scalar_select %p463, %s462, 7
        %s465 = smul.addr %s464, 2
        %s466 = smul.addr %s465, 4
        %s467 = scalar_lea.vmem %s0, %s466
        %s468 = smul.u32 4, %s29
        %s469 = smul.u32 4, %s29
        %p470 = scmp.lt.s32.totalorder %s469, 7
        %s471 = scalar_select %p470, %s469, 7
        %s472 = scalar_lea.vmem %s1, %s471
        %s473 = smul.u32 4, %s29
        %s474 = smul.u32 4, %s29
        %p475 = scmp.lt.s32.totalorder %s474, 7
        %s476 = scalar_select %p475, %s474, 7
        %s477 = scalar_lea.vmem %s11, %s476
        %s478 = smul.u32 4, %s29
        %p480 = scmp.eq.s32.totalorder %s30, 0
        // Predicated region
        $region81: #{bert_regressor_forward.2} parent=63 // pred_check
          %p481 = pneg %p480
        $region82: #{bert_regressor_forward.2} parent=63 // pred_check_branch
          %483 = sbr.rel (%p481) target = $region84
        $region83: #{bert_regressor_forward.2} parent=63 // pred_region
          %v484 = vld [vmem:[%s467] sm:$0xf]
          %v485 = vld [vmem:[%s467 + $0x4] sm:$0xf]
          %v486 = vld [vmem:[%s467 + $0x8] sm:$0xf]
          %v487 = vld [vmem:[%s467 + $0xc] sm:$0xf]
          %v488 = vld [vmem:[%s467 + $0x10] sm:$0xf]
          %v489 = vld [vmem:[%s467 + $0x14] sm:$0xf]
          %v490 = vld [vmem:[%s467 + $0x18] sm:$0xf]
          %v491 = vld [vmem:[%s467 + $0x1c] sm:$0xf]
          %v492 = vunpack.c.l.bf16 %v484
          %v493 = vunpack.c.l.bf16 %v485
          %v494 = vunpack.c.l.bf16 %v486
          %v495 = vunpack.c.l.bf16 %v487
          %v496 = vunpack.c.l.bf16 %v488
          %v497 = vunpack.c.l.bf16 %v489
          %v498 = vunpack.c.l.bf16 %v490
          %v499 = vunpack.c.l.bf16 %v491
          %v500 = vld [vmem:[%s2] sm:$0xff]
          %v501 = vld [vmem:[%s2 + $0x8] sm:$0xff]
          %v502 = vadd.f32 %v492, %v500
          %v503 = vadd.f32 %v493, %v501
          %v504 = vadd.f32 %v494, %v500
          %v505 = vadd.f32 %v495, %v501
          %v506 = vadd.f32 %v496, %v500
          %v507 = vadd.f32 %v497, %v501
          %v508 = vadd.f32 %v498, %v500
          %v509 = vadd.f32 %v499, %v501
          %v510 = vld [vmem:[#allocation3] sm:$0x3]
          %511 = vadd.xlane.f32.xlu0 %v502
          %v512 = vpop.xlane.xlu0 %511
          %513 = vadd.xlane.f32.xlu0 %v503
          %v514 = vpop.xlane.xlu0 %513
          %515 = vadd.xlane.f32.xlu0 %v504
          %v516 = vpop.xlane.xlu0 %515
          %517 = vadd.xlane.f32.xlu0 %v505
          %v518 = vpop.xlane.xlu0 %517
          %519 = vadd.xlane.f32.xlu0 %v506
          %v520 = vpop.xlane.xlu0 %519
          %521 = vadd.xlane.f32.xlu0 %v507
          %v522 = vpop.xlane.xlu0 %521
          %523 = vadd.xlane.f32.xlu0 %v508
          %v524 = vpop.xlane.xlu0 %523
          %525 = vadd.xlane.f32.xlu0 %v509
          %v526 = vpop.xlane.xlu0 %525
          %v527 = vrcp.pop 128.0
          %v528 = vmul.f32 %v512, %v527
          %v529 = vmul.f32 %v514, %v527
          %v530 = vmul.f32 %v516, %v527
          %v531 = vmul.f32 %v518, %v527
          %v532 = vmul.f32 %v520, %v527
          %v533 = vmul.f32 %v522, %v527
          %v534 = vmul.f32 %v524, %v527
          %v535 = vmul.f32 %v526, %v527
          %v536 = vsub.f32 %v502, %v528
          %v537 = vsub.f32 %v503, %v529
          %v538 = vsub.f32 %v504, %v530
          %v539 = vsub.f32 %v505, %v531
          %v540 = vsub.f32 %v506, %v532
          %v541 = vsub.f32 %v507, %v533
          %v542 = vsub.f32 %v508, %v534
          %v543 = vsub.f32 %v509, %v535
          %v544 = vmul.f32 %v536, %v536
          %v545 = vmul.f32 %v537, %v537
          %v546 = vmul.f32 %v538, %v538
          %v547 = vmul.f32 %v539, %v539
          %v548 = vmul.f32 %v540, %v540
          %v549 = vmul.f32 %v541, %v541
          %v550 = vmul.f32 %v542, %v542
          %v551 = vmul.f32 %v543, %v543
          %552 = vadd.xlane.f32.xlu0 %v544
          %v553 = vpop.xlane.xlu0 %552
          %554 = vadd.xlane.f32.xlu0 %v545
          %v555 = vpop.xlane.xlu0 %554
          %556 = vadd.xlane.f32.xlu0 %v546
          %v557 = vpop.xlane.xlu0 %556
          %558 = vadd.xlane.f32.xlu0 %v547
          %v559 = vpop.xlane.xlu0 %558
          %560 = vadd.xlane.f32.xlu0 %v548
          %v561 = vpop.xlane.xlu0 %560
          %562 = vadd.xlane.f32.xlu0 %v549
          %v563 = vpop.xlane.xlu0 %562
          %564 = vadd.xlane.f32.xlu0 %v550
          %v565 = vpop.xlane.xlu0 %564
          %566 = vadd.xlane.f32.xlu0 %v551
          %v567 = vpop.xlane.xlu0 %566
          %v568 = vmul.f32 %v553, %v527
          %v569 = vmul.f32 %v555, %v527
          %v570 = vmul.f32 %v557, %v527
          %v571 = vmul.f32 %v559, %v527
          %v572 = vmul.f32 %v561, %v527
          %v573 = vmul.f32 %v563, %v527
          %v574 = vmul.f32 %v565, %v527
          %v575 = vmul.f32 %v567, %v527
          %v576 = vadd.f32 %v568, 1e-12
          %v577 = vadd.f32 %v569, 1e-12
          %v578 = vadd.f32 %v570, 1e-12
          %v579 = vadd.f32 %v571, 1e-12
          %v580 = vadd.f32 %v572, 1e-12
          %v581 = vadd.f32 %v573, 1e-12
          %v582 = vadd.f32 %v574, 1e-12
          %v583 = vadd.f32 %v575, 1e-12
          %v584 = vrsqrt.pop %v576
          %v585 = vrsqrt.pop %v577
          %v586 = vrsqrt.pop %v578
          %v587 = vrsqrt.pop %v579
          %v588 = vrsqrt.pop %v580
          %v589 = vrsqrt.pop %v581
          %v590 = vrsqrt.pop %v582
          %v591 = vrsqrt.pop %v583
          %v592 = vmul.f32 %v536, %v584
          %v593 = vmul.f32 %v537, %v585
          %v594 = vmul.f32 %v538, %v586
          %v595 = vmul.f32 %v539, %v587
          %v596 = vmul.f32 %v540, %v588
          %v597 = vmul.f32 %v541, %v589
          %v598 = vmul.f32 %v542, %v590
          %v599 = vmul.f32 %v543, %v591
          %v600 = vlaneseq
          %v601 = vshrl.u32 %v600, 7
          %v602 = vsub.s32 0, %v601
          %v603 = vrot.slane %v510, %v602
          %v604 = vmul.f32 %v592, %v603
          %v605 = vmul.f32 %v593, %v603
          %v606 = vmul.f32 %v594, %v603
          %v607 = vmul.f32 %v595, %v603
          %v608 = vmul.f32 %v596, %v603
          %v609 = vmul.f32 %v597, %v603
          %v610 = vmul.f32 %v598, %v603
          %v611 = vmul.f32 %v599, %v603
          %v612 = vlaneseq
          %v613 = vshrl.u32 %v612, 7
          %v614 = vsub.s32 1, %v613
          %v615 = vrot.slane %v510, %v614
          %v616 = vadd.f32 %v604, %v615
          %v617 = vadd.f32 %v605, %v615
          %v618 = vadd.f32 %v606, %v615
          %v619 = vadd.f32 %v607, %v615
          %v620 = vadd.f32 %v608, %v615
          %v621 = vadd.f32 %v609, %v615
          %v622 = vadd.f32 %v610, %v615
          %v623 = vadd.f32 %v611, %v615
          %624 = vst [vmem:[#allocation2] sm:$0xff] %v616
          %625 = vst [vmem:[#allocation2 + $0x8] sm:$0xff] %v617
          %626 = vst [vmem:[#allocation2 + $0x10] sm:$0xff] %v618
          %627 = vst [vmem:[#allocation2 + $0x18] sm:$0xff] %v619
          %628 = vst [vmem:[#allocation2 + $0x20] sm:$0xff] %v620
          %629 = vst [vmem:[#allocation2 + $0x28] sm:$0xff] %v621
          %630 = vst [vmem:[#allocation2 + $0x30] sm:$0xff] %v622
          %631 = vst [vmem:[#allocation2 + $0x38] sm:$0xff] %v623
        $region84: #{bert_regressor_forward.2} parent=63 // pred_fallthru
          _
        %v632 = vld [vmem:[#allocation2] sm:$0xff]
        %v633 = vld [vmem:[#allocation2 + $0x8] sm:$0xff]
        %v634 = vld [vmem:[#allocation2 + $0x10] sm:$0xff]
        %v635 = vld [vmem:[#allocation2 + $0x18] sm:$0xff]
        %v636 = vld [vmem:[#allocation2 + $0x20] sm:$0xff]
        %v637 = vld [vmem:[#allocation2 + $0x28] sm:$0xff]
        %v638 = vld [vmem:[#allocation2 + $0x30] sm:$0xff]
        %v639 = vld [vmem:[#allocation2 + $0x38] sm:$0xff]
        %v640 = vpack.c.bf16 %v633, %v632
        %v641 = vpack.c.bf16 %v635, %v634
        %v642 = vpack.c.bf16 %v637, %v636
        %v643 = vpack.c.bf16 %v639, %v638
        %s644 = smul.u32 %s30, 8
        %s645 = scalar_lea.vmem %s10, %s644
        %v646 = vld [vmem:[%s645] sm:$0xff]
        %s647 = smul.u32 %s30, 48
        %s648 = smul.addr %s647, 4
        %s649 = scalar_lea.vmem %s4, %s648
        %v650 = vld [vmem:[%s649] sm:$0xff]
        %v651 = vld [vmem:[%s649 + $0x8] sm:$0xf]
        %v652 = vld [vmem:[%s649 + $0xc] sm:$0xff]
        %v653 = vld [vmem:[%s649 + $0x14] sm:$0xf]
        %v654 = vld [vmem:[%s649 + $0x18] sm:$0xff]
        %v655 = vld [vmem:[%s649 + $0x20] sm:$0xf]
        %v656 = vld [vmem:[%s649 + $0x24] sm:$0xff]
        %v657 = vld [vmem:[%s649 + $0x2c] sm:$0xf]
        %v658 = vld [vmem:[%s649 + $0x30] sm:$0xff]
        %v659 = vld [vmem:[%s649 + $0x38] sm:$0xf]
        %v660 = vld [vmem:[%s649 + $0x3c] sm:$0xff]
        %v661 = vld [vmem:[%s649 + $0x44] sm:$0xf]
        %v662 = vld [vmem:[%s649 + $0x48] sm:$0xff]
        %v663 = vld [vmem:[%s649 + $0x50] sm:$0xf]
        %v664 = vld [vmem:[%s649 + $0x54] sm:$0xff]
        %v665 = vld [vmem:[%s649 + $0x5c] sm:$0xf]
        %v666 = vld [vmem:[%s649 + $0x60] sm:$0xff]
        %v667 = vld [vmem:[%s649 + $0x68] sm:$0xf]
        %v668 = vld [vmem:[%s649 + $0x6c] sm:$0xff]
        %v669 = vld [vmem:[%s649 + $0x74] sm:$0xf]
        %v670 = vld [vmem:[%s649 + $0x78] sm:$0xff]
        %v671 = vld [vmem:[%s649 + $0x80] sm:$0xf]
        %v672 = vld [vmem:[%s649 + $0x84] sm:$0xff]
        %v673 = vld [vmem:[%s649 + $0x8c] sm:$0xf]
        %v674 = vld [vmem:[%s649 + $0x90] sm:$0xff]
        %v675 = vld [vmem:[%s649 + $0x98] sm:$0xf]
        %v676 = vld [vmem:[%s649 + $0x9c] sm:$0xff]
        %v677 = vld [vmem:[%s649 + $0xa4] sm:$0xf]
        %v678 = vld [vmem:[%s649 + $0xa8] sm:$0xff]
        %v679 = vld [vmem:[%s649 + $0xb0] sm:$0xf]
        %v680 = vld [vmem:[%s649 + $0xb4] sm:$0xff]
        %v681 = vld [vmem:[%s649 + $0xbc] sm:$0xf]
        %s682 = smul.u32 %s30, 16
        %s683 = smul.addr %s682, 4
        %s684 = scalar_lea.vmem [#allocation5], %s683
        %v685 = vld [vmem:[%s684] sm:$0xf]
        %v686 = vld [vmem:[%s684 + $0x4] sm:$0xf]
        %v687 = vld [vmem:[%s684 + $0x8] sm:$0xf]
        %v688 = vld [vmem:[%s684 + $0xc] sm:$0xf]
        %v689 = vld [vmem:[%s684 + $0x10] sm:$0xf]
        %v690 = vld [vmem:[%s684 + $0x14] sm:$0xf]
        %v691 = vld [vmem:[%s684 + $0x18] sm:$0xf]
        %v692 = vld [vmem:[%s684 + $0x1c] sm:$0xf]
        %v693 = vld [vmem:[%s684 + $0x20] sm:$0xf]
        %v694 = vld [vmem:[%s684 + $0x24] sm:$0xf]
        %v695 = vld [vmem:[%s684 + $0x28] sm:$0xf]
        %v696 = vld [vmem:[%s684 + $0x2c] sm:$0xf]
        %v697 = vld [vmem:[%s684 + $0x30] sm:$0xf]
        %v698 = vld [vmem:[%s684 + $0x34] sm:$0xf]
        %v699 = vld [vmem:[%s684 + $0x38] sm:$0xf]
        %v700 = vld [vmem:[%s684 + $0x3c] sm:$0xf]
        %s701 = smul.u32 %s30, 3
        %s702 = scalar_lea.vmem %s5, %s701
        %v703 = vld [vmem:[%s702] sm:$0x7]
        %v705 = vlaneseq
        %v706 = vshrl.u32 %v705, 7
        %v707 = vsub.s32 0, %v706
        %v708 = vrot.slane %v703, %v707
        %v709 = vlaneseq
        %v710 = vshrl.u32 %v709, 7
        %v711 = vsub.s32 1, %v710
        %v712 = vrot.slane %v703, %v711
        %v713 = vlaneseq
        %v714 = vshrl.u32 %v713, 7
        %v715 = vsub.s32 2, %v714
        %v716 = vrot.slane %v703, %v715
        %v752 = vunpack.c.l.b16 %v650
        %v753 = vunpack.c.h.b16 %v650
        %v754 = vunpack.c.l.b16 %v651
        %v755 = vunpack.c.l.b16 %v652
        %v756 = vunpack.c.h.b16 %v652
        %v757 = vunpack.c.l.b16 %v653
        %v758 = vunpack.c.l.b16 %v654
        %v759 = vunpack.c.h.b16 %v654
        %v760 = vunpack.c.l.b16 %v655
        %v761 = vunpack.c.l.b16 %v656
        %v762 = vunpack.c.h.b16 %v656
        %v763 = vunpack.c.l.b16 %v657
        %v764 = vunpack.c.l.b16 %v658
        %v765 = vunpack.c.h.b16 %v658
        %v766 = vunpack.c.l.b16 %v659
        %v767 = vunpack.c.l.b16 %v660
        %v768 = vunpack.c.h.b16 %v660
        %v769 = vunpack.c.l.b16 %v661
        %v770 = vunpack.c.l.b16 %v662
        %v771 = vunpack.c.h.b16 %v662
        %v772 = vunpack.c.l.b16 %v663
        %v773 = vunpack.c.l.b16 %v664
        %v774 = vunpack.c.h.b16 %v664
        %v775 = vunpack.c.l.b16 %v665
        %v776 = vunpack.c.l.b16 %v666
        %v777 = vunpack.c.h.b16 %v666
        %v778 = vunpack.c.l.b16 %v667
        %v779 = vunpack.c.l.b16 %v668
        %v780 = vunpack.c.h.b16 %v668
        %v781 = vunpack.c.l.b16 %v669
        %v782 = vunpack.c.l.b16 %v670
        %v783 = vunpack.c.h.b16 %v670
        %v784 = vunpack.c.l.b16 %v671
        %v785 = vunpack.c.l.b16 %v672
        %v786 = vunpack.c.h.b16 %v672
        %v787 = vunpack.c.l.b16 %v673
        %v788 = vunpack.c.l.b16 %v674
        %v789 = vunpack.c.h.b16 %v674
        %v790 = vunpack.c.l.b16 %v675
        %v791 = vunpack.c.l.b16 %v676
        %v792 = vunpack.c.h.b16 %v676
        %v793 = vunpack.c.l.b16 %v677
        %v794 = vunpack.c.l.b16 %v678
        %v795 = vunpack.c.h.b16 %v678
        %v796 = vunpack.c.l.b16 %v679
        %v797 = vunpack.c.l.b16 %v680
        %v798 = vunpack.c.h.b16 %v680
        %v799 = vunpack.c.l.b16 %v681
        %v800 = vpack.c.b16 %v755, %v752
        %v801 = vpack.c.b16 %v756, %v753
        %v802 = vpack.c.b16 %v757, %v754
        %v803 = vpack.c.b16 %v761, %v758
        %v804 = vpack.c.b16 %v762, %v759
        %v805 = vpack.c.b16 %v763, %v760
        %v806 = vpack.c.b16 %v767, %v764
        %v807 = vpack.c.b16 %v768, %v765
        %v808 = vpack.c.b16 %v769, %v766
        %v809 = vpack.c.b16 %v773, %v770
        %v810 = vpack.c.b16 %v774, %v771
        %v811 = vpack.c.b16 %v775, %v772
        %v812 = vpack.c.b16 %v779, %v776
        %v813 = vpack.c.b16 %v780, %v777
        %v814 = vpack.c.b16 %v781, %v778
        %v815 = vpack.c.b16 %v785, %v782
        %v816 = vpack.c.b16 %v786, %v783
        %v817 = vpack.c.b16 %v787, %v784
        %v818 = vpack.c.b16 %v791, %v788
        %v819 = vpack.c.b16 %v792, %v789
        %v820 = vpack.c.b16 %v793, %v790
        %v821 = vpack.c.b16 %v797, %v794
        %v822 = vpack.c.b16 %v798, %v795
        %v823 = vpack.c.b16 %v799, %v796
        %848 = vmatprep.subr.bf16.mxu0 %v801
        %849 = vmatpush1.bf16.msra.mxu0 %v800
        %850 = vmatprep.subr.bf16.mxu0 %v804
        %851 = vmatpush1.bf16.msra.mxu0 %v803
        %852 = vmatprep.subr.bf16.mxu0 %v807
        %853 = vmatpush1.bf16.msra.mxu0 %v806
        %854 = vmatprep.subr.bf16.mxu0 %v810
        %855 = vmatpush1.bf16.msra.mxu0 %v809
        %856 = vmatprep.subr.bf16.mxu0 %v813
        %857 = vmatpush1.bf16.msra.mxu0 %v812
        %858 = vmatprep.subr.bf16.mxu0 %v816
        %859 = vmatpush1.bf16.msra.mxu0 %v815
        %860 = vmatprep.subr.bf16.mxu0 %v819
        %861 = vmatpush1.bf16.msra.mxu0 %v818
        %862 = vmatprep.subr.bf16.mxu0 %v822
        %863 = vmatpush1.bf16.msra.mxu0 %v821
        %864 = vmatprep.subr.bf16.mxu0 0
        %865 = vmatpush1.bf16.msra.mxu0 0
        %866 = vmatprep.subr.bf16.mxu0 0
        %867 = vmatpush1.bf16.msra.mxu0 0
        %868 = vmatprep.subr.bf16.mxu0 0
        %869 = vmatpush1.bf16.msra.mxu0 0
        %870 = vmatprep.subr.bf16.mxu0 0
        %871 = vmatpush1.bf16.msra.mxu0 0
        %872 = vmatprep.subr.bf16.mxu0 0
        %873 = vmatpush1.bf16.msra.mxu0 0
        %874 = vmatprep.subr.bf16.mxu0 0
        %875 = vmatpush1.bf16.msra.mxu0 0
        %876 = vmatprep.subr.bf16.mxu0 0
        %877 = vmatpush1.bf16.msra.mxu0 0
        %878 = vmatprep.subr.bf16.mxu0 0
        %879 = vmatpush1.bf16.msra.mxu0 0
        %880 = vmatprep.mubr.bf16.mxu0 0
        %881 = vmatmul.mubr.bf16.gmra.mrb[0].mxu0 %v640
        %v882 = vpop.f32.mrb[0].mxu0
        %v883 = vadd.f32 %v708, %v882
        %v884 = vpop.f32.mrb[0].mxu0
        %v885 = vadd.f32 %v712, %v884
        %v886 = vpop.f32.mrb[0].mxu0
        %v887 = vadd.f32 %v708, %v886
        %v888 = vpop.f32.mrb[0].mxu0
        %v889 = vadd.f32 %v712, %v888
        %890 = vmatprep.mubr.bf16.mxu0 0
        %891 = vmatmul.mubr.bf16.gmra.mrb[0].mxu0 %v641
        %v892 = vpop.f32.mrb[0].mxu0
        %v893 = vadd.f32 %v708, %v892
        %v894 = vpop.f32.mrb[0].mxu0
        %v895 = vadd.f32 %v712, %v894
        %v896 = vpop.f32.mrb[0].mxu0
        %v897 = vadd.f32 %v708, %v896
        %v898 = vpop.f32.mrb[0].mxu0
        %v899 = vadd.f32 %v712, %v898
        %900 = vmatprep.mubr.bf16.mxu0 0
        %901 = vmatmul.mubr.bf16.gmra.mrb[0].mxu0 %v642
        %v902 = vpop.f32.mrb[0].mxu0
        %v903 = vadd.f32 %v708, %v902
        %v904 = vpop.f32.mrb[0].mxu0
        %v905 = vadd.f32 %v712, %v904
        %v906 = vpop.f32.mrb[0].mxu0
        %v907 = vadd.f32 %v708, %v906
        %v908 = vpop.f32.mrb[0].mxu0
        %v909 = vadd.f32 %v712, %v908
        %910 = vmatprep.mubr.bf16.mxu0 0
        %911 = vmatmul.mubr.bf16.gmra.mrb[0].mxu0 %v643
        %v912 = vpop.f32.mrb[0].mxu0
        %v913 = vadd.f32 %v708, %v912
        %v914 = vpop.f32.mrb[0].mxu0
        %v915 = vadd.f32 %v712, %v914
        %v916 = vpop.f32.mrb[0].mxu0
        %v917 = vadd.f32 %v708, %v916
        %v918 = vpop.f32.mrb[0].mxu0
        %v919 = vadd.f32 %v712, %v918
        %920 = vdwg.mxu0
        %921 = vmatprep.subr.bf16.mxu0 0
        %922 = vmatpush1.bf16.msra.mxu0 %v802
        %923 = vmatprep.subr.bf16.mxu0 0
        %924 = vmatpush1.bf16.msra.mxu0 %v805
        %925 = vmatprep.subr.bf16.mxu0 0
        %926 = vmatpush1.bf16.msra.mxu0 %v808
        %927 = vmatprep.subr.bf16.mxu0 0
        %928 = vmatpush1.bf16.msra.mxu0 %v811
        %929 = vmatprep.subr.bf16.mxu0 0
        %930 = vmatpush1.bf16.msra.mxu0 %v814
        %931 = vmatprep.subr.bf16.mxu0 0
        %932 = vmatpush1.bf16.msra.mxu0 %v817
        %933 = vmatprep.subr.bf16.mxu0 0
        %934 = vmatpush1.bf16.msra.mxu0 %v820
        %935 = vmatprep.subr.bf16.mxu0 0
        %936 = vmatpush1.bf16.msra.mxu0 %v823
        %937 = vmatprep.subr.bf16.mxu0 0
        %938 = vmatpush1.bf16.msra.mxu0 0
        %939 = vmatprep.subr.bf16.mxu0 0
        %940 = vmatpush1.bf16.msra.mxu0 0
        %941 = vmatprep.subr.bf16.mxu0 0
        %942 = vmatpush1.bf16.msra.mxu0 0
        %943 = vmatprep.subr.bf16.mxu0 0
        %944 = vmatpush1.bf16.msra.mxu0 0
        %945 = vmatprep.subr.bf16.mxu0 0
        %946 = vmatpush1.bf16.msra.mxu0 0
        %947 = vmatprep.subr.bf16.mxu0 0
        %948 = vmatpush1.bf16.msra.mxu0 0
        %949 = vmatprep.subr.bf16.mxu0 0
        %950 = vmatpush1.bf16.msra.mxu0 0
        %951 = vmatprep.subr.bf16.mxu0 0
        %952 = vmatpush1.bf16.msra.mxu0 0
        %953 = vmatprep.mubr.bf16.mxu0 0
        %954 = vmatmul.mubr.bf16.gmra.mrb[0].mxu0 %v640
        %v955 = vpop.f32.mrb[0].mxu0
        %v956 = vadd.f32 %v716, %v955
        %v957 = vpop.f32.mrb[0].mxu0
        %v958 = vpop.f32.mrb[0].mxu0
        %v959 = vadd.f32 %v716, %v958
        %v960 = vpop.f32.mrb[0].mxu0
        %961 = vmatprep.mubr.bf16.mxu0 0
        %962 = vmatmul.mubr.bf16.gmra.mrb[0].mxu0 %v641
        %v963 = vpop.f32.mrb[0].mxu0
        %v964 = vadd.f32 %v716, %v963
        %v965 = vpop.f32.mrb[0].mxu0
        %v966 = vpop.f32.mrb[0].mxu0
        %v967 = vadd.f32 %v716, %v966
        %v968 = vpop.f32.mrb[0].mxu0
        %969 = vmatprep.mubr.bf16.mxu0 0
        %970 = vmatmul.mubr.bf16.gmra.mrb[0].mxu0 %v642
        %v971 = vpop.f32.mrb[0].mxu0
        %v972 = vadd.f32 %v716, %v971
        %v973 = vpop.f32.mrb[0].mxu0
        %v974 = vpop.f32.mrb[0].mxu0
        %v975 = vadd.f32 %v716, %v974
        %v976 = vpop.f32.mrb[0].mxu0
        %977 = vmatprep.mubr.bf16.mxu0 0
        %978 = vmatmul.mubr.bf16.gmra.mrb[0].mxu0 %v643
        %v979 = vpop.f32.mrb[0].mxu0
        %v980 = vadd.f32 %v716, %v979
        %v981 = vpop.f32.mrb[0].mxu0
        %v982 = vpop.f32.mrb[0].mxu0
        %v983 = vadd.f32 %v716, %v982
        %v984 = vpop.f32.mrb[0].mxu0
        %985 = vdwg.mxu0
        %v986 = vpack.c.bf16 %v887, %v883
        %v987 = vpack.c.bf16 %v897, %v893
        %v988 = vpack.c.bf16 %v907, %v903
        %v989 = vpack.c.bf16 %v917, %v913
        %v990 = vpack.c.bf16 %v889, %v885
        %v991 = vpack.c.bf16 %v899, %v895
        %v992 = vpack.c.bf16 %v909, %v905
        %v993 = vpack.c.bf16 %v919, %v915
        %v994 = vpack.c.bf16 %v959, %v956
        %v995 = vpack.c.bf16 %v967, %v964
        %v996 = vpack.c.bf16 %v975, %v972
        %v997 = vpack.c.bf16 %v983, %v980
        %v998 = vld [vmem:[%s472] sm:$0x1]
        %v999 = vld [vmem:[%s472 + $0x1] sm:$0x1]
        %v1000 = vld [vmem:[%s472 + $0x2] sm:$0x1]
        %v1001 = vld [vmem:[%s472 + $0x3] sm:$0x1]
        %v1006 = vlaneseq
        %v1007 = vshrl.u32 %v1006, 7
        %v1008 = vsub.s32 0, %v1007
        %v1009 = vrot.slane %v998, %v1008
        %v1010 = vlaneseq
        %v1011 = vshrl.u32 %v1010, 7
        %v1012 = vsub.s32 0, %v1011
        %v1013 = vrot.slane %v999, %v1012
        %v1014 = vlaneseq
        %v1015 = vshrl.u32 %v1014, 7
        %v1016 = vsub.s32 0, %v1015
        %v1017 = vrot.slane %v1000, %v1016
        %v1018 = vlaneseq
        %v1019 = vshrl.u32 %v1018, 7
        %v1020 = vsub.s32 0, %v1019
        %v1021 = vrot.slane %v1001, %v1020
        %vm1026 = vcmask 523264
        %v1028 = vsel %vm1026, %v986, 0
        %v1031 = vsel %vm1026, %v990, 0
        %1033 = vmatprep.subr.bf16.mxu0 0
        %1034 = vmatpush1.bf16.xpose.msra.mxu0 %v1031
        %1035 = vmatprep.subr.bf16.mxu0 0
        %1036 = vmatpush1.bf16.xpose.msra.mxu0 0
        %1037 = vmatprep.subr.bf16.mxu0 0
        %1038 = vmatpush1.bf16.xpose.msra.mxu0 0
        %1039 = vmatprep.subr.bf16.mxu0 0
        %1040 = vmatpush1.bf16.xpose.msra.mxu0 0
        %1041 = vmatprep.subr.bf16.mxu0 0
        %1042 = vmatpush1.bf16.xpose.msra.mxu0 0
        %1043 = vmatprep.subr.bf16.mxu0 0
        %1044 = vmatpush1.bf16.xpose.msra.mxu0 0
        %1045 = vmatprep.subr.bf16.mxu0 0
        %1046 = vmatpush1.bf16.xpose.msra.mxu0 0
        %1047 = vmatprep.subr.bf16.mxu0 0
        %1048 = vmatpush1.bf16.xpose.msra.mxu0 0
        %1049 = vmatprep.subr.bf16.mxu0 0
        %1050 = vmatpush1.bf16.xpose.msra.mxu0 0
        %1051 = vmatprep.subr.bf16.mxu0 0
        %1052 = vmatpush1.bf16.xpose.msra.mxu0 0
        %1053 = vmatprep.subr.bf16.mxu0 0
        %1054 = vmatpush1.bf16.xpose.msra.mxu0 0
        %1055 = vmatprep.subr.bf16.mxu0 0
        %1056 = vmatpush1.bf16.xpose.msra.mxu0 0
        %1057 = vmatprep.subr.bf16.mxu0 0
        %1058 = vmatpush1.bf16.xpose.msra.mxu0 0
        %1059 = vmatprep.subr.bf16.mxu0 0
        %1060 = vmatpush1.bf16.xpose.msra.mxu0 0
        %1061 = vmatprep.subr.bf16.mxu0 0
        %1062 = vmatpush1.bf16.xpose.msra.mxu0 0
        %1063 = vmatprep.subr.bf16.mxu0 0
        %1064 = vmatpush1.bf16.xpose.msra.mxu0 0
        %1065 = vmatprep.mubr.bf16.mxu0 0
        %1066 = vmatmul.mubr.bf16.gmra.mrb[0].mxu0 %v1028
        %v1067 = vpop.f32.mrb[0].mxu0
        %v1068 = vadd.f32 0.0, %v1067
        %v1069 = vpop.f32.mrb[0].mxu0
        %v1070 = vpop.f32.mrb[0].mxu0
        %v1071 = vadd.f32 0.0, %v1070
        %v1072 = vpop.f32.mrb[0].mxu0
        %1073 = vdwg.mxu0
        %v1075 = vsel %vm1026, %v987, 0
        %v1078 = vsel %vm1026, %v991, 0
        %1080 = vmatprep.subr.bf16.mxu0 0
        %1081 = vmatpush1.bf16.xpose.msra.mxu0 %v1078
        %1082 = vmatprep.subr.bf16.mxu0 0
        %1083 = vmatpush1.bf16.xpose.msra.mxu0 0
        %1084 = vmatprep.subr.bf16.mxu0 0
        %1085 = vmatpush1.bf16.xpose.msra.mxu0 0
        %1086 = vmatprep.subr.bf16.mxu0 0
        %1087 = vmatpush1.bf16.xpose.msra.mxu0 0
        %1088 = vmatprep.subr.bf16.mxu0 0
        %1089 = vmatpush1.bf16.xpose.msra.mxu0 0
        %1090 = vmatprep.subr.bf16.mxu0 0
        %1091 = vmatpush1.bf16.xpose.msra.mxu0 0
        %1092 = vmatprep.subr.bf16.mxu0 0
        %1093 = vmatpush1.bf16.xpose.msra.mxu0 0
        %1094 = vmatprep.subr.bf16.mxu0 0
        %1095 = vmatpush1.bf16.xpose.msra.mxu0 0
        %1096 = vmatprep.subr.bf16.mxu0 0
        %1097 = vmatpush1.bf16.xpose.msra.mxu0 0
        %1098 = vmatprep.subr.bf16.mxu0 0
        %1099 = vmatpush1.bf16.xpose.msra.mxu0 0
        %1100 = vmatprep.subr.bf16.mxu0 0
        %1101 = vmatpush1.bf16.xpose.msra.mxu0 0
        %1102 = vmatprep.subr.bf16.mxu0 0
        %1103 = vmatpush1.bf16.xpose.msra.mxu0 0
        %1104 = vmatprep.subr.bf16.mxu0 0
        %1105 = vmatpush1.bf16.xpose.msra.mxu0 0
        %1106 = vmatprep.subr.bf16.mxu0 0
        %1107 = vmatpush1.bf16.xpose.msra.mxu0 0
        %1108 = vmatprep.subr.bf16.mxu0 0
        %1109 = vmatpush1.bf16.xpose.msra.mxu0 0
        %1110 = vmatprep.subr.bf16.mxu0 0
        %1111 = vmatpush1.bf16.xpose.msra.mxu0 0
        %1112 = vmatprep.mubr.bf16.mxu0 0
        %1113 = vmatmul.mubr.bf16.gmra.mrb[0].mxu0 %v1075
        %v1114 = vpop.f32.mrb[0].mxu0
        %v1115 = vadd.f32 0.0, %v1114
        %v1116 = vpop.f32.mrb[0].mxu0
        %v1117 = vpop.f32.mrb[0].mxu0
        %v1118 = vadd.f32 0.0, %v1117
        %v1119 = vpop.f32.mrb[0].mxu0
        %1120 = vdwg.mxu0
        %v1122 = vsel %vm1026, %v988, 0
        %v1125 = vsel %vm1026, %v992, 0
        %1127 = vmatprep.subr.bf16.mxu0 0
        %1128 = vmatpush1.bf16.xpose.msra.mxu0 %v1125
        %1129 = vmatprep.subr.bf16.mxu0 0
        %1130 = vmatpush1.bf16.xpose.msra.mxu0 0
        %1131 = vmatprep.subr.bf16.mxu0 0
        %1132 = vmatpush1.bf16.xpose.msra.mxu0 0
        %1133 = vmatprep.subr.bf16.mxu0 0
        %1134 = vmatpush1.bf16.xpose.msra.mxu0 0
        %1135 = vmatprep.subr.bf16.mxu0 0
        %1136 = vmatpush1.bf16.xpose.msra.mxu0 0
        %1137 = vmatprep.subr.bf16.mxu0 0
        %1138 = vmatpush1.bf16.xpose.msra.mxu0 0
        %1139 = vmatprep.subr.bf16.mxu0 0
        %1140 = vmatpush1.bf16.xpose.msra.mxu0 0
        %1141 = vmatprep.subr.bf16.mxu0 0
        %1142 = vmatpush1.bf16.xpose.msra.mxu0 0
        %1143 = vmatprep.subr.bf16.mxu0 0
        %1144 = vmatpush1.bf16.xpose.msra.mxu0 0
        %1145 = vmatprep.subr.bf16.mxu0 0
        %1146 = vmatpush1.bf16.xpose.msra.mxu0 0
        %1147 = vmatprep.subr.bf16.mxu0 0
        %1148 = vmatpush1.bf16.xpose.msra.mxu0 0
        %1149 = vmatprep.subr.bf16.mxu0 0
        %1150 = vmatpush1.bf16.xpose.msra.mxu0 0
        %1151 = vmatprep.subr.bf16.mxu0 0
        %1152 = vmatpush1.bf16.xpose.msra.mxu0 0
        %1153 = vmatprep.subr.bf16.mxu0 0
        %1154 = vmatpush1.bf16.xpose.msra.mxu0 0
        %1155 = vmatprep.subr.bf16.mxu0 0
        %1156 = vmatpush1.bf16.xpose.msra.mxu0 0
        %1157 = vmatprep.subr.bf16.mxu0 0
        %1158 = vmatpush1.bf16.xpose.msra.mxu0 0
        %1159 = vmatprep.mubr.bf16.mxu0 0
        %1160 = vmatmul.mubr.bf16.gmra.mrb[0].mxu0 %v1122
        %v1161 = vpop.f32.mrb[0].mxu0
        %v1162 = vadd.f32 0.0, %v1161
        %v1163 = vpop.f32.mrb[0].mxu0
        %v1164 = vpop.f32.mrb[0].mxu0
        %v1165 = vadd.f32 0.0, %v1164
        %v1166 = vpop.f32.mrb[0].mxu0
        %1167 = vdwg.mxu0
        %v1169 = vsel %vm1026, %v989, 0
        %v1172 = vsel %vm1026, %v993, 0
        %1174 = vmatprep.subr.bf16.mxu0 0
        %1175 = vmatpush1.bf16.xpose.msra.mxu0 %v1172
        %1176 = vmatprep.subr.bf16.mxu0 0
        %1177 = vmatpush1.bf16.xpose.msra.mxu0 0
        %1178 = vmatprep.subr.bf16.mxu0 0
        %1179 = vmatpush1.bf16.xpose.msra.mxu0 0
        %1180 = vmatprep.subr.bf16.mxu0 0
        %1181 = vmatpush1.bf16.xpose.msra.mxu0 0
        %1182 = vmatprep.subr.bf16.mxu0 0
        %1183 = vmatpush1.bf16.xpose.msra.mxu0 0
        %1184 = vmatprep.subr.bf16.mxu0 0
        %1185 = vmatpush1.bf16.xpose.msra.mxu0 0
        %1186 = vmatprep.subr.bf16.mxu0 0
        %1187 = vmatpush1.bf16.xpose.msra.mxu0 0
        %1188 = vmatprep.subr.bf16.mxu0 0
        %1189 = vmatpush1.bf16.xpose.msra.mxu0 0
        %1190 = vmatprep.subr.bf16.mxu0 0
        %1191 = vmatpush1.bf16.xpose.msra.mxu0 0
        %1192 = vmatprep.subr.bf16.mxu0 0
        %1193 = vmatpush1.bf16.xpose.msra.mxu0 0
        %1194 = vmatprep.subr.bf16.mxu0 0
        %1195 = vmatpush1.bf16.xpose.msra.mxu0 0
        %1196 = vmatprep.subr.bf16.mxu0 0
        %1197 = vmatpush1.bf16.xpose.msra.mxu0 0
        %1198 = vmatprep.subr.bf16.mxu0 0
        %1199 = vmatpush1.bf16.xpose.msra.mxu0 0
        %1200 = vmatprep.subr.bf16.mxu0 0
        %1201 = vmatpush1.bf16.xpose.msra.mxu0 0
        %1202 = vmatprep.subr.bf16.mxu0 0
        %1203 = vmatpush1.bf16.xpose.msra.mxu0 0
        %1204 = vmatprep.subr.bf16.mxu0 0
        %1205 = vmatpush1.bf16.xpose.msra.mxu0 0
        %1206 = vmatprep.mubr.bf16.mxu0 0
        %1207 = vmatmul.mubr.bf16.gmra.mrb[0].mxu0 %v1169
        %v1208 = vpop.f32.mrb[0].mxu0
        %v1209 = vadd.f32 0.0, %v1208
        %v1210 = vpop.f32.mrb[0].mxu0
        %v1211 = vpop.f32.mrb[0].mxu0
        %v1212 = vadd.f32 0.0, %v1211
        %v1213 = vpop.f32.mrb[0].mxu0
        %1214 = vdwg.mxu0
        %v1215 = vmul.f32 %v1068, 0.125
        %v1216 = vmul.f32 %v1071, 0.125
        %v1217 = vmul.f32 %v1115, 0.125
        %v1218 = vmul.f32 %v1118, 0.125
        %v1219 = vmul.f32 %v1162, 0.125
        %v1220 = vmul.f32 %v1165, 0.125
        %v1221 = vmul.f32 %v1209, 0.125
        %v1222 = vmul.f32 %v1212, 0.125
        %v1223 = vadd.f32 %v1215, %v1009
        %v1224 = vadd.f32 %v1216, %v1009
        %v1225 = vadd.f32 %v1217, %v1013
        %v1226 = vadd.f32 %v1218, %v1013
        %v1227 = vadd.f32 %v1219, %v1017
        %v1228 = vadd.f32 %v1220, %v1017
        %v1229 = vadd.f32 %v1221, %v1021
        %v1230 = vadd.f32 %v1222, %v1021
        %vm1231 = vcmask 130048
        %v1232 = vsel %vm1231, %v1223, -inf
        %1233 = vmax.xlane.f32.xlu0 %v1232
        %v1234 = vpop.xlane.xlu0 %1233
        %v1235 = vsel %vm1231, %v1224, -inf
        %1236 = vmax.xlane.f32.xlu0 %v1235
        %v1237 = vpop.xlane.xlu0 %1236
        %v1238 = vsel %vm1231, %v1225, -inf
        %1239 = vmax.xlane.f32.xlu0 %v1238
        %v1240 = vpop.xlane.xlu0 %1239
        %v1241 = vsel %vm1231, %v1226, -inf
        %1242 = vmax.xlane.f32.xlu0 %v1241
        %v1243 = vpop.xlane.xlu0 %1242
        %v1244 = vsel %vm1231, %v1227, -inf
        %1245 = vmax.xlane.f32.xlu0 %v1244
        %v1246 = vpop.xlane.xlu0 %1245
        %v1247 = vsel %vm1231, %v1228, -inf
        %1248 = vmax.xlane.f32.xlu0 %v1247
        %v1249 = vpop.xlane.xlu0 %1248
        %v1250 = vsel %vm1231, %v1229, -inf
        %1251 = vmax.xlane.f32.xlu0 %v1250
        %v1252 = vpop.xlane.xlu0 %1251
        %v1253 = vsel %vm1231, %v1230, -inf
        %1254 = vmax.xlane.f32.xlu0 %v1253
        %v1255 = vpop.xlane.xlu0 %1254
        %v1256 = vsub.f32 %v1223, %v1234
        %v1257 = vsub.f32 %v1224, %v1237
        %v1258 = vsub.f32 %v1225, %v1240
        %v1259 = vsub.f32 %v1226, %v1243
        %v1260 = vsub.f32 %v1227, %v1246
        %v1261 = vsub.f32 %v1228, %v1249
        %v1262 = vsub.f32 %v1229, %v1252
        %v1263 = vsub.f32 %v1230, %v1255
        %v1264 = vmul.f32 %v1256, 1.442695
        %v1265 = vpow.pop %v1264
        %v1266 = vmul.f32 %v1257, 1.442695
        %v1267 = vpow.pop %v1266
        %v1268 = vmul.f32 %v1258, 1.442695
        %v1269 = vpow.pop %v1268
        %v1270 = vmul.f32 %v1259, 1.442695
        %v1271 = vpow.pop %v1270
        %v1272 = vmul.f32 %v1260, 1.442695
        %v1273 = vpow.pop %v1272
        %v1274 = vmul.f32 %v1261, 1.442695
        %v1275 = vpow.pop %v1274
        %v1276 = vmul.f32 %v1262, 1.442695
        %v1277 = vpow.pop %v1276
        %v1278 = vmul.f32 %v1263, 1.442695
        %v1279 = vpow.pop %v1278
        %v1280 = vsel %vm1231, %v1265, 0.0
        %1281 = vadd.xlane.f32.xlu0 %v1280
        %v1282 = vpop.xlane.xlu0 %1281
        %v1283 = vsel %vm1231, %v1267, 0.0
        %1284 = vadd.xlane.f32.xlu0 %v1283
        %v1285 = vpop.xlane.xlu0 %1284
        %v1286 = vsel %vm1231, %v1269, 0.0
        %1287 = vadd.xlane.f32.xlu0 %v1286
        %v1288 = vpop.xlane.xlu0 %1287
        %v1289 = vsel %vm1231, %v1271, 0.0
        %1290 = vadd.xlane.f32.xlu0 %v1289
        %v1291 = vpop.xlane.xlu0 %1290
        %v1292 = vsel %vm1231, %v1273, 0.0
        %1293 = vadd.xlane.f32.xlu0 %v1292
        %v1294 = vpop.xlane.xlu0 %1293
        %v1295 = vsel %vm1231, %v1275, 0.0
        %1296 = vadd.xlane.f32.xlu0 %v1295
        %v1297 = vpop.xlane.xlu0 %1296
        %v1298 = vsel %vm1231, %v1277, 0.0
        %1299 = vadd.xlane.f32.xlu0 %v1298
        %v1300 = vpop.xlane.xlu0 %1299
        %v1301 = vsel %vm1231, %v1279, 0.0
        %1302 = vadd.xlane.f32.xlu0 %v1301
        %v1303 = vpop.xlane.xlu0 %1302
        %v1304 = vrcp.pop %v1282
        %v1305 = vrcp.pop %v1285
        %v1306 = vrcp.pop %v1288
        %v1307 = vrcp.pop %v1291
        %v1308 = vrcp.pop %v1294
        %v1309 = vrcp.pop %v1297
        %v1310 = vrcp.pop %v1300
        %v1311 = vrcp.pop %v1303
        %v1312 = vmul.f32 %v1265, %v1304
        %v1313 = vmul.f32 %v1267, %v1305
        %v1314 = vmul.f32 %v1269, %v1306
        %v1315 = vmul.f32 %v1271, %v1307
        %v1316 = vmul.f32 %v1273, %v1308
        %v1317 = vmul.f32 %v1275, %v1309
        %v1318 = vmul.f32 %v1277, %v1310
        %v1319 = vmul.f32 %v1279, %v1311
        %v1320 = vpack.c.bf16 %v1313, %v1312
        %v1321 = vpack.c.bf16 %v1315, %v1314
        %v1322 = vpack.c.bf16 %v1317, %v1316
        %v1323 = vpack.c.bf16 %v1319, %v1318
        %v1325 = vsel %vm1231, %v1320, 0
        %1327 = vmatprep.subr.bf16.mxu0 0
        %1328 = vmatpush1.bf16.msra.mxu0 %v994
        %1329 = vmatprep.subr.bf16.mxu0 0
        %1330 = vmatpush1.bf16.msra.mxu0 0
        %1331 = vmatprep.subr.bf16.mxu0 0
        %1332 = vmatpush1.bf16.msra.mxu0 0
        %1333 = vmatprep.subr.bf16.mxu0 0
        %1334 = vmatpush1.bf16.msra.mxu0 0
        %1335 = vmatprep.subr.bf16.mxu0 0
        %1336 = vmatpush1.bf16.msra.mxu0 0
        %1337 = vmatprep.subr.bf16.mxu0 0
        %1338 = vmatpush1.bf16.msra.mxu0 0
        %1339 = vmatprep.subr.bf16.mxu0 0
        %1340 = vmatpush1.bf16.msra.mxu0 0
        %1341 = vmatprep.subr.bf16.mxu0 0
        %1342 = vmatpush1.bf16.msra.mxu0 0
        %1343 = vmatprep.subr.bf16.mxu0 0
        %1344 = vmatpush1.bf16.msra.mxu0 0
        %1345 = vmatprep.subr.bf16.mxu0 0
        %1346 = vmatpush1.bf16.msra.mxu0 0
        %1347 = vmatprep.subr.bf16.mxu0 0
        %1348 = vmatpush1.bf16.msra.mxu0 0
        %1349 = vmatprep.subr.bf16.mxu0 0
        %1350 = vmatpush1.bf16.msra.mxu0 0
        %1351 = vmatprep.subr.bf16.mxu0 0
        %1352 = vmatpush1.bf16.msra.mxu0 0
        %1353 = vmatprep.subr.bf16.mxu0 0
        %1354 = vmatpush1.bf16.msra.mxu0 0
        %1355 = vmatprep.subr.bf16.mxu0 0
        %1356 = vmatpush1.bf16.msra.mxu0 0
        %1357 = vmatprep.subr.bf16.mxu0 0
        %1358 = vmatpush1.bf16.msra.mxu0 0
        %1359 = vmatprep.mubr.bf16.mxu0 0
        %1360 = vmatmul.mubr.bf16.gmra.mrb[0].mxu0 %v1325
        %v1361 = vpop.f32.mrb[0].mxu0
        %v1362 = vadd.f32 0.0, %v1361
        %v1363 = vpop.f32.mrb[0].mxu0
        %v1364 = vpop.f32.mrb[0].mxu0
        %v1365 = vadd.f32 0.0, %v1364
        %v1366 = vpop.f32.mrb[0].mxu0
        %1367 = vdwg.mxu0
        %v1369 = vsel %vm1231, %v1321, 0
        %1371 = vmatprep.subr.bf16.mxu0 0
        %1372 = vmatpush1.bf16.msra.mxu0 %v995
        %1373 = vmatprep.subr.bf16.mxu0 0
        %1374 = vmatpush1.bf16.msra.mxu0 0
        %1375 = vmatprep.subr.bf16.mxu0 0
        %1376 = vmatpush1.bf16.msra.mxu0 0
        %1377 = vmatprep.subr.bf16.mxu0 0
        %1378 = vmatpush1.bf16.msra.mxu0 0
        %1379 = vmatprep.subr.bf16.mxu0 0
        %1380 = vmatpush1.bf16.msra.mxu0 0
        %1381 = vmatprep.subr.bf16.mxu0 0
        %1382 = vmatpush1.bf16.msra.mxu0 0
        %1383 = vmatprep.subr.bf16.mxu0 0
        %1384 = vmatpush1.bf16.msra.mxu0 0
        %1385 = vmatprep.subr.bf16.mxu0 0
        %1386 = vmatpush1.bf16.msra.mxu0 0
        %1387 = vmatprep.subr.bf16.mxu0 0
        %1388 = vmatpush1.bf16.msra.mxu0 0
        %1389 = vmatprep.subr.bf16.mxu0 0
        %1390 = vmatpush1.bf16.msra.mxu0 0
        %1391 = vmatprep.subr.bf16.mxu0 0
        %1392 = vmatpush1.bf16.msra.mxu0 0
        %1393 = vmatprep.subr.bf16.mxu0 0
        %1394 = vmatpush1.bf16.msra.mxu0 0
        %1395 = vmatprep.subr.bf16.mxu0 0
        %1396 = vmatpush1.bf16.msra.mxu0 0
        %1397 = vmatprep.subr.bf16.mxu0 0
        %1398 = vmatpush1.bf16.msra.mxu0 0
        %1399 = vmatprep.subr.bf16.mxu0 0
        %1400 = vmatpush1.bf16.msra.mxu0 0
        %1401 = vmatprep.subr.bf16.mxu0 0
        %1402 = vmatpush1.bf16.msra.mxu0 0
        %1403 = vmatprep.mubr.bf16.mxu0 0
        %1404 = vmatmul.mubr.bf16.gmra.mrb[0].mxu0 %v1369
        %v1405 = vpop.f32.mrb[0].mxu0
        %v1406 = vadd.f32 0.0, %v1405
        %v1407 = vpop.f32.mrb[0].mxu0
        %v1408 = vpop.f32.mrb[0].mxu0
        %v1409 = vadd.f32 0.0, %v1408
        %v1410 = vpop.f32.mrb[0].mxu0
        %1411 = vdwg.mxu0
        %v1413 = vsel %vm1231, %v1322, 0
        %1415 = vmatprep.subr.bf16.mxu0 0
        %1416 = vmatpush1.bf16.msra.mxu0 %v996
        %1417 = vmatprep.subr.bf16.mxu0 0
        %1418 = vmatpush1.bf16.msra.mxu0 0
        %1419 = vmatprep.subr.bf16.mxu0 0
        %1420 = vmatpush1.bf16.msra.mxu0 0
        %1421 = vmatprep.subr.bf16.mxu0 0
        %1422 = vmatpush1.bf16.msra.mxu0 0
        %1423 = vmatprep.subr.bf16.mxu0 0
        %1424 = vmatpush1.bf16.msra.mxu0 0
        %1425 = vmatprep.subr.bf16.mxu0 0
        %1426 = vmatpush1.bf16.msra.mxu0 0
        %1427 = vmatprep.subr.bf16.mxu0 0
        %1428 = vmatpush1.bf16.msra.mxu0 0
        %1429 = vmatprep.subr.bf16.mxu0 0
        %1430 = vmatpush1.bf16.msra.mxu0 0
        %1431 = vmatprep.subr.bf16.mxu0 0
        %1432 = vmatpush1.bf16.msra.mxu0 0
        %1433 = vmatprep.subr.bf16.mxu0 0
        %1434 = vmatpush1.bf16.msra.mxu0 0
        %1435 = vmatprep.subr.bf16.mxu0 0
        %1436 = vmatpush1.bf16.msra.mxu0 0
        %1437 = vmatprep.subr.bf16.mxu0 0
        %1438 = vmatpush1.bf16.msra.mxu0 0
        %1439 = vmatprep.subr.bf16.mxu0 0
        %1440 = vmatpush1.bf16.msra.mxu0 0
        %1441 = vmatprep.subr.bf16.mxu0 0
        %1442 = vmatpush1.bf16.msra.mxu0 0
        %1443 = vmatprep.subr.bf16.mxu0 0
        %1444 = vmatpush1.bf16.msra.mxu0 0
        %1445 = vmatprep.subr.bf16.mxu0 0
        %1446 = vmatpush1.bf16.msra.mxu0 0
        %1447 = vmatprep.mubr.bf16.mxu0 0
        %1448 = vmatmul.mubr.bf16.gmra.mrb[0].mxu0 %v1413
        %v1449 = vpop.f32.mrb[0].mxu0
        %v1450 = vadd.f32 0.0, %v1449
        %v1451 = vpop.f32.mrb[0].mxu0
        %v1452 = vpop.f32.mrb[0].mxu0
        %v1453 = vadd.f32 0.0, %v1452
        %v1454 = vpop.f32.mrb[0].mxu0
        %1455 = vdwg.mxu0
        %v1457 = vsel %vm1231, %v1323, 0
        %1459 = vmatprep.subr.bf16.mxu0 0
        %1460 = vmatpush1.bf16.msra.mxu0 %v997
        %1461 = vmatprep.subr.bf16.mxu0 0
        %1462 = vmatpush1.bf16.msra.mxu0 0
        %1463 = vmatprep.subr.bf16.mxu0 0
        %1464 = vmatpush1.bf16.msra.mxu0 0
        %1465 = vmatprep.subr.bf16.mxu0 0
        %1466 = vmatpush1.bf16.msra.mxu0 0
        %1467 = vmatprep.subr.bf16.mxu0 0
        %1468 = vmatpush1.bf16.msra.mxu0 0
        %1469 = vmatprep.subr.bf16.mxu0 0
        %1470 = vmatpush1.bf16.msra.mxu0 0
        %1471 = vmatprep.subr.bf16.mxu0 0
        %1472 = vmatpush1.bf16.msra.mxu0 0
        %1473 = vmatprep.subr.bf16.mxu0 0
        %1474 = vmatpush1.bf16.msra.mxu0 0
        %1475 = vmatprep.subr.bf16.mxu0 0
        %1476 = vmatpush1.bf16.msra.mxu0 0
        %1477 = vmatprep.subr.bf16.mxu0 0
        %1478 = vmatpush1.bf16.msra.mxu0 0
        %1479 = vmatprep.subr.bf16.mxu0 0
        %1480 = vmatpush1.bf16.msra.mxu0 0
        %1481 = vmatprep.subr.bf16.mxu0 0
        %1482 = vmatpush1.bf16.msra.mxu0 0
        %1483 = vmatprep.subr.bf16.mxu0 0
        %1484 = vmatpush1.bf16.msra.mxu0 0
        %1485 = vmatprep.subr.bf16.mxu0 0
        %1486 = vmatpush1.bf16.msra.mxu0 0
        %1487 = vmatprep.subr.bf16.mxu0 0
        %1488 = vmatpush1.bf16.msra.mxu0 0
        %1489 = vmatprep.subr.bf16.mxu0 0
        %1490 = vmatpush1.bf16.msra.mxu0 0
        %1491 = vmatprep.mubr.bf16.mxu0 0
        %1492 = vmatmul.mubr.bf16.gmra.mrb[0].mxu0 %v1457
        %v1493 = vpop.f32.mrb[0].mxu0
        %v1494 = vadd.f32 0.0, %v1493
        %v1495 = vpop.f32.mrb[0].mxu0
        %v1496 = vpop.f32.mrb[0].mxu0
        %v1497 = vadd.f32 0.0, %v1496
        %v1498 = vpop.f32.mrb[0].mxu0
        %1499 = vdwg.mxu0
        %v1500 = vpack.c.bf16 %v1365, %v1362
        %v1501 = vpack.c.bf16 %v1409, %v1406
        %v1502 = vpack.c.bf16 %v1453, %v1450
        %v1503 = vpack.c.bf16 %v1497, %v1494
        %1505 = vrot.lane.b32.xlu0 %v986, 64
        %v1506 = vpop.permute.xlu0 %1505
        %1508 = vrot.lane.b32.xlu0 %v990, 64
        %v1509 = vpop.permute.xlu0 %1508
        %v1511 = vsel %vm1026, %v1506, 0
        %v1514 = vsel %vm1026, %v1509, 0
        %1516 = vmatprep.subr.bf16.mxu0 0
        %1517 = vmatpush1.bf16.xpose.msra.mxu0 %v1514
        %1518 = vmatprep.subr.bf16.mxu0 0
        %1519 = vmatpush1.bf16.xpose.msra.mxu0 0
        %1520 = vmatprep.subr.bf16.mxu0 0
        %1521 = vmatpush1.bf16.xpose.msra.mxu0 0
        %1522 = vmatprep.subr.bf16.mxu0 0
        %1523 = vmatpush1.bf16.xpose.msra.mxu0 0
        %1524 = vmatprep.subr.bf16.mxu0 0
        %1525 = vmatpush1.bf16.xpose.msra.mxu0 0
        %1526 = vmatprep.subr.bf16.mxu0 0
        %1527 = vmatpush1.bf16.xpose.msra.mxu0 0
        %1528 = vmatprep.subr.bf16.mxu0 0
        %1529 = vmatpush1.bf16.xpose.msra.mxu0 0
        %1530 = vmatprep.subr.bf16.mxu0 0
        %1531 = vmatpush1.bf16.xpose.msra.mxu0 0
        %1532 = vmatprep.subr.bf16.mxu0 0
        %1533 = vmatpush1.bf16.xpose.msra.mxu0 0
        %1534 = vmatprep.subr.bf16.mxu0 0
        %1535 = vmatpush1.bf16.xpose.msra.mxu0 0
        %1536 = vmatprep.subr.bf16.mxu0 0
        %1537 = vmatpush1.bf16.xpose.msra.mxu0 0
        %1538 = vmatprep.subr.bf16.mxu0 0
        %1539 = vmatpush1.bf16.xpose.msra.mxu0 0
        %1540 = vmatprep.subr.bf16.mxu0 0
        %1541 = vmatpush1.bf16.xpose.msra.mxu0 0
        %1542 = vmatprep.subr.bf16.mxu0 0
        %1543 = vmatpush1.bf16.xpose.msra.mxu0 0
        %1544 = vmatprep.subr.bf16.mxu0 0
        %1545 = vmatpush1.bf16.xpose.msra.mxu0 0
        %1546 = vmatprep.subr.bf16.mxu0 0
        %1547 = vmatpush1.bf16.xpose.msra.mxu0 0
        %1548 = vmatprep.mubr.bf16.mxu0 0
        %1549 = vmatmul.mubr.bf16.gmra.mrb[0].mxu0 %v1511
        %v1550 = vpop.f32.mrb[0].mxu0
        %v1551 = vadd.f32 0.0, %v1550
        %v1552 = vpop.f32.mrb[0].mxu0
        %v1553 = vpop.f32.mrb[0].mxu0
        %v1554 = vadd.f32 0.0, %v1553
        %v1555 = vpop.f32.mrb[0].mxu0
        %1556 = vdwg.mxu0
        %1558 = vrot.lane.b32.xlu0 %v987, 64
        %v1559 = vpop.permute.xlu0 %1558
        %1561 = vrot.lane.b32.xlu0 %v991, 64
        %v1562 = vpop.permute.xlu0 %1561
        %v1564 = vsel %vm1026, %v1559, 0
        %v1567 = vsel %vm1026, %v1562, 0
        %1569 = vmatprep.subr.bf16.mxu0 0
        %1570 = vmatpush1.bf16.xpose.msra.mxu0 %v1567
        %1571 = vmatprep.subr.bf16.mxu0 0
        %1572 = vmatpush1.bf16.xpose.msra.mxu0 0
        %1573 = vmatprep.subr.bf16.mxu0 0
        %1574 = vmatpush1.bf16.xpose.msra.mxu0 0
        %1575 = vmatprep.subr.bf16.mxu0 0
        %1576 = vmatpush1.bf16.xpose.msra.mxu0 0
        %1577 = vmatprep.subr.bf16.mxu0 0
        %1578 = vmatpush1.bf16.xpose.msra.mxu0 0
        %1579 = vmatprep.subr.bf16.mxu0 0
        %1580 = vmatpush1.bf16.xpose.msra.mxu0 0
        %1581 = vmatprep.subr.bf16.mxu0 0
        %1582 = vmatpush1.bf16.xpose.msra.mxu0 0
        %1583 = vmatprep.subr.bf16.mxu0 0
        %1584 = vmatpush1.bf16.xpose.msra.mxu0 0
        %1585 = vmatprep.subr.bf16.mxu0 0
        %1586 = vmatpush1.bf16.xpose.msra.mxu0 0
        %1587 = vmatprep.subr.bf16.mxu0 0
        %1588 = vmatpush1.bf16.xpose.msra.mxu0 0
        %1589 = vmatprep.subr.bf16.mxu0 0
        %1590 = vmatpush1.bf16.xpose.msra.mxu0 0
        %1591 = vmatprep.subr.bf16.mxu0 0
        %1592 = vmatpush1.bf16.xpose.msra.mxu0 0
        %1593 = vmatprep.subr.bf16.mxu0 0
        %1594 = vmatpush1.bf16.xpose.msra.mxu0 0
        %1595 = vmatprep.subr.bf16.mxu0 0
        %1596 = vmatpush1.bf16.xpose.msra.mxu0 0
        %1597 = vmatprep.subr.bf16.mxu0 0
        %1598 = vmatpush1.bf16.xpose.msra.mxu0 0
        %1599 = vmatprep.subr.bf16.mxu0 0
        %1600 = vmatpush1.bf16.xpose.msra.mxu0 0
        %1601 = vmatprep.mubr.bf16.mxu0 0
        %1602 = vmatmul.mubr.bf16.gmra.mrb[0].mxu0 %v1564
        %v1603 = vpop.f32.mrb[0].mxu0
        %v1604 = vadd.f32 0.0, %v1603
        %v1605 = vpop.f32.mrb[0].mxu0
        %v1606 = vpop.f32.mrb[0].mxu0
        %v1607 = vadd.f32 0.0, %v1606
        %v1608 = vpop.f32.mrb[0].mxu0
        %1609 = vdwg.mxu0
        %1611 = vrot.lane.b32.xlu0 %v988, 64
        %v1612 = vpop.permute.xlu0 %1611
        %1614 = vrot.lane.b32.xlu0 %v992, 64
        %v1615 = vpop.permute.xlu0 %1614
        %v1617 = vsel %vm1026, %v1612, 0
        %v1620 = vsel %vm1026, %v1615, 0
        %1622 = vmatprep.subr.bf16.mxu0 0
        %1623 = vmatpush1.bf16.xpose.msra.mxu0 %v1620
        %1624 = vmatprep.subr.bf16.mxu0 0
        %1625 = vmatpush1.bf16.xpose.msra.mxu0 0
        %1626 = vmatprep.subr.bf16.mxu0 0
        %1627 = vmatpush1.bf16.xpose.msra.mxu0 0
        %1628 = vmatprep.subr.bf16.mxu0 0
        %1629 = vmatpush1.bf16.xpose.msra.mxu0 0
        %1630 = vmatprep.subr.bf16.mxu0 0
        %1631 = vmatpush1.bf16.xpose.msra.mxu0 0
        %1632 = vmatprep.subr.bf16.mxu0 0
        %1633 = vmatpush1.bf16.xpose.msra.mxu0 0
        %1634 = vmatprep.subr.bf16.mxu0 0
        %1635 = vmatpush1.bf16.xpose.msra.mxu0 0
        %1636 = vmatprep.subr.bf16.mxu0 0
        %1637 = vmatpush1.bf16.xpose.msra.mxu0 0
        %1638 = vmatprep.subr.bf16.mxu0 0
        %1639 = vmatpush1.bf16.xpose.msra.mxu0 0
        %1640 = vmatprep.subr.bf16.mxu0 0
        %1641 = vmatpush1.bf16.xpose.msra.mxu0 0
        %1642 = vmatprep.subr.bf16.mxu0 0
        %1643 = vmatpush1.bf16.xpose.msra.mxu0 0
        %1644 = vmatprep.subr.bf16.mxu0 0
        %1645 = vmatpush1.bf16.xpose.msra.mxu0 0
        %1646 = vmatprep.subr.bf16.mxu0 0
        %1647 = vmatpush1.bf16.xpose.msra.mxu0 0
        %1648 = vmatprep.subr.bf16.mxu0 0
        %1649 = vmatpush1.bf16.xpose.msra.mxu0 0
        %1650 = vmatprep.subr.bf16.mxu0 0
        %1651 = vmatpush1.bf16.xpose.msra.mxu0 0
        %1652 = vmatprep.subr.bf16.mxu0 0
        %1653 = vmatpush1.bf16.xpose.msra.mxu0 0
        %1654 = vmatprep.mubr.bf16.mxu0 0
        %1655 = vmatmul.mubr.bf16.gmra.mrb[0].mxu0 %v1617
        %v1656 = vpop.f32.mrb[0].mxu0
        %v1657 = vadd.f32 0.0, %v1656
        %v1658 = vpop.f32.mrb[0].mxu0
        %v1659 = vpop.f32.mrb[0].mxu0
        %v1660 = vadd.f32 0.0, %v1659
        %v1661 = vpop.f32.mrb[0].mxu0
        %1662 = vdwg.mxu0
        %1664 = vrot.lane.b32.xlu0 %v989, 64
        %v1665 = vpop.permute.xlu0 %1664
        %1667 = vrot.lane.b32.xlu0 %v993, 64
        %v1668 = vpop.permute.xlu0 %1667
        %v1670 = vsel %vm1026, %v1665, 0
        %v1673 = vsel %vm1026, %v1668, 0
        %1675 = vmatprep.subr.bf16.mxu0 0
        %1676 = vmatpush1.bf16.xpose.msra.mxu0 %v1673
        %1677 = vmatprep.subr.bf16.mxu0 0
        %1678 = vmatpush1.bf16.xpose.msra.mxu0 0
        %1679 = vmatprep.subr.bf16.mxu0 0
        %1680 = vmatpush1.bf16.xpose.msra.mxu0 0
        %1681 = vmatprep.subr.bf16.mxu0 0
        %1682 = vmatpush1.bf16.xpose.msra.mxu0 0
        %1683 = vmatprep.subr.bf16.mxu0 0
        %1684 = vmatpush1.bf16.xpose.msra.mxu0 0
        %1685 = vmatprep.subr.bf16.mxu0 0
        %1686 = vmatpush1.bf16.xpose.msra.mxu0 0
        %1687 = vmatprep.subr.bf16.mxu0 0
        %1688 = vmatpush1.bf16.xpose.msra.mxu0 0
        %1689 = vmatprep.subr.bf16.mxu0 0
        %1690 = vmatpush1.bf16.xpose.msra.mxu0 0
        %1691 = vmatprep.subr.bf16.mxu0 0
        %1692 = vmatpush1.bf16.xpose.msra.mxu0 0
        %1693 = vmatprep.subr.bf16.mxu0 0
        %1694 = vmatpush1.bf16.xpose.msra.mxu0 0
        %1695 = vmatprep.subr.bf16.mxu0 0
        %1696 = vmatpush1.bf16.xpose.msra.mxu0 0
        %1697 = vmatprep.subr.bf16.mxu0 0
        %1698 = vmatpush1.bf16.xpose.msra.mxu0 0
        %1699 = vmatprep.subr.bf16.mxu0 0
        %1700 = vmatpush1.bf16.xpose.msra.mxu0 0
        %1701 = vmatprep.subr.bf16.mxu0 0
        %1702 = vmatpush1.bf16.xpose.msra.mxu0 0
        %1703 = vmatprep.subr.bf16.mxu0 0
        %1704 = vmatpush1.bf16.xpose.msra.mxu0 0
        %1705 = vmatprep.subr.bf16.mxu0 0
        %1706 = vmatpush1.bf16.xpose.msra.mxu0 0
        %1707 = vmatprep.mubr.bf16.mxu0 0
        %1708 = vmatmul.mubr.bf16.gmra.mrb[0].mxu0 %v1670
        %v1709 = vpop.f32.mrb[0].mxu0
        %v1710 = vadd.f32 0.0, %v1709
        %v1711 = vpop.f32.mrb[0].mxu0
        %v1712 = vpop.f32.mrb[0].mxu0
        %v1713 = vadd.f32 0.0, %v1712
        %v1714 = vpop.f32.mrb[0].mxu0
        %1715 = vdwg.mxu0
        %v1716 = vmul.f32 %v1551, 0.125
        %v1717 = vmul.f32 %v1554, 0.125
        %v1718 = vmul.f32 %v1604, 0.125
        %v1719 = vmul.f32 %v1607, 0.125
        %v1720 = vmul.f32 %v1657, 0.125
        %v1721 = vmul.f32 %v1660, 0.125
        %v1722 = vmul.f32 %v1710, 0.125
        %v1723 = vmul.f32 %v1713, 0.125
        %v1724 = vadd.f32 %v1716, %v1009
        %v1725 = vadd.f32 %v1717, %v1009
        %v1726 = vadd.f32 %v1718, %v1013
        %v1727 = vadd.f32 %v1719, %v1013
        %v1728 = vadd.f32 %v1720, %v1017
        %v1729 = vadd.f32 %v1721, %v1017
        %v1730 = vadd.f32 %v1722, %v1021
        %v1731 = vadd.f32 %v1723, %v1021
        %v1732 = vsel %vm1231, %v1724, -inf
        %1733 = vmax.xlane.f32.xlu0 %v1732
        %v1734 = vpop.xlane.xlu0 %1733
        %v1735 = vsel %vm1231, %v1725, -inf
        %1736 = vmax.xlane.f32.xlu0 %v1735
        %v1737 = vpop.xlane.xlu0 %1736
        %v1738 = vsel %vm1231, %v1726, -inf
        %1739 = vmax.xlane.f32.xlu0 %v1738
        %v1740 = vpop.xlane.xlu0 %1739
        %v1741 = vsel %vm1231, %v1727, -inf
        %1742 = vmax.xlane.f32.xlu0 %v1741
        %v1743 = vpop.xlane.xlu0 %1742
        %v1744 = vsel %vm1231, %v1728, -inf
        %1745 = vmax.xlane.f32.xlu0 %v1744
        %v1746 = vpop.xlane.xlu0 %1745
        %v1747 = vsel %vm1231, %v1729, -inf
        %1748 = vmax.xlane.f32.xlu0 %v1747
        %v1749 = vpop.xlane.xlu0 %1748
        %v1750 = vsel %vm1231, %v1730, -inf
        %1751 = vmax.xlane.f32.xlu0 %v1750
        %v1752 = vpop.xlane.xlu0 %1751
        %v1753 = vsel %vm1231, %v1731, -inf
        %1754 = vmax.xlane.f32.xlu0 %v1753
        %v1755 = vpop.xlane.xlu0 %1754
        %v1756 = vsub.f32 %v1724, %v1734
        %v1757 = vsub.f32 %v1725, %v1737
        %v1758 = vsub.f32 %v1726, %v1740
        %v1759 = vsub.f32 %v1727, %v1743
        %v1760 = vsub.f32 %v1728, %v1746
        %v1761 = vsub.f32 %v1729, %v1749
        %v1762 = vsub.f32 %v1730, %v1752
        %v1763 = vsub.f32 %v1731, %v1755
        %v1764 = vmul.f32 %v1756, 1.442695
        %v1765 = vpow.pop %v1764
        %v1766 = vmul.f32 %v1757, 1.442695
        %v1767 = vpow.pop %v1766
        %v1768 = vmul.f32 %v1758, 1.442695
        %v1769 = vpow.pop %v1768
        %v1770 = vmul.f32 %v1759, 1.442695
        %v1771 = vpow.pop %v1770
        %v1772 = vmul.f32 %v1760, 1.442695
        %v1773 = vpow.pop %v1772
        %v1774 = vmul.f32 %v1761, 1.442695
        %v1775 = vpow.pop %v1774
        %v1776 = vmul.f32 %v1762, 1.442695
        %v1777 = vpow.pop %v1776
        %v1778 = vmul.f32 %v1763, 1.442695
        %v1779 = vpow.pop %v1778
        %v1780 = vsel %vm1231, %v1765, 0.0
        %1781 = vadd.xlane.f32.xlu0 %v1780
        %v1782 = vpop.xlane.xlu0 %1781
        %v1783 = vsel %vm1231, %v1767, 0.0
        %1784 = vadd.xlane.f32.xlu0 %v1783
        %v1785 = vpop.xlane.xlu0 %1784
        %v1786 = vsel %vm1231, %v1769, 0.0
        %1787 = vadd.xlane.f32.xlu0 %v1786
        %v1788 = vpop.xlane.xlu0 %1787
        %v1789 = vsel %vm1231, %v1771, 0.0
        %1790 = vadd.xlane.f32.xlu0 %v1789
        %v1791 = vpop.xlane.xlu0 %1790
        %v1792 = vsel %vm1231, %v1773, 0.0
        %1793 = vadd.xlane.f32.xlu0 %v1792
        %v1794 = vpop.xlane.xlu0 %1793
        %v1795 = vsel %vm1231, %v1775, 0.0
        %1796 = vadd.xlane.f32.xlu0 %v1795
        %v1797 = vpop.xlane.xlu0 %1796
        %v1798 = vsel %vm1231, %v1777, 0.0
        %1799 = vadd.xlane.f32.xlu0 %v1798
        %v1800 = vpop.xlane.xlu0 %1799
        %v1801 = vsel %vm1231, %v1779, 0.0
        %1802 = vadd.xlane.f32.xlu0 %v1801
        %v1803 = vpop.xlane.xlu0 %1802
        %v1804 = vrcp.pop %v1782
        %v1805 = vrcp.pop %v1785
        %v1806 = vrcp.pop %v1788
        %v1807 = vrcp.pop %v1791
        %v1808 = vrcp.pop %v1794
        %v1809 = vrcp.pop %v1797
        %v1810 = vrcp.pop %v1800
        %v1811 = vrcp.pop %v1803
        %v1812 = vmul.f32 %v1765, %v1804
        %v1813 = vmul.f32 %v1767, %v1805
        %v1814 = vmul.f32 %v1769, %v1806
        %v1815 = vmul.f32 %v1771, %v1807
        %v1816 = vmul.f32 %v1773, %v1808
        %v1817 = vmul.f32 %v1775, %v1809
        %v1818 = vmul.f32 %v1777, %v1810
        %v1819 = vmul.f32 %v1779, %v1811
        %v1820 = vpack.c.bf16 %v1813, %v1812
        %v1821 = vpack.c.bf16 %v1815, %v1814
        %v1822 = vpack.c.bf16 %v1817, %v1816
        %v1823 = vpack.c.bf16 %v1819, %v1818
        %1825 = vrot.lane.b32.xlu0 %v994, 64
        %v1826 = vpop.permute.xlu0 %1825
        %v1829 = vsel %vm1231, %v1820, 0
        %1831 = vmatprep.subr.bf16.mxu0 0
        %1832 = vmatpush1.bf16.msra.mxu0 %v1826
        %1833 = vmatprep.subr.bf16.mxu0 0
        %1834 = vmatpush1.bf16.msra.mxu0 0
        %1835 = vmatprep.subr.bf16.mxu0 0
        %1836 = vmatpush1.bf16.msra.mxu0 0
        %1837 = vmatprep.subr.bf16.mxu0 0
        %1838 = vmatpush1.bf16.msra.mxu0 0
        %1839 = vmatprep.subr.bf16.mxu0 0
        %1840 = vmatpush1.bf16.msra.mxu0 0
        %1841 = vmatprep.subr.bf16.mxu0 0
        %1842 = vmatpush1.bf16.msra.mxu0 0
        %1843 = vmatprep.subr.bf16.mxu0 0
        %1844 = vmatpush1.bf16.msra.mxu0 0
        %1845 = vmatprep.subr.bf16.mxu0 0
        %1846 = vmatpush1.bf16.msra.mxu0 0
        %1847 = vmatprep.subr.bf16.mxu0 0
        %1848 = vmatpush1.bf16.msra.mxu0 0
        %1849 = vmatprep.subr.bf16.mxu0 0
        %1850 = vmatpush1.bf16.msra.mxu0 0
        %1851 = vmatprep.subr.bf16.mxu0 0
        %1852 = vmatpush1.bf16.msra.mxu0 0
        %1853 = vmatprep.subr.bf16.mxu0 0
        %1854 = vmatpush1.bf16.msra.mxu0 0
        %1855 = vmatprep.subr.bf16.mxu0 0
        %1856 = vmatpush1.bf16.msra.mxu0 0
        %1857 = vmatprep.subr.bf16.mxu0 0
        %1858 = vmatpush1.bf16.msra.mxu0 0
        %1859 = vmatprep.subr.bf16.mxu0 0
        %1860 = vmatpush1.bf16.msra.mxu0 0
        %1861 = vmatprep.subr.bf16.mxu0 0
        %1862 = vmatpush1.bf16.msra.mxu0 0
        %1863 = vmatprep.mubr.bf16.mxu0 0
        %1864 = vmatmul.mubr.bf16.gmra.mrb[0].mxu0 %v1829
        %v1865 = vpop.f32.mrb[0].mxu0
        %v1866 = vadd.f32 0.0, %v1865
        %v1867 = vpop.f32.mrb[0].mxu0
        %v1868 = vpop.f32.mrb[0].mxu0
        %v1869 = vadd.f32 0.0, %v1868
        %v1870 = vpop.f32.mrb[0].mxu0
        %1871 = vdwg.mxu0
        %1873 = vrot.lane.b32.xlu0 %v995, 64
        %v1874 = vpop.permute.xlu0 %1873
        %v1877 = vsel %vm1231, %v1821, 0
        %1879 = vmatprep.subr.bf16.mxu0 0
        %1880 = vmatpush1.bf16.msra.mxu0 %v1874
        %1881 = vmatprep.subr.bf16.mxu0 0
        %1882 = vmatpush1.bf16.msra.mxu0 0
        %1883 = vmatprep.subr.bf16.mxu0 0
        %1884 = vmatpush1.bf16.msra.mxu0 0
        %1885 = vmatprep.subr.bf16.mxu0 0
        %1886 = vmatpush1.bf16.msra.mxu0 0
        %1887 = vmatprep.subr.bf16.mxu0 0
        %1888 = vmatpush1.bf16.msra.mxu0 0
        %1889 = vmatprep.subr.bf16.mxu0 0
        %1890 = vmatpush1.bf16.msra.mxu0 0
        %1891 = vmatprep.subr.bf16.mxu0 0
        %1892 = vmatpush1.bf16.msra.mxu0 0
        %1893 = vmatprep.subr.bf16.mxu0 0
        %1894 = vmatpush1.bf16.msra.mxu0 0
        %1895 = vmatprep.subr.bf16.mxu0 0
        %1896 = vmatpush1.bf16.msra.mxu0 0
        %1897 = vmatprep.subr.bf16.mxu0 0
        %1898 = vmatpush1.bf16.msra.mxu0 0
        %1899 = vmatprep.subr.bf16.mxu0 0
        %1900 = vmatpush1.bf16.msra.mxu0 0
        %1901 = vmatprep.subr.bf16.mxu0 0
        %1902 = vmatpush1.bf16.msra.mxu0 0
        %1903 = vmatprep.subr.bf16.mxu0 0
        %1904 = vmatpush1.bf16.msra.mxu0 0
        %1905 = vmatprep.subr.bf16.mxu0 0
        %1906 = vmatpush1.bf16.msra.mxu0 0
        %1907 = vmatprep.subr.bf16.mxu0 0
        %1908 = vmatpush1.bf16.msra.mxu0 0
        %1909 = vmatprep.subr.bf16.mxu0 0
        %1910 = vmatpush1.bf16.msra.mxu0 0
        %1911 = vmatprep.mubr.bf16.mxu0 0
        %1912 = vmatmul.mubr.bf16.gmra.mrb[0].mxu0 %v1877
        %v1913 = vpop.f32.mrb[0].mxu0
        %v1914 = vadd.f32 0.0, %v1913
        %v1915 = vpop.f32.mrb[0].mxu0
        %v1916 = vpop.f32.mrb[0].mxu0
        %v1917 = vadd.f32 0.0, %v1916
        %v1918 = vpop.f32.mrb[0].mxu0
        %1919 = vdwg.mxu0
        %1921 = vrot.lane.b32.xlu0 %v996, 64
        %v1922 = vpop.permute.xlu0 %1921
        %v1925 = vsel %vm1231, %v1822, 0
        %1927 = vmatprep.subr.bf16.mxu0 0
        %1928 = vmatpush1.bf16.msra.mxu0 %v1922
        %1929 = vmatprep.subr.bf16.mxu0 0
        %1930 = vmatpush1.bf16.msra.mxu0 0
        %1931 = vmatprep.subr.bf16.mxu0 0
        %1932 = vmatpush1.bf16.msra.mxu0 0
        %1933 = vmatprep.subr.bf16.mxu0 0
        %1934 = vmatpush1.bf16.msra.mxu0 0
        %1935 = vmatprep.subr.bf16.mxu0 0
        %1936 = vmatpush1.bf16.msra.mxu0 0
        %1937 = vmatprep.subr.bf16.mxu0 0
        %1938 = vmatpush1.bf16.msra.mxu0 0
        %1939 = vmatprep.subr.bf16.mxu0 0
        %1940 = vmatpush1.bf16.msra.mxu0 0
        %1941 = vmatprep.subr.bf16.mxu0 0
        %1942 = vmatpush1.bf16.msra.mxu0 0
        %1943 = vmatprep.subr.bf16.mxu0 0
        %1944 = vmatpush1.bf16.msra.mxu0 0
        %1945 = vmatprep.subr.bf16.mxu0 0
        %1946 = vmatpush1.bf16.msra.mxu0 0
        %1947 = vmatprep.subr.bf16.mxu0 0
        %1948 = vmatpush1.bf16.msra.mxu0 0
        %1949 = vmatprep.subr.bf16.mxu0 0
        %1950 = vmatpush1.bf16.msra.mxu0 0
        %1951 = vmatprep.subr.bf16.mxu0 0
        %1952 = vmatpush1.bf16.msra.mxu0 0
        %1953 = vmatprep.subr.bf16.mxu0 0
        %1954 = vmatpush1.bf16.msra.mxu0 0
        %1955 = vmatprep.subr.bf16.mxu0 0
        %1956 = vmatpush1.bf16.msra.mxu0 0
        %1957 = vmatprep.subr.bf16.mxu0 0
        %1958 = vmatpush1.bf16.msra.mxu0 0
        %1959 = vmatprep.mubr.bf16.mxu0 0
        %1960 = vmatmul.mubr.bf16.gmra.mrb[0].mxu0 %v1925
        %v1961 = vpop.f32.mrb[0].mxu0
        %v1962 = vadd.f32 0.0, %v1961
        %v1963 = vpop.f32.mrb[0].mxu0
        %v1964 = vpop.f32.mrb[0].mxu0
        %v1965 = vadd.f32 0.0, %v1964
        %v1966 = vpop.f32.mrb[0].mxu0
        %1967 = vdwg.mxu0
        %1969 = vrot.lane.b32.xlu0 %v997, 64
        %v1970 = vpop.permute.xlu0 %1969
        %v1973 = vsel %vm1231, %v1823, 0
        %1975 = vmatprep.subr.bf16.mxu0 0
        %1976 = vmatpush1.bf16.msra.mxu0 %v1970
        %1977 = vmatprep.subr.bf16.mxu0 0
        %1978 = vmatpush1.bf16.msra.mxu0 0
        %1979 = vmatprep.subr.bf16.mxu0 0
        %1980 = vmatpush1.bf16.msra.mxu0 0
        %1981 = vmatprep.subr.bf16.mxu0 0
        %1982 = vmatpush1.bf16.msra.mxu0 0
        %1983 = vmatprep.subr.bf16.mxu0 0
        %1984 = vmatpush1.bf16.msra.mxu0 0
        %1985 = vmatprep.subr.bf16.mxu0 0
        %1986 = vmatpush1.bf16.msra.mxu0 0
        %1987 = vmatprep.subr.bf16.mxu0 0
        %1988 = vmatpush1.bf16.msra.mxu0 0
        %1989 = vmatprep.subr.bf16.mxu0 0
        %1990 = vmatpush1.bf16.msra.mxu0 0
        %1991 = vmatprep.subr.bf16.mxu0 0
        %1992 = vmatpush1.bf16.msra.mxu0 0
        %1993 = vmatprep.subr.bf16.mxu0 0
        %1994 = vmatpush1.bf16.msra.mxu0 0
        %1995 = vmatprep.subr.bf16.mxu0 0
        %1996 = vmatpush1.bf16.msra.mxu0 0
        %1997 = vmatprep.subr.bf16.mxu0 0
        %1998 = vmatpush1.bf16.msra.mxu0 0
        %1999 = vmatprep.subr.bf16.mxu0 0
        %2000 = vmatpush1.bf16.msra.mxu0 0
        %2001 = vmatprep.subr.bf16.mxu0 0
        %2002 = vmatpush1.bf16.msra.mxu0 0
        %2003 = vmatprep.subr.bf16.mxu0 0
        %2004 = vmatpush1.bf16.msra.mxu0 0
        %2005 = vmatprep.subr.bf16.mxu0 0
        %2006 = vmatpush1.bf16.msra.mxu0 0
        %2007 = vmatprep.mubr.bf16.mxu0 0
        %2008 = vmatmul.mubr.bf16.gmra.mrb[0].mxu0 %v1973
        %v2009 = vpop.f32.mrb[0].mxu0
        %v2010 = vadd.f32 0.0, %v2009
        %v2011 = vpop.f32.mrb[0].mxu0
        %v2012 = vpop.f32.mrb[0].mxu0
        %v2013 = vadd.f32 0.0, %v2012
        %v2014 = vpop.f32.mrb[0].mxu0
        %2015 = vdwg.mxu0
        %v2016 = vpack.c.bf16 %v1869, %v1866
        %v2017 = vpack.c.bf16 %v1917, %v1914
        %v2018 = vpack.c.bf16 %v1965, %v1962
        %v2019 = vpack.c.bf16 %v2013, %v2010
        %v2028 = vunpack.c.l.b16 %v693
        %v2029 = vunpack.c.l.b16 %v694
        %v2030 = vunpack.c.l.b16 %v695
        %v2031 = vunpack.c.l.b16 %v696
        %v2032 = vunpack.c.l.b16 %v697
        %v2033 = vunpack.c.l.b16 %v698
        %v2034 = vunpack.c.l.b16 %v699
        %v2035 = vunpack.c.l.b16 %v700
        %v2036 = vpack.c.b16 %v2029, %v2028
        %v2037 = vpack.c.b16 %v2031, %v2030
        %v2038 = vpack.c.b16 %v2033, %v2032
        %v2039 = vpack.c.b16 %v2035, %v2034
        %v2045 = vsel %vm1026, %v2016, 0
        %v2048 = vsel %vm1026, %v2017, 0
        %v2051 = vsel %vm1026, %v2018, 0
        %v2054 = vsel %vm1026, %v2019, 0
        %2056 = vmatprep.subr.bf16.mxu0 0
        %2057 = vmatpush1.bf16.msra.mxu0 %v2036
        %2058 = vmatprep.subr.bf16.mxu0 0
        %2059 = vmatpush1.bf16.msra.mxu0 %v2037
        %2060 = vmatprep.subr.bf16.mxu0 0
        %2061 = vmatpush1.bf16.msra.mxu0 %v2038
        %2062 = vmatprep.subr.bf16.mxu0 0
        %2063 = vmatpush1.bf16.msra.mxu0 %v2039
        %2064 = vmatprep.subr.bf16.mxu0 0
        %2065 = vmatpush1.bf16.msra.mxu0 0
        %2066 = vmatprep.subr.bf16.mxu0 0
        %2067 = vmatpush1.bf16.msra.mxu0 0
        %2068 = vmatprep.subr.bf16.mxu0 0
        %2069 = vmatpush1.bf16.msra.mxu0 0
        %2070 = vmatprep.subr.bf16.mxu0 0
        %2071 = vmatpush1.bf16.msra.mxu0 0
        %2072 = vmatprep.subr.bf16.mxu0 0
        %2073 = vmatpush1.bf16.msra.mxu0 0
        %2074 = vmatprep.subr.bf16.mxu0 0
        %2075 = vmatpush1.bf16.msra.mxu0 0
        %2076 = vmatprep.subr.bf16.mxu0 0
        %2077 = vmatpush1.bf16.msra.mxu0 0
        %2078 = vmatprep.subr.bf16.mxu0 0
        %2079 = vmatpush1.bf16.msra.mxu0 0
        %2080 = vmatprep.subr.bf16.mxu0 0
        %2081 = vmatpush1.bf16.msra.mxu0 0
        %2082 = vmatprep.subr.bf16.mxu0 0
        %2083 = vmatpush1.bf16.msra.mxu0 0
        %2084 = vmatprep.subr.bf16.mxu0 0
        %2085 = vmatpush1.bf16.msra.mxu0 0
        %2086 = vmatprep.subr.bf16.mxu0 0
        %2087 = vmatpush1.bf16.msra.mxu0 0
        %2088 = vmatprep.mubr.bf16.mxu0 0
        %2089 = vmatmul.mubr.bf16.gmra.mrb[0].mxu0 %v2045
        %v2090 = vpop.f32.mrb[0].mxu0
        %v2091 = vadd.f32 0.0, %v2090
        %v2092 = vpop.f32.mrb[0].mxu0
        %v2093 = vpop.f32.mrb[0].mxu0
        %v2094 = vadd.f32 0.0, %v2093
        %v2095 = vpop.f32.mrb[0].mxu0
        %2096 = vmatprep.mubr.bf16.mxu0 0
        %2097 = vmatmul.mubr.bf16.gmra.mrb[0].mxu0 %v2048
        %v2098 = vpop.f32.mrb[0].mxu0
        %v2099 = vadd.f32 0.0, %v2098
        %v2100 = vpop.f32.mrb[0].mxu0
        %v2101 = vpop.f32.mrb[0].mxu0
        %v2102 = vadd.f32 0.0, %v2101
        %v2103 = vpop.f32.mrb[0].mxu0
        %2104 = vmatprep.mubr.bf16.mxu0 0
        %2105 = vmatmul.mubr.bf16.gmra.mrb[0].mxu0 %v2051
        %v2106 = vpop.f32.mrb[0].mxu0
        %v2107 = vadd.f32 0.0, %v2106
        %v2108 = vpop.f32.mrb[0].mxu0
        %v2109 = vpop.f32.mrb[0].mxu0
        %v2110 = vadd.f32 0.0, %v2109
        %v2111 = vpop.f32.mrb[0].mxu0
        %2112 = vmatprep.mubr.bf16.mxu0 0
        %2113 = vmatmul.mubr.bf16.gmra.mrb[0].mxu0 %v2054
        %v2114 = vpop.f32.mrb[0].mxu0
        %v2115 = vadd.f32 0.0, %v2114
        %v2116 = vpop.f32.mrb[0].mxu0
        %v2117 = vpop.f32.mrb[0].mxu0
        %v2118 = vadd.f32 0.0, %v2117
        %v2119 = vpop.f32.mrb[0].mxu0
        %2120 = vdwg.mxu0
        %v2129 = vunpack.c.l.b16 %v685
        %v2130 = vunpack.c.l.b16 %v686
        %v2131 = vunpack.c.l.b16 %v687
        %v2132 = vunpack.c.l.b16 %v688
        %v2133 = vunpack.c.l.b16 %v689
        %v2134 = vunpack.c.l.b16 %v690
        %v2135 = vunpack.c.l.b16 %v691
        %v2136 = vunpack.c.l.b16 %v692
        %v2137 = vpack.c.b16 %v2130, %v2129
        %v2138 = vpack.c.b16 %v2132, %v2131
        %v2139 = vpack.c.b16 %v2134, %v2133
        %v2140 = vpack.c.b16 %v2136, %v2135
        %v2146 = vsel %vm1026, %v1500, 0
        %v2149 = vsel %vm1026, %v1501, 0
        %v2152 = vsel %vm1026, %v1502, 0
        %v2155 = vsel %vm1026, %v1503, 0
        %2157 = vmatprep.subr.bf16.mxu0 0
        %2158 = vmatpush1.bf16.msra.mxu0 %v2137
        %2159 = vmatprep.subr.bf16.mxu0 0
        %2160 = vmatpush1.bf16.msra.mxu0 %v2138
        %2161 = vmatprep.subr.bf16.mxu0 0
        %2162 = vmatpush1.bf16.msra.mxu0 %v2139
        %2163 = vmatprep.subr.bf16.mxu0 0
        %2164 = vmatpush1.bf16.msra.mxu0 %v2140
        %2165 = vmatprep.subr.bf16.mxu0 0
        %2166 = vmatpush1.bf16.msra.mxu0 0
        %2167 = vmatprep.subr.bf16.mxu0 0
        %2168 = vmatpush1.bf16.msra.mxu0 0
        %2169 = vmatprep.subr.bf16.mxu0 0
        %2170 = vmatpush1.bf16.msra.mxu0 0
        %2171 = vmatprep.subr.bf16.mxu0 0
        %2172 = vmatpush1.bf16.msra.mxu0 0
        %2173 = vmatprep.subr.bf16.mxu0 0
        %2174 = vmatpush1.bf16.msra.mxu0 0
        %2175 = vmatprep.subr.bf16.mxu0 0
        %2176 = vmatpush1.bf16.msra.mxu0 0
        %2177 = vmatprep.subr.bf16.mxu0 0
        %2178 = vmatpush1.bf16.msra.mxu0 0
        %2179 = vmatprep.subr.bf16.mxu0 0
        %2180 = vmatpush1.bf16.msra.mxu0 0
        %2181 = vmatprep.subr.bf16.mxu0 0
        %2182 = vmatpush1.bf16.msra.mxu0 0
        %2183 = vmatprep.subr.bf16.mxu0 0
        %2184 = vmatpush1.bf16.msra.mxu0 0
        %2185 = vmatprep.subr.bf16.mxu0 0
        %2186 = vmatpush1.bf16.msra.mxu0 0
        %2187 = vmatprep.subr.bf16.mxu0 0
        %2188 = vmatpush1.bf16.msra.mxu0 0
        %2189 = vmatprep.mubr.bf16.mxu0 0
        %2190 = vmatmul.mubr.bf16.gmra.mrb[0].mxu0 %v2146
        %v2191 = vpop.f32.mrb[0].mxu0
        %v2192 = vadd.f32 %v2091, %v2191
        %v2193 = vpop.f32.mrb[0].mxu0
        %v2194 = vpop.f32.mrb[0].mxu0
        %v2195 = vadd.f32 %v2094, %v2194
        %v2196 = vpop.f32.mrb[0].mxu0
        %2197 = vmatprep.mubr.bf16.mxu0 0
        %2198 = vmatmul.mubr.bf16.gmra.mrb[0].mxu0 %v2149
        %v2199 = vpop.f32.mrb[0].mxu0
        %v2200 = vadd.f32 %v2099, %v2199
        %v2201 = vpop.f32.mrb[0].mxu0
        %v2202 = vpop.f32.mrb[0].mxu0
        %v2203 = vadd.f32 %v2102, %v2202
        %v2204 = vpop.f32.mrb[0].mxu0
        %2205 = vmatprep.mubr.bf16.mxu0 0
        %2206 = vmatmul.mubr.bf16.gmra.mrb[0].mxu0 %v2152
        %v2207 = vpop.f32.mrb[0].mxu0
        %v2208 = vadd.f32 %v2107, %v2207
        %v2209 = vpop.f32.mrb[0].mxu0
        %v2210 = vpop.f32.mrb[0].mxu0
        %v2211 = vadd.f32 %v2110, %v2210
        %v2212 = vpop.f32.mrb[0].mxu0
        %2213 = vmatprep.mubr.bf16.mxu0 0
        %2214 = vmatmul.mubr.bf16.gmra.mrb[0].mxu0 %v2155
        %v2215 = vpop.f32.mrb[0].mxu0
        %v2216 = vadd.f32 %v2115, %v2215
        %v2217 = vpop.f32.mrb[0].mxu0
        %v2218 = vpop.f32.mrb[0].mxu0
        %v2219 = vadd.f32 %v2118, %v2218
        %v2220 = vpop.f32.mrb[0].mxu0
        %2221 = vdwg.mxu0
        %v2222 = vlaneseq
        %v2223 = vshrl.u32 %v2222, 7
        %v2224 = vsub.s32 0, %v2223
        %v2225 = vrot.slane %v646, %v2224
        %v2226 = vadd.f32 %v2192, %v2225
        %v2227 = vadd.f32 %v2195, %v2225
        %v2228 = vadd.f32 %v2200, %v2225
        %v2229 = vadd.f32 %v2203, %v2225
        %v2230 = vadd.f32 %v2208, %v2225
        %v2231 = vadd.f32 %v2211, %v2225
        %v2232 = vadd.f32 %v2216, %v2225
        %v2233 = vadd.f32 %v2219, %v2225
        %v2234 = vadd.f32 %v632, %v2226
        %v2235 = vadd.f32 %v633, %v2227
        %v2236 = vadd.f32 %v634, %v2228
        %v2237 = vadd.f32 %v635, %v2229
        %v2238 = vadd.f32 %v636, %v2230
        %v2239 = vadd.f32 %v637, %v2231
        %v2240 = vadd.f32 %v638, %v2232
        %v2241 = vadd.f32 %v639, %v2233
        %2242 = vadd.xlane.f32.xlu0 %v2234
        %v2243 = vpop.xlane.xlu0 %2242
        %2244 = vadd.xlane.f32.xlu0 %v2235
        %v2245 = vpop.xlane.xlu0 %2244
        %2246 = vadd.xlane.f32.xlu0 %v2236
        %v2247 = vpop.xlane.xlu0 %2246
        %2248 = vadd.xlane.f32.xlu0 %v2237
        %v2249 = vpop.xlane.xlu0 %2248
        %2250 = vadd.xlane.f32.xlu0 %v2238
        %v2251 = vpop.xlane.xlu0 %2250
        %2252 = vadd.xlane.f32.xlu0 %v2239
        %v2253 = vpop.xlane.xlu0 %2252
        %2254 = vadd.xlane.f32.xlu0 %v2240
        %v2255 = vpop.xlane.xlu0 %2254
        %2256 = vadd.xlane.f32.xlu0 %v2241
        %v2257 = vpop.xlane.xlu0 %2256
        %v2258 = vrcp.pop 128.0
        %v2259 = vmul.f32 %v2243, %v2258
        %v2260 = vmul.f32 %v2245, %v2258
        %v2261 = vmul.f32 %v2247, %v2258
        %v2262 = vmul.f32 %v2249, %v2258
        %v2263 = vmul.f32 %v2251, %v2258
        %v2264 = vmul.f32 %v2253, %v2258
        %v2265 = vmul.f32 %v2255, %v2258
        %v2266 = vmul.f32 %v2257, %v2258
        %v2267 = vsub.f32 %v2234, %v2259
        %v2268 = vsub.f32 %v2235, %v2260
        %v2269 = vsub.f32 %v2236, %v2261
        %v2270 = vsub.f32 %v2237, %v2262
        %v2271 = vsub.f32 %v2238, %v2263
        %v2272 = vsub.f32 %v2239, %v2264
        %v2273 = vsub.f32 %v2240, %v2265
        %v2274 = vsub.f32 %v2241, %v2266
        %v2275 = vmul.f32 %v2267, %v2267
        %v2276 = vmul.f32 %v2268, %v2268
        %v2277 = vmul.f32 %v2269, %v2269
        %v2278 = vmul.f32 %v2270, %v2270
        %v2279 = vmul.f32 %v2271, %v2271
        %v2280 = vmul.f32 %v2272, %v2272
        %v2281 = vmul.f32 %v2273, %v2273
        %v2282 = vmul.f32 %v2274, %v2274
        %2283 = vadd.xlane.f32.xlu0 %v2275
        %v2284 = vpop.xlane.xlu0 %2283
        %2285 = vadd.xlane.f32.xlu0 %v2276
        %v2286 = vpop.xlane.xlu0 %2285
        %2287 = vadd.xlane.f32.xlu0 %v2277
        %v2288 = vpop.xlane.xlu0 %2287
        %2289 = vadd.xlane.f32.xlu0 %v2278
        %v2290 = vpop.xlane.xlu0 %2289
        %2291 = vadd.xlane.f32.xlu0 %v2279
        %v2292 = vpop.xlane.xlu0 %2291
        %2293 = vadd.xlane.f32.xlu0 %v2280
        %v2294 = vpop.xlane.xlu0 %2293
        %2295 = vadd.xlane.f32.xlu0 %v2281
        %v2296 = vpop.xlane.xlu0 %2295
        %2297 = vadd.xlane.f32.xlu0 %v2282
        %v2298 = vpop.xlane.xlu0 %2297
        %v2299 = vmul.f32 %v2284, %v2258
        %v2300 = vmul.f32 %v2286, %v2258
        %v2301 = vmul.f32 %v2288, %v2258
        %v2302 = vmul.f32 %v2290, %v2258
        %v2303 = vmul.f32 %v2292, %v2258
        %v2304 = vmul.f32 %v2294, %v2258
        %v2305 = vmul.f32 %v2296, %v2258
        %v2306 = vmul.f32 %v2298, %v2258
        %v2307 = vadd.f32 %v2299, 1e-12
        %v2308 = vadd.f32 %v2300, 1e-12
        %v2309 = vadd.f32 %v2301, 1e-12
        %v2310 = vadd.f32 %v2302, 1e-12
        %v2311 = vadd.f32 %v2303, 1e-12
        %v2312 = vadd.f32 %v2304, 1e-12
        %v2313 = vadd.f32 %v2305, 1e-12
        %v2314 = vadd.f32 %v2306, 1e-12
        %v2315 = vrsqrt.pop %v2307
        %v2316 = vrsqrt.pop %v2308
        %v2317 = vrsqrt.pop %v2309
        %v2318 = vrsqrt.pop %v2310
        %v2319 = vrsqrt.pop %v2311
        %v2320 = vrsqrt.pop %v2312
        %v2321 = vrsqrt.pop %v2313
        %v2322 = vrsqrt.pop %v2314
        %v2323 = vmul.f32 %v2267, %v2315
        %v2324 = vmul.f32 %v2268, %v2316
        %v2325 = vmul.f32 %v2269, %v2317
        %v2326 = vmul.f32 %v2270, %v2318
        %v2327 = vmul.f32 %v2271, %v2319
        %v2328 = vmul.f32 %v2272, %v2320
        %v2329 = vmul.f32 %v2273, %v2321
        %v2330 = vmul.f32 %v2274, %v2322
        %v2331 = vlaneseq
        %v2332 = vshrl.u32 %v2331, 7
        %v2333 = vsub.s32 2, %v2332
        %v2334 = vrot.slane %v646, %v2333
        %v2335 = vmul.f32 %v2323, %v2334
        %v2336 = vmul.f32 %v2324, %v2334
        %v2337 = vmul.f32 %v2325, %v2334
        %v2338 = vmul.f32 %v2326, %v2334
        %v2339 = vmul.f32 %v2327, %v2334
        %v2340 = vmul.f32 %v2328, %v2334
        %v2341 = vmul.f32 %v2329, %v2334
        %v2342 = vmul.f32 %v2330, %v2334
        %v2343 = vlaneseq
        %v2344 = vshrl.u32 %v2343, 7
        %v2345 = vsub.s32 3, %v2344
        %v2346 = vrot.slane %v646, %v2345
        %v2347 = vadd.f32 %v2335, %v2346
        %v2348 = vadd.f32 %v2336, %v2346
        %v2349 = vadd.f32 %v2337, %v2346
        %v2350 = vadd.f32 %v2338, %v2346
        %v2351 = vadd.f32 %v2339, %v2346
        %v2352 = vadd.f32 %v2340, %v2346
        %v2353 = vadd.f32 %v2341, %v2346
        %v2354 = vadd.f32 %v2342, %v2346
        %v2355 = vpack.c.bf16 %v2348, %v2347
        %v2356 = vpack.c.bf16 %v2350, %v2349
        %v2357 = vpack.c.bf16 %v2352, %v2351
        %v2358 = vpack.c.bf16 %v2354, %v2353
        %s2359 = smul.u32 %s30, 32
        %s2360 = smul.addr %s2359, 4
        %s2361 = scalar_lea.vmem %s7, %s2360
        %v2362 = vld [vmem:[%s2361] sm:$0xff]
        %v2363 = vld [vmem:[%s2361 + $0x8] sm:$0xff]
        %v2364 = vld [vmem:[%s2361 + $0x10] sm:$0xff]
        %v2365 = vld [vmem:[%s2361 + $0x18] sm:$0xff]
        %v2366 = vld [vmem:[%s2361 + $0x20] sm:$0xff]
        %v2367 = vld [vmem:[%s2361 + $0x28] sm:$0xff]
        %v2368 = vld [vmem:[%s2361 + $0x30] sm:$0xff]
        %v2369 = vld [vmem:[%s2361 + $0x38] sm:$0xff]
        %v2370 = vld [vmem:[%s2361 + $0x40] sm:$0xff]
        %v2371 = vld [vmem:[%s2361 + $0x48] sm:$0xff]
        %v2372 = vld [vmem:[%s2361 + $0x50] sm:$0xff]
        %v2373 = vld [vmem:[%s2361 + $0x58] sm:$0xff]
        %v2374 = vld [vmem:[%s2361 + $0x60] sm:$0xff]
        %v2375 = vld [vmem:[%s2361 + $0x68] sm:$0xff]
        %v2376 = vld [vmem:[%s2361 + $0x70] sm:$0xff]
        %v2377 = vld [vmem:[%s2361 + $0x78] sm:$0xff]
        %s2378 = smul.u32 %s30, 2
        %s2379 = scalar_lea.vmem [#allocation7], %s2378
        %v2380 = vld [vmem:[%s2379] sm:$0x3]
        %v2382 = vlaneseq
        %v2383 = vshrl.u32 %v2382, 7
        %v2384 = vsub.s32 0, %v2383
        %v2385 = vrot.slane %v2380, %v2384
        %v2386 = vlaneseq
        %v2387 = vshrl.u32 %v2386, 7
        %v2388 = vsub.s32 1, %v2387
        %v2389 = vrot.slane %v2380, %v2388
        %v2408 = vunpack.c.l.b16 %v2362
        %v2409 = vunpack.c.h.b16 %v2362
        %v2410 = vunpack.c.l.b16 %v2363
        %v2411 = vunpack.c.h.b16 %v2363
        %v2412 = vunpack.c.l.b16 %v2364
        %v2413 = vunpack.c.h.b16 %v2364
        %v2414 = vunpack.c.l.b16 %v2365
        %v2415 = vunpack.c.h.b16 %v2365
        %v2416 = vunpack.c.l.b16 %v2366
        %v2417 = vunpack.c.h.b16 %v2366
        %v2418 = vunpack.c.l.b16 %v2367
        %v2419 = vunpack.c.h.b16 %v2367
        %v2420 = vunpack.c.l.b16 %v2368
        %v2421 = vunpack.c.h.b16 %v2368
        %v2422 = vunpack.c.l.b16 %v2369
        %v2423 = vunpack.c.h.b16 %v2369
        %v2424 = vunpack.c.l.b16 %v2370
        %v2425 = vunpack.c.h.b16 %v2370
        %v2426 = vunpack.c.l.b16 %v2371
        %v2427 = vunpack.c.h.b16 %v2371
        %v2428 = vunpack.c.l.b16 %v2372
        %v2429 = vunpack.c.h.b16 %v2372
        %v2430 = vunpack.c.l.b16 %v2373
        %v2431 = vunpack.c.h.b16 %v2373
        %v2432 = vunpack.c.l.b16 %v2374
        %v2433 = vunpack.c.h.b16 %v2374
        %v2434 = vunpack.c.l.b16 %v2375
        %v2435 = vunpack.c.h.b16 %v2375
        %v2436 = vunpack.c.l.b16 %v2376
        %v2437 = vunpack.c.h.b16 %v2376
        %v2438 = vunpack.c.l.b16 %v2377
        %v2439 = vunpack.c.h.b16 %v2377
        %v2440 = vpack.c.b16 %v2410, %v2408
        %v2441 = vpack.c.b16 %v2411, %v2409
        %v2442 = vpack.c.b16 %v2414, %v2412
        %v2443 = vpack.c.b16 %v2415, %v2413
        %v2444 = vpack.c.b16 %v2418, %v2416
        %v2445 = vpack.c.b16 %v2419, %v2417
        %v2446 = vpack.c.b16 %v2422, %v2420
        %v2447 = vpack.c.b16 %v2423, %v2421
        %v2448 = vpack.c.b16 %v2426, %v2424
        %v2449 = vpack.c.b16 %v2427, %v2425
        %v2450 = vpack.c.b16 %v2430, %v2428
        %v2451 = vpack.c.b16 %v2431, %v2429
        %v2452 = vpack.c.b16 %v2434, %v2432
        %v2453 = vpack.c.b16 %v2435, %v2433
        %v2454 = vpack.c.b16 %v2438, %v2436
        %v2455 = vpack.c.b16 %v2439, %v2437
        %2472 = vmatprep.subr.bf16.mxu0 %v2441
        %2473 = vmatpush1.bf16.msra.mxu0 %v2440
        %2474 = vmatprep.subr.bf16.mxu0 %v2443
        %2475 = vmatpush1.bf16.msra.mxu0 %v2442
        %2476 = vmatprep.subr.bf16.mxu0 %v2445
        %2477 = vmatpush1.bf16.msra.mxu0 %v2444
        %2478 = vmatprep.subr.bf16.mxu0 %v2447
        %2479 = vmatpush1.bf16.msra.mxu0 %v2446
        %2480 = vmatprep.subr.bf16.mxu0 %v2449
        %2481 = vmatpush1.bf16.msra.mxu0 %v2448
        %2482 = vmatprep.subr.bf16.mxu0 %v2451
        %2483 = vmatpush1.bf16.msra.mxu0 %v2450
        %2484 = vmatprep.subr.bf16.mxu0 %v2453
        %2485 = vmatpush1.bf16.msra.mxu0 %v2452
        %2486 = vmatprep.subr.bf16.mxu0 %v2455
        %2487 = vmatpush1.bf16.msra.mxu0 %v2454
        %2488 = vmatprep.subr.bf16.mxu0 0
        %2489 = vmatpush1.bf16.msra.mxu0 0
        %2490 = vmatprep.subr.bf16.mxu0 0
        %2491 = vmatpush1.bf16.msra.mxu0 0
        %2492 = vmatprep.subr.bf16.mxu0 0
        %2493 = vmatpush1.bf16.msra.mxu0 0
        %2494 = vmatprep.subr.bf16.mxu0 0
        %2495 = vmatpush1.bf16.msra.mxu0 0
        %2496 = vmatprep.subr.bf16.mxu0 0
        %2497 = vmatpush1.bf16.msra.mxu0 0
        %2498 = vmatprep.subr.bf16.mxu0 0
        %2499 = vmatpush1.bf16.msra.mxu0 0
        %2500 = vmatprep.subr.bf16.mxu0 0
        %2501 = vmatpush1.bf16.msra.mxu0 0
        %2502 = vmatprep.subr.bf16.mxu0 0
        %2503 = vmatpush1.bf16.msra.mxu0 0
        %2504 = vmatprep.mubr.bf16.mxu0 0
        %2505 = vmatmul.mubr.bf16.gmra.mrb[0].mxu0 %v2355
        %v2506 = vpop.f32.mrb[0].mxu0
        %v2507 = vadd.f32 %v2385, %v2506
        %v2508 = vpop.f32.mrb[0].mxu0
        %v2509 = vadd.f32 %v2389, %v2508
        %v2510 = vpop.f32.mrb[0].mxu0
        %v2511 = vadd.f32 %v2385, %v2510
        %v2512 = vpop.f32.mrb[0].mxu0
        %v2513 = vadd.f32 %v2389, %v2512
        %2514 = vmatprep.mubr.bf16.mxu0 0
        %2515 = vmatmul.mubr.bf16.gmra.mrb[0].mxu0 %v2356
        %v2516 = vpop.f32.mrb[0].mxu0
        %v2517 = vadd.f32 %v2385, %v2516
        %v2518 = vpop.f32.mrb[0].mxu0
        %v2519 = vadd.f32 %v2389, %v2518
        %v2520 = vpop.f32.mrb[0].mxu0
        %v2521 = vadd.f32 %v2385, %v2520
        %v2522 = vpop.f32.mrb[0].mxu0
        %v2523 = vadd.f32 %v2389, %v2522
        %2524 = vmatprep.mubr.bf16.mxu0 0
        %2525 = vmatmul.mubr.bf16.gmra.mrb[0].mxu0 %v2357
        %v2526 = vpop.f32.mrb[0].mxu0
        %v2527 = vadd.f32 %v2385, %v2526
        %v2528 = vpop.f32.mrb[0].mxu0
        %v2529 = vadd.f32 %v2389, %v2528
        %v2530 = vpop.f32.mrb[0].mxu0
        %v2531 = vadd.f32 %v2385, %v2530
        %v2532 = vpop.f32.mrb[0].mxu0
        %v2533 = vadd.f32 %v2389, %v2532
        %2534 = vmatprep.mubr.bf16.mxu0 0
        %2535 = vmatmul.mubr.bf16.gmra.mrb[0].mxu0 %v2358
        %v2536 = vpop.f32.mrb[0].mxu0
        %v2537 = vadd.f32 %v2385, %v2536
        %v2538 = vpop.f32.mrb[0].mxu0
        %v2539 = vadd.f32 %v2389, %v2538
        %v2540 = vpop.f32.mrb[0].mxu0
        %v2541 = vadd.f32 %v2385, %v2540
        %v2542 = vpop.f32.mrb[0].mxu0
        %v2543 = vadd.f32 %v2389, %v2542
        %2544 = vdwg.mxu0
        %v2545 = vmul.f32 %v2507, %v2507
        %v2546 = vmul.f32 %v2509, %v2509
        %v2547 = vmul.f32 %v2511, %v2511
        %v2548 = vmul.f32 %v2513, %v2513
        %v2549 = vmul.f32 %v2517, %v2517
        %v2550 = vmul.f32 %v2519, %v2519
        %v2551 = vmul.f32 %v2521, %v2521
        %v2552 = vmul.f32 %v2523, %v2523
        %v2553 = vmul.f32 %v2527, %v2527
        %v2554 = vmul.f32 %v2529, %v2529
        %v2555 = vmul.f32 %v2531, %v2531
        %v2556 = vmul.f32 %v2533, %v2533
        %v2557 = vmul.f32 %v2537, %v2537
        %v2558 = vmul.f32 %v2539, %v2539
        %v2559 = vmul.f32 %v2541, %v2541
        %v2560 = vmul.f32 %v2543, %v2543
        %v2561 = vmul.f32 %v2507, %v2545
        %v2562 = vmul.f32 %v2509, %v2546
        %v2563 = vmul.f32 %v2511, %v2547
        %v2564 = vmul.f32 %v2513, %v2548
        %v2565 = vmul.f32 %v2517, %v2549
        %v2566 = vmul.f32 %v2519, %v2550
        %v2567 = vmul.f32 %v2521, %v2551
        %v2568 = vmul.f32 %v2523, %v2552
        %v2569 = vmul.f32 %v2527, %v2553
        %v2570 = vmul.f32 %v2529, %v2554
        %v2571 = vmul.f32 %v2531, %v2555
        %v2572 = vmul.f32 %v2533, %v2556
        %v2573 = vmul.f32 %v2537, %v2557
        %v2574 = vmul.f32 %v2539, %v2558
        %v2575 = vmul.f32 %v2541, %v2559
        %v2576 = vmul.f32 %v2543, %v2560
        %v2577 = vmul.f32 %v2561, 0.044715
        %v2578 = vmul.f32 %v2562, 0.044715
        %v2579 = vmul.f32 %v2563, 0.044715
        %v2580 = vmul.f32 %v2564, 0.044715
        %v2581 = vmul.f32 %v2565, 0.044715
        %v2582 = vmul.f32 %v2566, 0.044715
        %v2583 = vmul.f32 %v2567, 0.044715
        %v2584 = vmul.f32 %v2568, 0.044715
        %v2585 = vmul.f32 %v2569, 0.044715
        %v2586 = vmul.f32 %v2570, 0.044715
        %v2587 = vmul.f32 %v2571, 0.044715
        %v2588 = vmul.f32 %v2572, 0.044715
        %v2589 = vmul.f32 %v2573, 0.044715
        %v2590 = vmul.f32 %v2574, 0.044715
        %v2591 = vmul.f32 %v2575, 0.044715
        %v2592 = vmul.f32 %v2576, 0.044715
        %v2593 = vadd.f32 %v2507, %v2577
        %v2594 = vadd.f32 %v2509, %v2578
        %v2595 = vadd.f32 %v2511, %v2579
        %v2596 = vadd.f32 %v2513, %v2580
        %v2597 = vadd.f32 %v2517, %v2581
        %v2598 = vadd.f32 %v2519, %v2582
        %v2599 = vadd.f32 %v2521, %v2583
        %v2600 = vadd.f32 %v2523, %v2584
        %v2601 = vadd.f32 %v2527, %v2585
        %v2602 = vadd.f32 %v2529, %v2586
        %v2603 = vadd.f32 %v2531, %v2587
        %v2604 = vadd.f32 %v2533, %v2588
        %v2605 = vadd.f32 %v2537, %v2589
        %v2606 = vadd.f32 %v2539, %v2590
        %v2607 = vadd.f32 %v2541, %v2591
        %v2608 = vadd.f32 %v2543, %v2592
        %v2609 = vmul.f32 %v2593, 0.7978846
        %v2610 = vmul.f32 %v2594, 0.7978846
        %v2611 = vmul.f32 %v2595, 0.7978846
        %v2612 = vmul.f32 %v2596, 0.7978846
        %v2613 = vmul.f32 %v2597, 0.7978846
        %v2614 = vmul.f32 %v2598, 0.7978846
        %v2615 = vmul.f32 %v2599, 0.7978846
        %v2616 = vmul.f32 %v2600, 0.7978846
        %v2617 = vmul.f32 %v2601, 0.7978846
        %v2618 = vmul.f32 %v2602, 0.7978846
        %v2619 = vmul.f32 %v2603, 0.7978846
        %v2620 = vmul.f32 %v2604, 0.7978846
        %v2621 = vmul.f32 %v2605, 0.7978846
        %v2622 = vmul.f32 %v2606, 0.7978846
        %v2623 = vmul.f32 %v2607, 0.7978846
        %v2624 = vmul.f32 %v2608, 0.7978846
        %v2625 = vtanh.pop %v2609
        %v2626 = vtanh.pop %v2610
        %v2627 = vtanh.pop %v2611
        %v2628 = vtanh.pop %v2612
        %v2629 = vtanh.pop %v2613
        %v2630 = vtanh.pop %v2614
        %v2631 = vtanh.pop %v2615
        %v2632 = vtanh.pop %v2616
        %v2633 = vtanh.pop %v2617
        %v2634 = vtanh.pop %v2618
        %v2635 = vtanh.pop %v2619
        %v2636 = vtanh.pop %v2620
        %v2637 = vtanh.pop %v2621
        %v2638 = vtanh.pop %v2622
        %v2639 = vtanh.pop %v2623
        %v2640 = vtanh.pop %v2624
        %v2641 = vadd.f32 %v2625, 1.0
        %v2642 = vadd.f32 %v2626, 1.0
        %v2643 = vadd.f32 %v2627, 1.0
        %v2644 = vadd.f32 %v2628, 1.0
        %v2645 = vadd.f32 %v2629, 1.0
        %v2646 = vadd.f32 %v2630, 1.0
        %v2647 = vadd.f32 %v2631, 1.0
        %v2648 = vadd.f32 %v2632, 1.0
        %v2649 = vadd.f32 %v2633, 1.0
        %v2650 = vadd.f32 %v2634, 1.0
        %v2651 = vadd.f32 %v2635, 1.0
        %v2652 = vadd.f32 %v2636, 1.0
        %v2653 = vadd.f32 %v2637, 1.0
        %v2654 = vadd.f32 %v2638, 1.0
        %v2655 = vadd.f32 %v2639, 1.0
        %v2656 = vadd.f32 %v2640, 1.0
        %v2657 = vmul.f32 %v2641, 0.5
        %v2658 = vmul.f32 %v2642, 0.5
        %v2659 = vmul.f32 %v2643, 0.5
        %v2660 = vmul.f32 %v2644, 0.5
        %v2661 = vmul.f32 %v2645, 0.5
        %v2662 = vmul.f32 %v2646, 0.5
        %v2663 = vmul.f32 %v2647, 0.5
        %v2664 = vmul.f32 %v2648, 0.5
        %v2665 = vmul.f32 %v2649, 0.5
        %v2666 = vmul.f32 %v2650, 0.5
        %v2667 = vmul.f32 %v2651, 0.5
        %v2668 = vmul.f32 %v2652, 0.5
        %v2669 = vmul.f32 %v2653, 0.5
        %v2670 = vmul.f32 %v2654, 0.5
        %v2671 = vmul.f32 %v2655, 0.5
        %v2672 = vmul.f32 %v2656, 0.5
        %v2673 = vmul.f32 %v2507, %v2657
        %v2674 = vmul.f32 %v2509, %v2658
        %v2675 = vmul.f32 %v2511, %v2659
        %v2676 = vmul.f32 %v2513, %v2660
        %v2677 = vmul.f32 %v2517, %v2661
        %v2678 = vmul.f32 %v2519, %v2662
        %v2679 = vmul.f32 %v2521, %v2663
        %v2680 = vmul.f32 %v2523, %v2664
        %v2681 = vmul.f32 %v2527, %v2665
        %v2682 = vmul.f32 %v2529, %v2666
        %v2683 = vmul.f32 %v2531, %v2667
        %v2684 = vmul.f32 %v2533, %v2668
        %v2685 = vmul.f32 %v2537, %v2669
        %v2686 = vmul.f32 %v2539, %v2670
        %v2687 = vmul.f32 %v2541, %v2671
        %v2688 = vmul.f32 %v2543, %v2672
        %v2689 = vpack.c.bf16 %v2675, %v2673
        %v2690 = vpack.c.bf16 %v2676, %v2674
        %v2691 = vpack.c.bf16 %v2679, %v2677
        %v2692 = vpack.c.bf16 %v2680, %v2678
        %v2693 = vpack.c.bf16 %v2683, %v2681
        %v2694 = vpack.c.bf16 %v2684, %v2682
        %v2695 = vpack.c.bf16 %v2687, %v2685
        %v2696 = vpack.c.bf16 %v2688, %v2686
        %s2697 = smul.addr %s2359, 4
        %s2698 = scalar_lea.vmem [#allocation8], %s2697
        %v2699 = vld [vmem:[%s2698] sm:$0xf]
        %v2700 = vld [vmem:[%s2698 + $0x4] sm:$0xf]
        %v2701 = vld [vmem:[%s2698 + $0x8] sm:$0xf]
        %v2702 = vld [vmem:[%s2698 + $0xc] sm:$0xf]
        %v2703 = vld [vmem:[%s2698 + $0x10] sm:$0xf]
        %v2704 = vld [vmem:[%s2698 + $0x14] sm:$0xf]
        %v2705 = vld [vmem:[%s2698 + $0x18] sm:$0xf]
        %v2706 = vld [vmem:[%s2698 + $0x1c] sm:$0xf]
        %v2707 = vld [vmem:[%s2698 + $0x20] sm:$0xf]
        %v2708 = vld [vmem:[%s2698 + $0x24] sm:$0xf]
        %v2709 = vld [vmem:[%s2698 + $0x28] sm:$0xf]
        %v2710 = vld [vmem:[%s2698 + $0x2c] sm:$0xf]
        %v2711 = vld [vmem:[%s2698 + $0x30] sm:$0xf]
        %v2712 = vld [vmem:[%s2698 + $0x34] sm:$0xf]
        %v2713 = vld [vmem:[%s2698 + $0x38] sm:$0xf]
        %v2714 = vld [vmem:[%s2698 + $0x3c] sm:$0xf]
        %v2715 = vld [vmem:[%s2698 + $0x40] sm:$0xf]
        %v2716 = vld [vmem:[%s2698 + $0x44] sm:$0xf]
        %v2717 = vld [vmem:[%s2698 + $0x48] sm:$0xf]
        %v2718 = vld [vmem:[%s2698 + $0x4c] sm:$0xf]
        %v2719 = vld [vmem:[%s2698 + $0x50] sm:$0xf]
        %v2720 = vld [vmem:[%s2698 + $0x54] sm:$0xf]
        %v2721 = vld [vmem:[%s2698 + $0x58] sm:$0xf]
        %v2722 = vld [vmem:[%s2698 + $0x5c] sm:$0xf]
        %v2723 = vld [vmem:[%s2698 + $0x60] sm:$0xf]
        %v2724 = vld [vmem:[%s2698 + $0x64] sm:$0xf]
        %v2725 = vld [vmem:[%s2698 + $0x68] sm:$0xf]
        %v2726 = vld [vmem:[%s2698 + $0x6c] sm:$0xf]
        %v2727 = vld [vmem:[%s2698 + $0x70] sm:$0xf]
        %v2728 = vld [vmem:[%s2698 + $0x74] sm:$0xf]
        %v2729 = vld [vmem:[%s2698 + $0x78] sm:$0xf]
        %v2730 = vld [vmem:[%s2698 + $0x7c] sm:$0xf]
        %v2731 = vlaneseq
        %v2732 = vshrl.u32 %v2731, 7
        %v2733 = vsub.s32 1, %v2732
        %v2734 = vrot.slane %v646, %v2733
        %v2767 = vunpack.c.l.b16 %v2699
        %v2768 = vunpack.c.l.b16 %v2700
        %v2769 = vunpack.c.l.b16 %v2701
        %v2770 = vunpack.c.l.b16 %v2702
        %v2771 = vunpack.c.l.b16 %v2703
        %v2772 = vunpack.c.l.b16 %v2704
        %v2773 = vunpack.c.l.b16 %v2705
        %v2774 = vunpack.c.l.b16 %v2706
        %v2775 = vunpack.c.l.b16 %v2707
        %v2776 = vunpack.c.l.b16 %v2708
        %v2777 = vunpack.c.l.b16 %v2709
        %v2778 = vunpack.c.l.b16 %v2710
        %v2779 = vunpack.c.l.b16 %v2711
        %v2780 = vunpack.c.l.b16 %v2712
        %v2781 = vunpack.c.l.b16 %v2713
        %v2782 = vunpack.c.l.b16 %v2714
        %v2783 = vunpack.c.l.b16 %v2715
        %v2784 = vunpack.c.l.b16 %v2716
        %v2785 = vunpack.c.l.b16 %v2717
        %v2786 = vunpack.c.l.b16 %v2718
        %v2787 = vunpack.c.l.b16 %v2719
        %v2788 = vunpack.c.l.b16 %v2720
        %v2789 = vunpack.c.l.b16 %v2721
        %v2790 = vunpack.c.l.b16 %v2722
        %v2791 = vunpack.c.l.b16 %v2723
        %v2792 = vunpack.c.l.b16 %v2724
        %v2793 = vunpack.c.l.b16 %v2725
        %v2794 = vunpack.c.l.b16 %v2726
        %v2795 = vunpack.c.l.b16 %v2727
        %v2796 = vunpack.c.l.b16 %v2728
        %v2797 = vunpack.c.l.b16 %v2729
        %v2798 = vunpack.c.l.b16 %v2730
        %v2799 = vpack.c.b16 %v2768, %v2767
        %v2800 = vpack.c.b16 %v2770, %v2769
        %v2801 = vpack.c.b16 %v2772, %v2771
        %v2802 = vpack.c.b16 %v2774, %v2773
        %v2803 = vpack.c.b16 %v2776, %v2775
        %v2804 = vpack.c.b16 %v2778, %v2777
        %v2805 = vpack.c.b16 %v2780, %v2779
        %v2806 = vpack.c.b16 %v2782, %v2781
        %v2807 = vpack.c.b16 %v2784, %v2783
        %v2808 = vpack.c.b16 %v2786, %v2785
        %v2809 = vpack.c.b16 %v2788, %v2787
        %v2810 = vpack.c.b16 %v2790, %v2789
        %v2811 = vpack.c.b16 %v2792, %v2791
        %v2812 = vpack.c.b16 %v2794, %v2793
        %v2813 = vpack.c.b16 %v2796, %v2795
        %v2814 = vpack.c.b16 %v2798, %v2797
        %2831 = vmatprep.subr.bf16.mxu0 0
        %2832 = vmatpush1.bf16.msra.mxu0 %v2799
        %2833 = vmatprep.subr.bf16.mxu0 0
        %2834 = vmatpush1.bf16.msra.mxu0 %v2800
        %2835 = vmatprep.subr.bf16.mxu0 0
        %2836 = vmatpush1.bf16.msra.mxu0 %v2801
        %2837 = vmatprep.subr.bf16.mxu0 0
        %2838 = vmatpush1.bf16.msra.mxu0 %v2802
        %2839 = vmatprep.subr.bf16.mxu0 0
        %2840 = vmatpush1.bf16.msra.mxu0 %v2803
        %2841 = vmatprep.subr.bf16.mxu0 0
        %2842 = vmatpush1.bf16.msra.mxu0 %v2804
        %2843 = vmatprep.subr.bf16.mxu0 0
        %2844 = vmatpush1.bf16.msra.mxu0 %v2805
        %2845 = vmatprep.subr.bf16.mxu0 0
        %2846 = vmatpush1.bf16.msra.mxu0 %v2806
        %2847 = vmatprep.subr.bf16.mxu0 0
        %2848 = vmatpush1.bf16.msra.mxu0 %v2807
        %2849 = vmatprep.subr.bf16.mxu0 0
        %2850 = vmatpush1.bf16.msra.mxu0 %v2808
        %2851 = vmatprep.subr.bf16.mxu0 0
        %2852 = vmatpush1.bf16.msra.mxu0 %v2809
        %2853 = vmatprep.subr.bf16.mxu0 0
        %2854 = vmatpush1.bf16.msra.mxu0 %v2810
        %2855 = vmatprep.subr.bf16.mxu0 0
        %2856 = vmatpush1.bf16.msra.mxu0 %v2811
        %2857 = vmatprep.subr.bf16.mxu0 0
        %2858 = vmatpush1.bf16.msra.mxu0 %v2812
        %2859 = vmatprep.subr.bf16.mxu0 0
        %2860 = vmatpush1.bf16.msra.mxu0 %v2813
        %2861 = vmatprep.subr.bf16.mxu0 0
        %2862 = vmatpush1.bf16.msra.mxu0 %v2814
        %2863 = vmatprep.mubr.bf16.mxu0 %v2690
        %2864 = vmatmul.mubr.bf16.gmra.mrb[0].mxu0 %v2689
        %v2865 = vpop.f32.mrb[0].mxu0
        %v2866 = vadd.f32 %v2734, %v2865
        %v2867 = vpop.f32.mrb[0].mxu0
        %v2868 = vpop.f32.mrb[0].mxu0
        %v2869 = vadd.f32 %v2734, %v2868
        %v2870 = vpop.f32.mrb[0].mxu0
        %2871 = vmatprep.mubr.bf16.mxu0 %v2692
        %2872 = vmatmul.mubr.bf16.gmra.mrb[0].mxu0 %v2691
        %v2873 = vpop.f32.mrb[0].mxu0
        %v2874 = vadd.f32 %v2734, %v2873
        %v2875 = vpop.f32.mrb[0].mxu0
        %v2876 = vpop.f32.mrb[0].mxu0
        %v2877 = vadd.f32 %v2734, %v2876
        %v2878 = vpop.f32.mrb[0].mxu0
        %2879 = vmatprep.mubr.bf16.mxu0 %v2694
        %2880 = vmatmul.mubr.bf16.gmra.mrb[0].mxu0 %v2693
        %v2881 = vpop.f32.mrb[0].mxu0
        %v2882 = vadd.f32 %v2734, %v2881
        %v2883 = vpop.f32.mrb[0].mxu0
        %v2884 = vpop.f32.mrb[0].mxu0
        %v2885 = vadd.f32 %v2734, %v2884
        %v2886 = vpop.f32.mrb[0].mxu0
        %2887 = vmatprep.mubr.bf16.mxu0 %v2696
        %2888 = vmatmul.mubr.bf16.gmra.mrb[0].mxu0 %v2695
        %v2889 = vpop.f32.mrb[0].mxu0
        %v2890 = vadd.f32 %v2734, %v2889
        %v2891 = vpop.f32.mrb[0].mxu0
        %v2892 = vpop.f32.mrb[0].mxu0
        %v2893 = vadd.f32 %v2734, %v2892
        %v2894 = vpop.f32.mrb[0].mxu0
        %2895 = vdwg.mxu0
        %v2896 = vadd.f32 %v2347, %v2866
        %v2897 = vadd.f32 %v2348, %v2869
        %v2898 = vadd.f32 %v2349, %v2874
        %v2899 = vadd.f32 %v2350, %v2877
        %v2900 = vadd.f32 %v2351, %v2882
        %v2901 = vadd.f32 %v2352, %v2885
        %v2902 = vadd.f32 %v2353, %v2890
        %v2903 = vadd.f32 %v2354, %v2893
        %2904 = vadd.xlane.f32.xlu0 %v2896
        %v2905 = vpop.xlane.xlu0 %2904
        %2906 = vadd.xlane.f32.xlu0 %v2897
        %v2907 = vpop.xlane.xlu0 %2906
        %2908 = vadd.xlane.f32.xlu0 %v2898
        %v2909 = vpop.xlane.xlu0 %2908
        %2910 = vadd.xlane.f32.xlu0 %v2899
        %v2911 = vpop.xlane.xlu0 %2910
        %2912 = vadd.xlane.f32.xlu0 %v2900
        %v2913 = vpop.xlane.xlu0 %2912
        %2914 = vadd.xlane.f32.xlu0 %v2901
        %v2915 = vpop.xlane.xlu0 %2914
        %2916 = vadd.xlane.f32.xlu0 %v2902
        %v2917 = vpop.xlane.xlu0 %2916
        %2918 = vadd.xlane.f32.xlu0 %v2903
        %v2919 = vpop.xlane.xlu0 %2918
        %v2920 = vmul.f32 %v2905, %v2258
        %v2921 = vmul.f32 %v2907, %v2258
        %v2922 = vmul.f32 %v2909, %v2258
        %v2923 = vmul.f32 %v2911, %v2258
        %v2924 = vmul.f32 %v2913, %v2258
        %v2925 = vmul.f32 %v2915, %v2258
        %v2926 = vmul.f32 %v2917, %v2258
        %v2927 = vmul.f32 %v2919, %v2258
        %v2928 = vsub.f32 %v2896, %v2920
        %v2929 = vsub.f32 %v2897, %v2921
        %v2930 = vsub.f32 %v2898, %v2922
        %v2931 = vsub.f32 %v2899, %v2923
        %v2932 = vsub.f32 %v2900, %v2924
        %v2933 = vsub.f32 %v2901, %v2925
        %v2934 = vsub.f32 %v2902, %v2926
        %v2935 = vsub.f32 %v2903, %v2927
        %v2936 = vmul.f32 %v2928, %v2928
        %v2937 = vmul.f32 %v2929, %v2929
        %v2938 = vmul.f32 %v2930, %v2930
        %v2939 = vmul.f32 %v2931, %v2931
        %v2940 = vmul.f32 %v2932, %v2932
        %v2941 = vmul.f32 %v2933, %v2933
        %v2942 = vmul.f32 %v2934, %v2934
        %v2943 = vmul.f32 %v2935, %v2935
        %2944 = vadd.xlane.f32.xlu0 %v2936
        %v2945 = vpop.xlane.xlu0 %2944
        %2946 = vadd.xlane.f32.xlu0 %v2937
        %v2947 = vpop.xlane.xlu0 %2946
        %2948 = vadd.xlane.f32.xlu0 %v2938
        %v2949 = vpop.xlane.xlu0 %2948
        %2950 = vadd.xlane.f32.xlu0 %v2939
        %v2951 = vpop.xlane.xlu0 %2950
        %2952 = vadd.xlane.f32.xlu0 %v2940
        %v2953 = vpop.xlane.xlu0 %2952
        %2954 = vadd.xlane.f32.xlu0 %v2941
        %v2955 = vpop.xlane.xlu0 %2954
        %2956 = vadd.xlane.f32.xlu0 %v2942
        %v2957 = vpop.xlane.xlu0 %2956
        %2958 = vadd.xlane.f32.xlu0 %v2943
        %v2959 = vpop.xlane.xlu0 %2958
        %v2960 = vmul.f32 %v2945, %v2258
        %v2961 = vmul.f32 %v2947, %v2258
        %v2962 = vmul.f32 %v2949, %v2258
        %v2963 = vmul.f32 %v2951, %v2258
        %v2964 = vmul.f32 %v2953, %v2258
        %v2965 = vmul.f32 %v2955, %v2258
        %v2966 = vmul.f32 %v2957, %v2258
        %v2967 = vmul.f32 %v2959, %v2258
        %v2968 = vadd.f32 %v2960, 1e-12
        %v2969 = vadd.f32 %v2961, 1e-12
        %v2970 = vadd.f32 %v2962, 1e-12
        %v2971 = vadd.f32 %v2963, 1e-12
        %v2972 = vadd.f32 %v2964, 1e-12
        %v2973 = vadd.f32 %v2965, 1e-12
        %v2974 = vadd.f32 %v2966, 1e-12
        %v2975 = vadd.f32 %v2967, 1e-12
        %v2976 = vrsqrt.pop %v2968
        %v2977 = vrsqrt.pop %v2969
        %v2978 = vrsqrt.pop %v2970
        %v2979 = vrsqrt.pop %v2971
        %v2980 = vrsqrt.pop %v2972
        %v2981 = vrsqrt.pop %v2973
        %v2982 = vrsqrt.pop %v2974
        %v2983 = vrsqrt.pop %v2975
        %v2984 = vmul.f32 %v2928, %v2976
        %v2985 = vmul.f32 %v2929, %v2977
        %v2986 = vmul.f32 %v2930, %v2978
        %v2987 = vmul.f32 %v2931, %v2979
        %v2988 = vmul.f32 %v2932, %v2980
        %v2989 = vmul.f32 %v2933, %v2981
        %v2990 = vmul.f32 %v2934, %v2982
        %v2991 = vmul.f32 %v2935, %v2983
        %v2992 = vlaneseq
        %v2993 = vshrl.u32 %v2992, 7
        %v2994 = vsub.s32 4, %v2993
        %v2995 = vrot.slane %v646, %v2994
        %v2996 = vmul.f32 %v2984, %v2995
        %v2997 = vmul.f32 %v2985, %v2995
        %v2998 = vmul.f32 %v2986, %v2995
        %v2999 = vmul.f32 %v2987, %v2995
        %v3000 = vmul.f32 %v2988, %v2995
        %v3001 = vmul.f32 %v2989, %v2995
        %v3002 = vmul.f32 %v2990, %v2995
        %v3003 = vmul.f32 %v2991, %v2995
        %v3004 = vlaneseq
        %v3005 = vshrl.u32 %v3004, 7
        %v3006 = vsub.s32 5, %v3005
        %v3007 = vrot.slane %v646, %v3006
        %v3008 = vadd.f32 %v2996, %v3007
        %v3009 = vadd.f32 %v2997, %v3007
        %v3010 = vadd.f32 %v2998, %v3007
        %v3011 = vadd.f32 %v2999, %v3007
        %v3012 = vadd.f32 %v3000, %v3007
        %v3013 = vadd.f32 %v3001, %v3007
        %v3014 = vadd.f32 %v3002, %v3007
        %v3015 = vadd.f32 %v3003, %v3007
        %3016 = vst [vmem:[#allocation2] sm:$0xff] %v3008
        %3017 = vst [vmem:[#allocation2 + $0x8] sm:$0xff] %v3009
        %3018 = vst [vmem:[#allocation2 + $0x10] sm:$0xff] %v3010
        %3019 = vst [vmem:[#allocation2 + $0x18] sm:$0xff] %v3011
        %3020 = vst [vmem:[#allocation2 + $0x20] sm:$0xff] %v3012
        %3021 = vst [vmem:[#allocation2 + $0x28] sm:$0xff] %v3013
        %3022 = vst [vmem:[#allocation2 + $0x30] sm:$0xff] %v3014
        %3023 = vst [vmem:[#allocation2 + $0x38] sm:$0xff] %v3015
        %p3024 = scmp.eq.s32.totalorder %s30, 1
        // Predicated region
        $region85: #{bert_regressor_forward.2} parent=63 // pred_check
          %p3025 = pneg %p3024
        $region86: #{bert_regressor_forward.2} parent=63 // pred_check_branch
          %3027 = sbr.rel (%p3025) target = $region88
        $region87: #{bert_regressor_forward.2} parent=63 // pred_region
          %3028 = vst [vmem:[%s477] sm:$0x1] %v3008
          %3029 = vst [vmem:[%s477 + $0x1] sm:$0x1] %v3010
          %3030 = vst [vmem:[%s477 + $0x2] sm:$0x1] %v3012
          %3031 = vst [vmem:[%s477 + $0x3] sm:$0x1] %v3014
        $region88: #{bert_regressor_forward.2} parent=63 // pred_fallthru
          _
        %s3032 = smul.u32 4, %s29
        %p3033 = scmp.lt.s32.totalorder %s3032, 7
        %s3034 = scalar_select %p3033, %s3032, 7
        %s3035 = scalar_lea.vmem %s11, %s3034
        // Predicated region
        $region89: #{bert_regressor_forward.2} parent=63 // pred_check
          %p3036 = pneg %p296
        $region90: #{bert_regressor_forward.2} parent=63 // pred_check_branch
          %3038 = sbr.rel (%p3036) target = $region92
        $region91: #{bert_regressor_forward.2} parent=63 // pred_region
          %s3039 = smul.u32 4, %s29
        $region92: #{bert_regressor_forward.2} parent=63 // pred_fallthru
          _
      $region64: #{bert_regressor_forward.2} parent=5 // pred_fallthru
        _
      %p3040 = scmp.le.s32.totalorder 2, %s20
      // Predicated region
      $region93: #{bert_regressor_forward.2} parent=5 // pred_check
        %p3041 = pneg %p3040
      $region94: #{bert_regressor_forward.2} parent=5 // pred_check_branch
        %3043 = sbr.rel (%p3041) target = $region96
      $region95: #{bert_regressor_forward.2} parent=5 // pred_region
        %s3044 = ssub.s32 %s20, 2
        // Predicated region
        $region97: #{bert_regressor_forward.2} parent=95 // pred_check
          %p3045 = pneg %p302
        $region98: #{bert_regressor_forward.2} parent=95 // pred_check_branch
          %3047 = sbr.rel (%p3045) target = $region100
        $region99: #{bert_regressor_forward.2} parent=95 // pred_region
          %s3048 = smul.u32 4, %s31
          %p3049 = scmp.lt.s32.totalorder %s3048, 7
          %s3050 = scalar_select %p3049, %s3048, 7
          %s3051 = scalar_lea.vmem %s11, %s3050
        $region100: #{bert_regressor_forward.2} parent=95 // pred_fallthru
          _
      $region96: #{bert_regressor_forward.2} parent=5 // pred_fallthru
        _
    $region6: #{bert_regressor_forward.2} parent=1 // loop_footer
      %s24 = sadd.s32 1, %s20
    $region7: #{bert_regressor_forward.2} parent=1 // loop_footer_branch
      %19 = sbr.rel target = $region3
    $region8: #{bert_regressor_forward.2} parent=1 // loop_exit
      _
    %3052 = vsyncpa [#allocation4], 1
    %s3053 = scalar_lea.sflag [#allocation4], 1
    %3054 = vsyncpa %s3053, 1
    %3055 = vsyncpa [#allocation6], 1
    %3056 = vsyncpa [#allocation9], 1

</llo_original>
